<compile_context>
chip_gen: v7x
topology: tpu7x:2x2x1
jax: 0.10.0
libtpu: 0.0.40
codegen_flags: <defaults>
</compile_context>

<pallas_src>
import functools

import jax
import jax.numpy as jnp
from jax import lax
from jax.experimental import pallas as pl
from jax.experimental.pallas import tpu as pltpu


# ----------------------------- Pallas MLP kernel -----------------------------
def _cls_mlp_kernel(x_ref, w1_ref, b1_ref, w2_ref, o_ref, acc_ref):
    kt = pl.program_id(1)  # reduction (D_in) axis

    @pl.when(kt == 0)
    def _():
        acc_ref[...] = jnp.zeros_like(acc_ref)

    # First linear layer for this H-column block, accumulated over K tiles.
    acc_ref[...] += jnp.dot(
        x_ref[...], w1_ref[...], preferred_element_type=jnp.float32
    )

    @pl.when(kt == pl.num_programs(1) - 1)
    def _():
        h = acc_ref[...] + b1_ref[...]
        h = jnp.where(h > 0, h, 0.2 * h)  # LeakyReLU(0.2)
        o_ref[...] = jnp.dot(
            h.astype(w2_ref.dtype), w2_ref[...],
            preferred_element_type=jnp.float32,
        ).astype(o_ref.dtype)


def prepare_cls_params(w1, b1, w2, b2, *, n_h_blocks=2):
    """Pre-pack classifier weights (done ONCE, outside the hot path).

    w1: [D_in, H], b1: [H] or [1, H], w2: [H, D_out], b2: [D_out] or [1, D_out].
    Weights are stored bf16 for a 2x smaller HBM stream; W2 columns are
    zero-padded to a multiple of 128 lanes.
    """
    D_in, H = w1.shape
    D_out = w2.shape[1]
    assert H % n_h_blocks == 0 and (H // n_h_blocks) % 128 == 0
    d_pad = max(128, ((D_out + 127) // 128) * 128)

    w1_bf = w1.astype(jnp.bfloat16)
    b1_f = jnp.reshape(b1, (1, H)).astype(jnp.float32)
    w2_pad = jnp.zeros((H, d_pad), jnp.bfloat16).at[:, :D_out].set(
        w2.astype(jnp.bfloat16))
    b2_f = jnp.reshape(b2, (1, D_out)).astype(jnp.float32)
    return (w1_bf, b1_f, w2_pad, b2_f, D_out, n_h_blocks)


def cls_mlp_pallas(x, prepared, *, tk=None):
    """x: [M, D_in] f32 -> scores: [M, D_out] f32."""
    w1_bf, b1_f, w2_pad, b2_f, d_out, n_h_blocks = prepared
    M, D_in = x.shape
    H = w1_bf.shape[1]
    Hh = H // n_h_blocks
    d_pad = w2_pad.shape[1]
    if tk is None:
        tk = D_in  # single K step; bf16 keeps blocks well inside VMEM budgets
    assert D_in % tk == 0

    x_bf = x.astype(jnp.bfloat16)

    flops = 2 * M * (D_in * H + H * d_pad)
    bytes_accessed = (x_bf.size * 2 + w1_bf.size * 2 + w2_pad.size * 2
                      + b1_f.size * 4 + n_h_blocks * M * d_pad * 4)

    partial = pl.pallas_call(
        _cls_mlp_kernel,
        out_shape=jax.ShapeDtypeStruct((n_h_blocks, M, d_pad), jnp.float32),
        grid_spec=pltpu.PrefetchScalarGridSpec(
            num_scalar_prefetch=0,
            grid=(n_h_blocks, D_in // tk),
            in_specs=[
                pl.BlockSpec((M, tk), lambda hb, kt: (0, kt)),      # X tile
                pl.BlockSpec((tk, Hh), lambda hb, kt: (kt, hb)),    # W1 tile
                pl.BlockSpec((1, Hh), lambda hb, kt: (0, hb)),      # b1 slice
                pl.BlockSpec((Hh, d_pad), lambda hb, kt: (hb, 0)),  # W2 slice
            ],
            out_specs=pl.BlockSpec((None, M, d_pad),
                                   lambda hb, kt: (hb, 0, 0)),
            scratch_shapes=[pltpu.VMEM((M, Hh), jnp.float32)],
        ),
        compiler_params=pltpu.CompilerParams(
            dimension_semantics=("parallel", "arbitrary")),
        cost_estimate=pl.CostEstimate(
            flops=flops, transcendentals=0, bytes_accessed=bytes_accessed),
    )(x_bf, w1_bf, b1_f, w2_pad)

    # Sum the exact per-H-block partials, strip lane padding, add output bias.
    return jnp.sum(partial, axis=0)[:, :d_out] + b2_f


# ------------------------------- JAX glue ops --------------------------------
def farthest_point_sample(xyz, npoint):
    """xyz: [B, N, 3] -> centroids: [B, npoint] int32."""
    B, N, _ = xyz.shape
    distance = jnp.full((B, N), 1e10, dtype=jnp.float32)
    # TODO(synk): reference uses torch.randint for the initial farthest index;
    # we use a deterministic start index of 0 for reproducibility.
    farthest = jnp.zeros((B,), dtype=jnp.int32)
    batch_idx = jnp.arange(B)
    centroids = jnp.zeros((B, npoint), dtype=jnp.int32)

    def body(i, carry):
        centroids, distance, farthest = carry
        centroids = centroids.at[:, i].set(farthest)
        centroid = xyz[batch_idx, farthest, :][:, None, :]          # [B,1,3]
        dist = jnp.sum((xyz - centroid) ** 2, -1)                   # [B,N]
        distance = jnp.minimum(distance, dist)
        farthest = jnp.argmax(distance, -1).astype(jnp.int32)
        return centroids, distance, farthest

    centroids, _, _ = lax.fori_loop(0, npoint, body,
                                    (centroids, distance, farthest))
    return centroids


def index_points(points, idx):
    """points: [B, N, C], idx: [B, ...] -> [B, ..., C]."""
    B = points.shape[0]
    b = jnp.arange(B).reshape((B,) + (1,) * (idx.ndim - 1))
    return points[b, idx]


def square_distance(src, dst):
    dist = -2.0 * jnp.einsum("bnc,bmc->bnm", src, dst)
    dist += jnp.sum(src**2, -1)[:, :, None]
    dist += jnp.sum(dst**2, -1)[:, None, :]
    return dist


def knn(nsample, xyz, new_xyz):
    dist = square_distance(xyz, new_xyz)            # [B, N, S]
    dist_t = jnp.transpose(dist, (0, 2, 1))         # [B, S, N]
    _, idx = lax.top_k(-dist_t, nsample)            # k smallest -> [B, S, k]
    return idx


# ------------------------------ View_selector --------------------------------
def view_selector_forward(F_feat, vertices, k, s_views, params):
    """F_feat: [B, N, 1024], vertices: [B, N, 3]."""
    B, N, Cf = F_feat.shape

    fps_id = farthest_point_sample(vertices, s_views)           # [B, s]
    vertices1 = index_points(vertices, fps_id)                   # [B, s, 3]
    id_knn = knn(k, vertices, vertices1)                         # [B, s, k]
    Fg = index_points(F_feat, id_knn)                            # [B, s, k, 1024]
    vg = index_points(vertices, id_knn)                          # [B, s, k, 3]

    # [B, k, s, 1024] -> [B, k, s*1024]
    F1 = jnp.transpose(Fg, (0, 2, 1, 3)).reshape(B, k, s_views * Cf)

    # Hot path: 2-layer MLP in Pallas.
    X = F1.reshape(B * k, s_views * Cf)
    scores = cls_mlp_pallas(X, params)                           # [B*k, 40*s]
    F_score = scores.reshape(B, k, s_views, 40).transpose(0, 2, 1, 3)  # [B,s,k,40]

    F1_ = jax.nn.softmax(F_score, axis=-3)                       # softmax over s
    F1_ = jnp.max(F1_, axis=-1)                                  # [B, s, k]
    F1_id = jnp.argmax(F1_, axis=-1)                             # [B, s]
    # Reference hardcodes one_hot(., 4); valid because k == 4 in the module.
    onehot = jax.nn.one_hot(F1_id, 4, dtype=jnp.float32)         # [B, s, 4]

    F_new = jnp.sum(onehot[..., None] * Fg, axis=-2)             # [B, s, 1024]
    vertices_new = jnp.sum(onehot[..., None] * vg, axis=-2)      # [B, s, 3]
    return F_new, F_score, vertices_new


# ----------------------------------- main -------------------------------------
if __name__ == "__main__":
    key = jax.random.PRNGKey(0)
    kF, kV, k1, k2, k3, k4 = jax.random.split(key, 6)

    B = 2
    n_views = 16          # N
    s_views = 2           # sampled views
    k = 4                 # neighbors (one_hot(., 4) in reference implies k == 4)
    Cf = 1024             # feature dim fixed by the module (Linear(1024*s, ...))

    D_in = Cf * s_views   # 2048
    H = 512 * s_views     # 1024
    D_out = 40 * s_views  # 80

    F_feat = jax.random.normal(kF, (B, n_views, Cf), dtype=jnp.float32)
    vertices = jax.random.normal(kV, (B, n_views, 3), dtype=jnp.float32)

    # Deterministic synthetic parameters (weights stored [in, out]).
    w1 = jax.random.normal(k1, (D_in, H), dtype=jnp.float32) * 0.02
    b1 = jax.random.normal(k2, (1, H), dtype=jnp.float32) * 0.02
    w2 = jax.random.normal(k3, (H, D_out), dtype=jnp.float32) * 0.02
    b2 = jax.random.normal(k4, (1, D_out), dtype=jnp.float32) * 0.02

    # Pre-pack once (bf16 weight stream, lane-padded W2).
    params = prepare_cls_params(w1, b1, w2, b2)

    fwd = jax.jit(functools.partial(view_selector_forward, k=k, s_views=s_views,
                                    params=params))
    F_new, F_score, vertices_new = fwd(F_feat, vertices)
    jax.block_until_ready((F_new, F_score, vertices_new))

    # Sanity check of the Pallas MLP against a precision-matched JAX reference
    # (same bf16 weight / activation quantization, f32 accumulation).
    X_chk = jax.random.normal(jax.random.PRNGKey(7), (B * k, D_in), jnp.float32)
    w1_bf = w1.astype(jnp.bfloat16)
    w2_bf = w2.astype(jnp.bfloat16)
    ref_h = jnp.dot(X_chk.astype(jnp.bfloat16), w1_bf,
                    preferred_element_type=jnp.float32) + b1
    ref_h = jnp.where(ref_h > 0, ref_h, 0.2 * ref_h)
    ref_out = jnp.dot(ref_h.astype(jnp.bfloat16), w2_bf,
                      preferred_element_type=jnp.float32) + b2
    pal_out = cls_mlp_pallas(X_chk, params)
    jax.block_until_ready(pal_out)

    assert pal_out.shape == (B * k, D_out)
    assert jnp.allclose(pal_out, ref_out, atol=1e-2, rtol=1e-2)
    assert F_new.shape == (B, s_views, Cf)
    assert F_score.shape == (B, s_views, k, 40)
    assert vertices_new.shape == (B, s_views, 3)

    print("KERNEL_OK")
</pallas_src>

<mosaic_0001>
module attributes {stable_mosaic.version = 11 : i64} {
  func.func @_cls_mlp_kernel(%arg0: i32, %arg1: i32, %arg2: memref<8x2048xbf16, #tpu.memory_space<vmem>>, %arg3: memref<2048x512xbf16, #tpu.memory_space<vmem>>, %arg4: memref<1x512xf32, #tpu.memory_space<vmem>>, %arg5: memref<512x128xbf16, #tpu.memory_space<vmem>>, %arg6: memref<1x8x128xf32, #tpu.memory_space<vmem>>, %arg7: memref<8x512xf32, #tpu.memory_space<vmem>>) attributes {dimension_semantics = [#tpu.dimension_semantics<parallel>, #tpu.dimension_semantics<arbitrary>], iteration_bounds = array<i64: 2, 1>, scalar_prefetch = 0 : i64, scratch_operands = 1 : i64, tpu.core_type = #tpu.core_type<tc>, window_params = [{transform_indices = @transform_0, window_bounds = array<i64: 8, 2048>}, {transform_indices = @transform_1, window_bounds = array<i64: 2048, 512>}, {transform_indices = @transform_2, window_bounds = array<i64: 1, 512>}, {transform_indices = @transform_3, window_bounds = array<i64: 512, 128>}, {transform_indices = @transform_4, window_bounds = array<i64: 1, 8, 128>}]} {
    %c0_i32 = arith.constant 0 : i32
    %0 = arith.cmpi eq, %arg1, %c0_i32 : i32
    %1 = arith.extui %0 : i1 to i32
    %c0_i32_0 = arith.constant 0 : i32
    %2 = arith.cmpi ne, %1, %c0_i32_0 : i32
    scf.if %2 {
      %cst_10 = arith.constant 0.000000e+00 : f32
      %12 = vector.broadcast %cst_10 : f32 to vector<8x512xf32>
      %c0_11 = arith.constant 0 : index
      %c0_12 = arith.constant 0 : index
      %13 = vector.load %arg7[%c0_11, %c0_12] : memref<8x512xf32, #tpu.memory_space<vmem>>, vector<8x512xf32>
      tpu.vector_store %arg7[%c0_11, %c0_12], %12 {strides = array<i32>} : memref<8x512xf32, #tpu.memory_space<vmem>>, vector<8x512xf32>,
    } else {
    }
    %c0 = arith.constant 0 : index
    %c0_1 = arith.constant 0 : index
    %3 = vector.load %arg7[%c0, %c0_1] : memref<8x512xf32, #tpu.memory_space<vmem>>, vector<8x512xf32>
    %c0_2 = arith.constant 0 : index
    %c0_3 = arith.constant 0 : index
    %4 = vector.load %arg2[%c0_2, %c0_3] : memref<8x2048xbf16, #tpu.memory_space<vmem>>, vector<8x2048xbf16>
    %c0_4 = arith.constant 0 : index
    %c0_5 = arith.constant 0 : index
    %5 = vector.load %arg3[%c0_4, %c0_5] : memref<2048x512xbf16, #tpu.memory_space<vmem>>, vector<2048x512xbf16>
    %cst = arith.constant dense<0.000000e+00> : vector<8x512xf32>
    %6 = tpu.matmul %4, %5, %cst {dimension_numbers = #tpu.dot_dimension_numbers<[1], [0], [0], [1], [0, 0, 1, 1], [], []>} : vector<8x2048xbf16>, vector<2048x512xbf16>, vector<8x512xf32> -> vector<8x512xf32>
    %7 = arith.addf %3, %6 : vector<8x512xf32>
    %c0_6 = arith.constant 0 : index
    %c0_7 = arith.constant 0 : index
    %8 = vector.load %arg7[%c0_6, %c0_7] : memref<8x512xf32, #tpu.memory_space<vmem>>, vector<8x512xf32>
    tpu.vector_store %arg7[%c0_6, %c0_7], %7 {strides = array<i32>} : memref<8x512xf32, #tpu.memory_space<vmem>>, vector<8x512xf32>,
    %c0_i32_8 = arith.constant 0 : i32
    %9 = arith.cmpi eq, %arg1, %c0_i32_8 : i32
    %10 = arith.extui %9 : i1 to i32
    %c0_i32_9 = arith.constant 0 : i32
    %11 = arith.cmpi ne, %10, %c0_i32_9 : i32
    scf.if %11 {
      %c0_10 = arith.constant 0 : index
      %c0_11 = arith.constant 0 : index
      %12 = vector.load %arg7[%c0_10, %c0_11] : memref<8x512xf32, #tpu.memory_space<vmem>>, vector<8x512xf32>
      %c0_12 = arith.constant 0 : index
      %c0_13 = arith.constant 0 : index
      %13 = vector.load %arg4[%c0_12, %c0_13] : memref<1x512xf32, #tpu.memory_space<vmem>>, vector<1x512xf32>
      %14 = vector.broadcast %13 : vector<1x512xf32> to vector<8x512xf32>
      %15 = arith.addf %12, %14 : vector<8x512xf32>
      %cst_14 = arith.constant 0.000000e+00 : f32
      %16 = vector.broadcast %cst_14 : f32 to vector<8x512xf32>
      %17 = arith.cmpf ogt, %15, %16 : vector<8x512xf32>
      %cst_15 = arith.constant 2.000000e-01 : f32
      %18 = vector.broadcast %cst_15 : f32 to vector<8x512xf32>
      %19 = arith.mulf %18, %15 : vector<8x512xf32>
      %20 = arith.select %17, %15, %19 : vector<8x512xi1>, vector<8x512xf32>
      %21 = arith.truncf %20 : vector<8x512xf32> to vector<8x512xbf16>
      %c0_16 = arith.constant 0 : index
      %c0_17 = arith.constant 0 : index
      %22 = vector.load %arg5[%c0_16, %c0_17] : memref<512x128xbf16, #tpu.memory_space<vmem>>, vector<512x128xbf16>
      %cst_18 = arith.constant dense<0.000000e+00> : vector<8x128xf32>
      %23 = tpu.matmul %21, %22, %cst_18 {dimension_numbers = #tpu.dot_dimension_numbers<[1], [0], [0], [1], [0, 0, 1, 1], [], []>} : vector<8x512xbf16>, vector<512x128xbf16>, vector<8x128xf32> -> vector<8x128xf32>
      %c0_19 = arith.constant 0 : index
      %c0_20 = arith.constant 0 : index
      %c0_21 = arith.constant 0 : index
      %24 = vector.load %arg6[%c0_19, %c0_20, %c0_21] : memref<1x8x128xf32, #tpu.memory_space<vmem>>, vector<1x8x128xf32>
      %25 = vector.shape_cast %24 : vector<1x8x128xf32> to vector<8x128xf32>
      %26 = vector.shape_cast %23 : vector<8x128xf32> to vector<1x8x128xf32>
      tpu.vector_store %arg6[%c0_19, %c0_20, %c0_21], %26 {strides = array<i32>} : memref<1x8x128xf32, #tpu.memory_space<vmem>>, vector<1x8x128xf32>,
    } else {
    }
    return
  }
  func.func @transform_0(%arg0: i32, %arg1: i32) -> (i32, i32) {
    %c0_i32 = arith.constant 0 : i32
    %c0_i32_0 = arith.constant 0 : i32
    return %c0_i32, %arg1 : i32, i32
  }
  func.func @transform_1(%arg0: i32, %arg1: i32) -> (i32, i32) {
    %c0_i32 = arith.constant 0 : i32
    return %arg1, %arg0 : i32, i32
  }
  func.func @transform_2(%arg0: i32, %arg1: i32) -> (i32, i32) {
    %c0_i32 = arith.constant 0 : i32
    %c0_i32_0 = arith.constant 0 : i32
    return %c0_i32, %arg0 : i32, i32
  }
  func.func @transform_3(%arg0: i32, %arg1: i32) -> (i32, i32) {
    %c0_i32 = arith.constant 0 : i32
    %c0_i32_0 = arith.constant 0 : i32
    return %arg0, %c0_i32 : i32, i32
  }
  func.func @transform_4(%arg0: i32, %arg1: i32) -> (i32, i32, i32) {
    %c0_i32 = arith.constant 0 : i32
    %c0_i32_0 = arith.constant 0 : i32
    %c0_i32_1 = arith.constant 0 : i32
    return %arg0, %c0_i32, %c0_i32_0 : i32, i32, i32
  }
}

</mosaic_0001>

<llo_original>
// kernel: custom-call.8
$region0: #{custom-call.8}
  %s0 = inlined_call_operand.vmem [shape: f32[2,16], index: 0, kind: output, shape index: {}]

// kernel: view_selector_forward.1
$region0: #{view_selector_forward.1}
  #allocation0 [shape = 'u32[]', space=smem, size = 0x4, offset = 0x4, fixed_abs, tag = 'smem constant byte address 0x4 - core index']
  #allocation1 [shape = 'u32[144,128]{1,0:T(1,128)}', space=vmem, size = 0x12000, scoped, tag = 'internal scratch']
  #allocation2 [shape = 'f32[8,512]{1,0:T(8,128)}', space=vmem, size = 0x4000, scoped, tag = 'scratch operand']
  %s0 = inlined_call_operand.vmem [shape: bf16[8,2048], index: 0, kind: input, shape index: {}]
  %s1 = inlined_call_operand.vmem [shape: bf16[2048,1024], index: 1, kind: input, shape index: {}]
  %s2 = inlined_call_operand.vmem [shape: f32[1,1024], index: 2, kind: input, shape index: {}]
  %s3 = inlined_call_operand.vmem [shape: bf16[1024,128], index: 3, kind: input, shape index: {}]
  %s4 = inlined_call_operand.vmem [shape: f32[2,8,128], index: 4, kind: output, shape index: {}]
  %s5 = sld [smem:[#allocation0]]
  $region80: #{view_selector_forward.1} parent=0
    _
  %s7 = ssub.s32 1, %s5
  %s8 = scalar_select 0, %s7, %s5
  $region1: #{view_selector_forward.1} parent=0
    #allocation3 [shape = 'u8[4194304]{0}', space=vmem, size = 0x400000, scoped, tag = 'input window, operand 1']
    loop: start=0, step=1, limit=4
    $region2: #{view_selector_forward.1} parent=1 // loop_pre_header
      _
    $region3: #{view_selector_forward.1} parent=1 // loop_header
      %s10 = sphi 0, %s14
      %p11 = scmp.ge.s32.totalorder %s10, 4
      %s17 = sphi 0, %s29
      %s18 = sphi 0, %s25
      %s19 = sphi 0, %s17
      %s20 = sphi 0, %s18
      %s21 = sphi 0, %s19
      %s22 = sphi 0, %s20
      %s32 = sphi 0, %s34
      %s35 = sphi 0, %s32
      %s36 = sphi 0, %s35
      %s52 = sphi 0, %s36
      %s60 = sphi 0, %s62
      %s63 = sphi 0, %s60
      %s64 = sphi 0, %s63
      %s80 = sphi 0, %s64
      %s86 = sphi 0, %s88
      %s89 = sphi 0, %s86
      %s90 = sphi 0, %s89
      %s106 = sphi 0, %s90
      %s112 = sphi 0, %s114
      %s115 = sphi 0, %s112
      %s116 = sphi 0, %s115
      %s132 = sphi 0, %s116
      %s138 = sphi 0, %s140
      %s141 = sphi 0, %s138
      %s142 = sphi 0, %s141
      %s158 = sphi 0, %s142
    $region4: #{view_selector_forward.1} parent=1 // loop_header_branch
      %13 = sbr.rel (%p11) target = $region8
    $region5: #{view_selector_forward.1} parent=1 // loop_body
      %s15 = ssub.s32 %s10, 1
      %s16 = ssub.s32 %s10, 2
      %s23 = sadd.s32 1, %s18
      %p24 = scmp.ge.s32.totalorder %s23, 1
      %s25 = scalar_select %p24, 0, %s23
      %s26 = sadd.s32 1, %s17
      %s27 = scalar_select %p24, %s26, %s17
      %p28 = scmp.ge.s32.totalorder %s27, 2
      %s29 = scalar_select %p28, 0, %s27
      %s30 = ssub.s32 %s18, %s25
      %p31 = scmp.eq.s32.totalorder %s30, 0
      %s33 = sadd.s32 %s32, 1
      %s34 = scalar_select %p31, %s32, %s33
      %p37 = pneg %p31
      %p38 = scmp.eq.s32.totalorder %s10, 1
      %p39 = por %p37, %p38
      %p40 = scmp.ne.s32.totalorder %s32, %s35
      %p41 = scmp.eq.s32.totalorder %s10, 0
      %p42 = por %p40, %p41
      %p43 = scmp.ne.s32.totalorder %s32, %s35
      %p44 = scmp.eq.s32.totalorder %s15, 1
      %p45 = por %p43, %p44
      %p46 = scmp.ne.s32.totalorder %s35, %s36
      %p47 = scmp.eq.s32.totalorder %s15, 0
      %p48 = por %p46, %p47
      %p49 = scmp.ne.s32.totalorder %s35, %s36
      %p50 = scmp.eq.s32.totalorder %s16, 1
      %p51 = por %p49, %p50
      %p53 = scmp.ne.s32.totalorder %s36, %s52
      %p54 = scmp.eq.s32.totalorder %s16, 0
      %p55 = por %p53, %p54
      %s56 = ssub.s32 %s18, %s25
      %s57 = ssub.s32 %s17, %s29
      %s58 = sor.u32 %s56, %s57
      %p59 = scmp.eq.s32.totalorder %s58, 0
      %s61 = sadd.s32 %s60, 1
      %s62 = scalar_select %p59, %s60, %s61
      %p65 = pneg %p59
      %p66 = scmp.eq.s32.totalorder %s10, 1
      %p67 = por %p65, %p66
      %p68 = scmp.ne.s32.totalorder %s60, %s63
      %p69 = scmp.eq.s32.totalorder %s10, 0
      %p70 = por %p68, %p69
      %p71 = scmp.ne.s32.totalorder %s60, %s63
      %p72 = scmp.eq.s32.totalorder %s15, 1
      %p73 = por %p71, %p72
      %p74 = scmp.ne.s32.totalorder %s63, %s64
      %p75 = scmp.eq.s32.totalorder %s15, 0
      %p76 = por %p74, %p75
      %p77 = scmp.ne.s32.totalorder %s63, %s64
      %p78 = scmp.eq.s32.totalorder %s16, 1
      %p79 = por %p77, %p78
      %p81 = scmp.ne.s32.totalorder %s64, %s80
      %p82 = scmp.eq.s32.totalorder %s16, 0
      %p83 = por %p81, %p82
      %s84 = ssub.s32 %s17, %s29
      %p85 = scmp.eq.s32.totalorder %s84, 0
      %s87 = sadd.s32 %s86, 1
      %s88 = scalar_select %p85, %s86, %s87
      %p91 = pneg %p85
      %p92 = scmp.eq.s32.totalorder %s10, 1
      %p93 = por %p91, %p92
      %p94 = scmp.ne.s32.totalorder %s86, %s89
      %p95 = scmp.eq.s32.totalorder %s10, 0
      %p96 = por %p94, %p95
      %p97 = scmp.ne.s32.totalorder %s86, %s89
      %p98 = scmp.eq.s32.totalorder %s15, 1
      %p99 = por %p97, %p98
      %p100 = scmp.ne.s32.totalorder %s89, %s90
      %p101 = scmp.eq.s32.totalorder %s15, 0
      %p102 = por %p100, %p101
      %p103 = scmp.ne.s32.totalorder %s89, %s90
      %p104 = scmp.eq.s32.totalorder %s16, 1
      %p105 = por %p103, %p104
      %p107 = scmp.ne.s32.totalorder %s90, %s106
      %p108 = scmp.eq.s32.totalorder %s16, 0
      %p109 = por %p107, %p108
      %s110 = ssub.s32 %s17, %s29
      %p111 = scmp.eq.s32.totalorder %s110, 0
      %s113 = sadd.s32 %s112, 1
      %s114 = scalar_select %p111, %s112, %s113
      %p117 = pneg %p111
      %p118 = scmp.eq.s32.totalorder %s10, 1
      %p119 = por %p117, %p118
      %p120 = scmp.ne.s32.totalorder %s112, %s115
      %p121 = scmp.eq.s32.totalorder %s10, 0
      %p122 = por %p120, %p121
      %p123 = scmp.ne.s32.totalorder %s112, %s115
      %p124 = scmp.eq.s32.totalorder %s15, 1
      %p125 = por %p123, %p124
      %p126 = scmp.ne.s32.totalorder %s115, %s116
      %p127 = scmp.eq.s32.totalorder %s15, 0
      %p128 = por %p126, %p127
      %p129 = scmp.ne.s32.totalorder %s115, %s116
      %p130 = scmp.eq.s32.totalorder %s16, 1
      %p131 = por %p129, %p130
      %p133 = scmp.ne.s32.totalorder %s116, %s132
      %p134 = scmp.eq.s32.totalorder %s16, 0
      %p135 = por %p133, %p134
      %s136 = ssub.s32 %s17, %s29
      %p137 = scmp.eq.s32.totalorder %s136, 0
      %s139 = sadd.s32 %s138, 1
      %s140 = scalar_select %p137, %s138, %s139
      %p143 = pneg %p137
      %p144 = scmp.eq.s32.totalorder %s10, 1
      %p145 = por %p143, %p144
      %p146 = scmp.ne.s32.totalorder %s138, %s141
      %p147 = scmp.eq.s32.totalorder %s10, 0
      %p148 = por %p146, %p147
      %p149 = scmp.ne.s32.totalorder %s138, %s141
      %p150 = scmp.eq.s32.totalorder %s15, 1
      %p151 = por %p149, %p150
      %p152 = scmp.ne.s32.totalorder %s141, %s142
      %p153 = scmp.eq.s32.totalorder %s15, 0
      %p154 = por %p152, %p153
      %p155 = scmp.ne.s32.totalorder %s141, %s142
      %p156 = scmp.eq.s32.totalorder %s16, 1
      %p157 = por %p155, %p156
      %p159 = scmp.ne.s32.totalorder %s142, %s158
      %p160 = scmp.eq.s32.totalorder %s16, 0
      %p161 = por %p159, %p160
      %p162 = scmp.le.s32.totalorder 1, %s10
      %p163 = scmp.lt.s32.totalorder %s10, 3
      %p164 = pnand %p162, %p163
      %p165 = pneg %p164
      // Predicated region
      $region9: #{view_selector_forward.1} parent=5 // pred_check
        _
      $region10: #{view_selector_forward.1} parent=5 // pred_check_branch
        %167 = sbr.rel (%p164) target = $region12
      $region11: #{view_selector_forward.1} parent=5 // pred_region
        %s168 = ssub.s32 %s10, 1
        // Predicated region
        $region13: #{view_selector_forward.1} parent=11 // pred_check
          %p169 = pneg %p48
        $region14: #{view_selector_forward.1} parent=11 // pred_check_branch
          %171 = sbr.rel (%p169) target = $region16
        $region15: #{view_selector_forward.1} parent=11 // pred_region
          %s172 = smul.u32 16, %s20
          %p173 = scmp.lt.s32.totalorder %s172, 15
          %s174 = scalar_select %p173, %s172, 15
          %s175 = smul.addr %s174, 4
          %s176 = scalar_lea.vmem %s0, %s175
          %s177 = smul.u32 16, %s20
        $region16: #{view_selector_forward.1} parent=11 // pred_fallthru
          _
      $region12: #{view_selector_forward.1} parent=5 // pred_fallthru
        _
      %p178 = scmp.lt.s32.totalorder %s10, 2
      // Predicated region
      $region17: #{view_selector_forward.1} parent=5 // pred_check
        %p179 = pneg %p178
      $region18: #{view_selector_forward.1} parent=5 // pred_check_branch
        %181 = sbr.rel (%p179) target = $region20
      $region19: #{view_selector_forward.1} parent=5 // pred_region
        // Predicated region
        $region21: #{view_selector_forward.1} parent=19 // pred_check
          %p182 = pneg %p70
        $region22: #{view_selector_forward.1} parent=19 // pred_check_branch
          %184 = sbr.rel (%p182) target = $region24
        $region23: #{view_selector_forward.1} parent=19 // pred_region
          %s185 = sand.u32 %s60, 1
          %s186 = sand.u32 %s60, 1
          %s187 = smul.addr %s186, 4096
          %s188 = scalar_lea.vmem [#allocation3], %s187
          %s189 = smul.u32 256, %s18
          %s190 = smul.u32 4, %s17
          %s191 = smul.addr %s189, 8
          %s192 = sadd.s32 %s190, %s191
          %s193 = smul.addr %s192, 4
          %s194 = scalar_lea.vmem %s1, %s193
          // Predicated region
          $region25: #{view_selector_forward.1} parent=23 // pred_check
            _
          $region26: #{view_selector_forward.1} parent=23 // pred_check_branch
            %196 = sbr.rel (0) target = $region28
          $region27: #{view_selector_forward.1} parent=23 // pred_region
            // Predicated region
            $region29: #{view_selector_forward.1} parent=27 // pred_check
              _
            $region30: #{view_selector_forward.1} parent=27 // pred_check_branch
              %198 = sbr.rel (0) target = $region32
            $region31: #{view_selector_forward.1} parent=27 // pred_region
              loop: start=0, step=1, limit=1
              $region33: #{view_selector_forward.1} parent=31 // loop_pre_header
                _
              $region34: #{view_selector_forward.1} parent=31 // loop_header
                %s200 = sphi 0, %s204
                %p201 = scmp.ge.s32.totalorder %s200, 1
                %s205 = sphi %s194, %s194
                %s206 = sphi %s188, %s188
              $region35: #{view_selector_forward.1} parent=31 // loop_header_branch
                %203 = sbr.rel (%p201) target = $region39
              $region36: #{view_selector_forward.1} parent=31 // loop_body
                %v207 = vld [vmem:[%s205] sm:$0xff]
                %208 = vst [vmem:[%s206] sm:$0xff] %v207
                %v209 = vld [vmem:[%s205 + $0x8] sm:$0xff]
                %210 = vst [vmem:[%s206 + $0x8] sm:$0xff] %v209
                %v211 = vld [vmem:[%s205 + $0x20] sm:$0xff]
                %212 = vst [vmem:[%s206 + $0x10] sm:$0xff] %v211
                %v213 = vld [vmem:[%s205 + $0x28] sm:$0xff]
                %214 = vst [vmem:[%s206 + $0x18] sm:$0xff] %v213
                %v215 = vld [vmem:[%s205 + $0x40] sm:$0xff]
                %216 = vst [vmem:[%s206 + $0x20] sm:$0xff] %v215
                %v217 = vld [vmem:[%s205 + $0x48] sm:$0xff]
                %218 = vst [vmem:[%s206 + $0x28] sm:$0xff] %v217
                %v219 = vld [vmem:[%s205 + $0x60] sm:$0xff]
                %220 = vst [vmem:[%s206 + $0x30] sm:$0xff] %v219
                %v221 = vld [vmem:[%s205 + $0x68] sm:$0xff]
                %222 = vst [vmem:[%s206 + $0x38] sm:$0xff] %v221
                %v223 = vld [vmem:[%s205 + $0x80] sm:$0xff]
                %224 = vst [vmem:[%s206 + $0x40] sm:$0xff] %v223
                %v225 = vld [vmem:[%s205 + $0x88] sm:$0xff]
                %226 = vst [vmem:[%s206 + $0x48] sm:$0xff] %v225
                %v227 = vld [vmem:[%s205 + $0xa0] sm:$0xff]
                %228 = vst [vmem:[%s206 + $0x50] sm:$0xff] %v227
                %v229 = vld [vmem:[%s205 + $0xa8] sm:$0xff]
                %230 = vst [vmem:[%s206 + $0x58] sm:$0xff] %v229
                %v231 = vld [vmem:[%s205 + $0xc0] sm:$0xff]
                %232 = vst [vmem:[%s206 + $0x60] sm:$0xff] %v231
                %v233 = vld [vmem:[%s205 + $0xc8] sm:$0xff]
                %234 = vst [vmem:[%s206 + $0x68] sm:$0xff] %v233
                %v235 = vld [vmem:[%s205 + $0xe0] sm:$0xff]
                %236 = vst [vmem:[%s206 + $0x70] sm:$0xff] %v235
                %v237 = vld [vmem:[%s205 + $0xe8] sm:$0xff]
                %238 = vst [vmem:[%s206 + $0x78] sm:$0xff] %v237
                %v239 = vld [vmem:[%s205 + $0x100] sm:$0xff]
                %240 = vst [vmem:[%s206 + $0x80] sm:$0xff] %v239
                %v241 = vld [vmem:[%s205 + $0x108] sm:$0xff]
                %242 = vst [vmem:[%s206 + $0x88] sm:$0xff] %v241
                %v243 = vld [vmem:[%s205 + $0x120] sm:$0xff]
                %244 = vst [vmem:[%s206 + $0x90] sm:$0xff] %v243
                %v245 = vld [vmem:[%s205 + $0x128] sm:$0xff]
                %246 = vst [vmem:[%s206 + $0x98] sm:$0xff] %v245
                %v247 = vld [vmem:[%s205 + $0x140] sm:$0xff]
                %248 = vst [vmem:[%s206 + $0xa0] sm:$0xff] %v247
                %v249 = vld [vmem:[%s205 + $0x148] sm:$0xff]
                %250 = vst [vmem:[%s206 + $0xa8] sm:$0xff] %v249
                %v251 = vld [vmem:[%s205 + $0x160] sm:$0xff]
                %252 = vst [vmem:[%s206 + $0xb0] sm:$0xff] %v251
                %v253 = vld [vmem:[%s205 + $0x168] sm:$0xff]
                %254 = vst [vmem:[%s206 + $0xb8] sm:$0xff] %v253
                %v255 = vld [vmem:[%s205 + $0x180] sm:$0xff]
                %256 = vst [vmem:[%s206 + $0xc0] sm:$0xff] %v255
                %v257 = vld [vmem:[%s205 + $0x188] sm:$0xff]
                %258 = vst [vmem:[%s206 + $0xc8] sm:$0xff] %v257
                %v259 = vld [vmem:[%s205 + $0x1a0] sm:$0xff]
                %260 = vst [vmem:[%s206 + $0xd0] sm:$0xff] %v259
                %v261 = vld [vmem:[%s205 + $0x1a8] sm:$0xff]
                %262 = vst [vmem:[%s206 + $0xd8] sm:$0xff] %v261
                %v263 = vld [vmem:[%s205 + $0x1c0] sm:$0xff]
                %264 = vst [vmem:[%s206 + $0xe0] sm:$0xff] %v263
                %v265 = vld [vmem:[%s205 + $0x1c8] sm:$0xff]
                %266 = vst [vmem:[%s206 + $0xe8] sm:$0xff] %v265
                %v267 = vld [vmem:[%s205 + $0x1e0] sm:$0xff]
                %268 = vst [vmem:[%s206 + $0xf0] sm:$0xff] %v267
                %v269 = vld [vmem:[%s205 + $0x1e8] sm:$0xff]
                %270 = vst [vmem:[%s206 + $0xf8] sm:$0xff] %v269
                %v271 = vld [vmem:[%s205 + $0x200] sm:$0xff]
                %272 = vst [vmem:[%s206 + $0x100] sm:$0xff] %v271
                %v273 = vld [vmem:[%s205 + $0x208] sm:$0xff]
                %274 = vst [vmem:[%s206 + $0x108] sm:$0xff] %v273
                %v275 = vld [vmem:[%s205 + $0x220] sm:$0xff]
                %276 = vst [vmem:[%s206 + $0x110] sm:$0xff] %v275
                %v277 = vld [vmem:[%s205 + $0x228] sm:$0xff]
                %278 = vst [vmem:[%s206 + $0x118] sm:$0xff] %v277
                %v279 = vld [vmem:[%s205 + $0x240] sm:$0xff]
                %280 = vst [vmem:[%s206 + $0x120] sm:$0xff] %v279
                %v281 = vld [vmem:[%s205 + $0x248] sm:$0xff]
                %282 = vst [vmem:[%s206 + $0x128] sm:$0xff] %v281
                %v283 = vld [vmem:[%s205 + $0x260] sm:$0xff]
                %284 = vst [vmem:[%s206 + $0x130] sm:$0xff] %v283
                %v285 = vld [vmem:[%s205 + $0x268] sm:$0xff]
                %286 = vst [vmem:[%s206 + $0x138] sm:$0xff] %v285
                %v287 = vld [vmem:[%s205 + $0x280] sm:$0xff]
                %288 = vst [vmem:[%s206 + $0x140] sm:$0xff] %v287
                %v289 = vld [vmem:[%s205 + $0x288] sm:$0xff]
                %290 = vst [vmem:[%s206 + $0x148] sm:$0xff] %v289
                %v291 = vld [vmem:[%s205 + $0x2a0] sm:$0xff]
                %292 = vst [vmem:[%s206 + $0x150] sm:$0xff] %v291
                %v293 = vld [vmem:[%s205 + $0x2a8] sm:$0xff]
                %294 = vst [vmem:[%s206 + $0x158] sm:$0xff] %v293
                %v295 = vld [vmem:[%s205 + $0x2c0] sm:$0xff]
                %296 = vst [vmem:[%s206 + $0x160] sm:$0xff] %v295
                %v297 = vld [vmem:[%s205 + $0x2c8] sm:$0xff]
                %298 = vst [vmem:[%s206 + $0x168] sm:$0xff] %v297
                %v299 = vld [vmem:[%s205 + $0x2e0] sm:$0xff]
                %300 = vst [vmem:[%s206 + $0x170] sm:$0xff] %v299
                %v301 = vld [vmem:[%s205 + $0x2e8] sm:$0xff]
                %302 = vst [vmem:[%s206 + $0x178] sm:$0xff] %v301
                %v303 = vld [vmem:[%s205 + $0x300] sm:$0xff]
                %304 = vst [vmem:[%s206 + $0x180] sm:$0xff] %v303
                %v305 = vld [vmem:[%s205 + $0x308] sm:$0xff]
                %306 = vst [vmem:[%s206 + $0x188] sm:$0xff] %v305
                %v307 = vld [vmem:[%s205 + $0x320] sm:$0xff]
                %308 = vst [vmem:[%s206 + $0x190] sm:$0xff] %v307
                %v309 = vld [vmem:[%s205 + $0x328] sm:$0xff]
                %310 = vst [vmem:[%s206 + $0x198] sm:$0xff] %v309
                %v311 = vld [vmem:[%s205 + $0x340] sm:$0xff]
                %312 = vst [vmem:[%s206 + $0x1a0] sm:$0xff] %v311
                %v313 = vld [vmem:[%s205 + $0x348] sm:$0xff]
                %314 = vst [vmem:[%s206 + $0x1a8] sm:$0xff] %v313
                %v315 = vld [vmem:[%s205 + $0x360] sm:$0xff]
                %316 = vst [vmem:[%s206 + $0x1b0] sm:$0xff] %v315
                %v317 = vld [vmem:[%s205 + $0x368] sm:$0xff]
                %318 = vst [vmem:[%s206 + $0x1b8] sm:$0xff] %v317
                %v319 = vld [vmem:[%s205 + $0x380] sm:$0xff]
                %320 = vst [vmem:[%s206 + $0x1c0] sm:$0xff] %v319
                %v321 = vld [vmem:[%s205 + $0x388] sm:$0xff]
                %322 = vst [vmem:[%s206 + $0x1c8] sm:$0xff] %v321
                %v323 = vld [vmem:[%s205 + $0x3a0] sm:$0xff]
                %324 = vst [vmem:[%s206 + $0x1d0] sm:$0xff] %v323
                %v325 = vld [vmem:[%s205 + $0x3a8] sm:$0xff]
                %326 = vst [vmem:[%s206 + $0x1d8] sm:$0xff] %v325
                %v327 = vld [vmem:[%s205 + $0x3c0] sm:$0xff]
                %328 = vst [vmem:[%s206 + $0x1e0] sm:$0xff] %v327
                %v329 = vld [vmem:[%s205 + $0x3c8] sm:$0xff]
                %330 = vst [vmem:[%s206 + $0x1e8] sm:$0xff] %v329
                %v331 = vld [vmem:[%s205 + $0x3e0] sm:$0xff]
                %332 = vst [vmem:[%s206 + $0x1f0] sm:$0xff] %v331
                %v333 = vld [vmem:[%s205 + $0x3e8] sm:$0xff]
                %334 = vst [vmem:[%s206 + $0x1f8] sm:$0xff] %v333
                %v335 = vld [vmem:[%s205 + $0x400] sm:$0xff]
                %336 = vst [vmem:[%s206 + $0x200] sm:$0xff] %v335
                %v337 = vld [vmem:[%s205 + $0x408] sm:$0xff]
                %338 = vst [vmem:[%s206 + $0x208] sm:$0xff] %v337
                %v339 = vld [vmem:[%s205 + $0x420] sm:$0xff]
                %340 = vst [vmem:[%s206 + $0x210] sm:$0xff] %v339
                %v341 = vld [vmem:[%s205 + $0x428] sm:$0xff]
                %342 = vst [vmem:[%s206 + $0x218] sm:$0xff] %v341
                %v343 = vld [vmem:[%s205 + $0x440] sm:$0xff]
                %344 = vst [vmem:[%s206 + $0x220] sm:$0xff] %v343
                %v345 = vld [vmem:[%s205 + $0x448] sm:$0xff]
                %346 = vst [vmem:[%s206 + $0x228] sm:$0xff] %v345
                %v347 = vld [vmem:[%s205 + $0x460] sm:$0xff]
                %348 = vst [vmem:[%s206 + $0x230] sm:$0xff] %v347
                %v349 = vld [vmem:[%s205 + $0x468] sm:$0xff]
                %350 = vst [vmem:[%s206 + $0x238] sm:$0xff] %v349
                %v351 = vld [vmem:[%s205 + $0x480] sm:$0xff]
                %352 = vst [vmem:[%s206 + $0x240] sm:$0xff] %v351
                %v353 = vld [vmem:[%s205 + $0x488] sm:$0xff]
                %354 = vst [vmem:[%s206 + $0x248] sm:$0xff] %v353
                %v355 = vld [vmem:[%s205 + $0x4a0] sm:$0xff]
                %356 = vst [vmem:[%s206 + $0x250] sm:$0xff] %v355
                %v357 = vld [vmem:[%s205 + $0x4a8] sm:$0xff]
                %358 = vst [vmem:[%s206 + $0x258] sm:$0xff] %v357
                %v359 = vld [vmem:[%s205 + $0x4c0] sm:$0xff]
                %360 = vst [vmem:[%s206 + $0x260] sm:$0xff] %v359
                %v361 = vld [vmem:[%s205 + $0x4c8] sm:$0xff]
                %362 = vst [vmem:[%s206 + $0x268] sm:$0xff] %v361
                %v363 = vld [vmem:[%s205 + $0x4e0] sm:$0xff]
                %364 = vst [vmem:[%s206 + $0x270] sm:$0xff] %v363
                %v365 = vld [vmem:[%s205 + $0x4e8] sm:$0xff]
                %366 = vst [vmem:[%s206 + $0x278] sm:$0xff] %v365
                %v367 = vld [vmem:[%s205 + $0x500] sm:$0xff]
                %368 = vst [vmem:[%s206 + $0x280] sm:$0xff] %v367
                %v369 = vld [vmem:[%s205 + $0x508] sm:$0xff]
                %370 = vst [vmem:[%s206 + $0x288] sm:$0xff] %v369
                %v371 = vld [vmem:[%s205 + $0x520] sm:$0xff]
                %372 = vst [vmem:[%s206 + $0x290] sm:$0xff] %v371
                %v373 = vld [vmem:[%s205 + $0x528] sm:$0xff]
                %374 = vst [vmem:[%s206 + $0x298] sm:$0xff] %v373
                %v375 = vld [vmem:[%s205 + $0x540] sm:$0xff]
                %376 = vst [vmem:[%s206 + $0x2a0] sm:$0xff] %v375
                %v377 = vld [vmem:[%s205 + $0x548] sm:$0xff]
                %378 = vst [vmem:[%s206 + $0x2a8] sm:$0xff] %v377
                %v379 = vld [vmem:[%s205 + $0x560] sm:$0xff]
                %380 = vst [vmem:[%s206 + $0x2b0] sm:$0xff] %v379
                %v381 = vld [vmem:[%s205 + $0x568] sm:$0xff]
                %382 = vst [vmem:[%s206 + $0x2b8] sm:$0xff] %v381
                %v383 = vld [vmem:[%s205 + $0x580] sm:$0xff]
                %384 = vst [vmem:[%s206 + $0x2c0] sm:$0xff] %v383
                %v385 = vld [vmem:[%s205 + $0x588] sm:$0xff]
                %386 = vst [vmem:[%s206 + $0x2c8] sm:$0xff] %v385
                %v387 = vld [vmem:[%s205 + $0x5a0] sm:$0xff]
                %388 = vst [vmem:[%s206 + $0x2d0] sm:$0xff] %v387
                %v389 = vld [vmem:[%s205 + $0x5a8] sm:$0xff]
                %390 = vst [vmem:[%s206 + $0x2d8] sm:$0xff] %v389
                %v391 = vld [vmem:[%s205 + $0x5c0] sm:$0xff]
                %392 = vst [vmem:[%s206 + $0x2e0] sm:$0xff] %v391
                %v393 = vld [vmem:[%s205 + $0x5c8] sm:$0xff]
                %394 = vst [vmem:[%s206 + $0x2e8] sm:$0xff] %v393
                %v395 = vld [vmem:[%s205 + $0x5e0] sm:$0xff]
                %396 = vst [vmem:[%s206 + $0x2f0] sm:$0xff] %v395
                %v397 = vld [vmem:[%s205 + $0x5e8] sm:$0xff]
                %398 = vst [vmem:[%s206 + $0x2f8] sm:$0xff] %v397
                %v399 = vld [vmem:[%s205 + $0x600] sm:$0xff]
                %400 = vst [vmem:[%s206 + $0x300] sm:$0xff] %v399
                %v401 = vld [vmem:[%s205 + $0x608] sm:$0xff]
                %402 = vst [vmem:[%s206 + $0x308] sm:$0xff] %v401
                %v403 = vld [vmem:[%s205 + $0x620] sm:$0xff]
                %404 = vst [vmem:[%s206 + $0x310] sm:$0xff] %v403
                %v405 = vld [vmem:[%s205 + $0x628] sm:$0xff]
                %406 = vst [vmem:[%s206 + $0x318] sm:$0xff] %v405
                %v407 = vld [vmem:[%s205 + $0x640] sm:$0xff]
                %408 = vst [vmem:[%s206 + $0x320] sm:$0xff] %v407
                %v409 = vld [vmem:[%s205 + $0x648] sm:$0xff]
                %410 = vst [vmem:[%s206 + $0x328] sm:$0xff] %v409
                %v411 = vld [vmem:[%s205 + $0x660] sm:$0xff]
                %412 = vst [vmem:[%s206 + $0x330] sm:$0xff] %v411
                %v413 = vld [vmem:[%s205 + $0x668] sm:$0xff]
                %414 = vst [vmem:[%s206 + $0x338] sm:$0xff] %v413
                %v415 = vld [vmem:[%s205 + $0x680] sm:$0xff]
                %416 = vst [vmem:[%s206 + $0x340] sm:$0xff] %v415
                %v417 = vld [vmem:[%s205 + $0x688] sm:$0xff]
                %418 = vst [vmem:[%s206 + $0x348] sm:$0xff] %v417
                %v419 = vld [vmem:[%s205 + $0x6a0] sm:$0xff]
                %420 = vst [vmem:[%s206 + $0x350] sm:$0xff] %v419
                %v421 = vld [vmem:[%s205 + $0x6a8] sm:$0xff]
                %422 = vst [vmem:[%s206 + $0x358] sm:$0xff] %v421
                %v423 = vld [vmem:[%s205 + $0x6c0] sm:$0xff]
                %424 = vst [vmem:[%s206 + $0x360] sm:$0xff] %v423
                %v425 = vld [vmem:[%s205 + $0x6c8] sm:$0xff]
                %426 = vst [vmem:[%s206 + $0x368] sm:$0xff] %v425
                %v427 = vld [vmem:[%s205 + $0x6e0] sm:$0xff]
                %428 = vst [vmem:[%s206 + $0x370] sm:$0xff] %v427
                %v429 = vld [vmem:[%s205 + $0x6e8] sm:$0xff]
                %430 = vst [vmem:[%s206 + $0x378] sm:$0xff] %v429
                %v431 = vld [vmem:[%s205 + $0x700] sm:$0xff]
                %432 = vst [vmem:[%s206 + $0x380] sm:$0xff] %v431
                %v433 = vld [vmem:[%s205 + $0x708] sm:$0xff]
                %434 = vst [vmem:[%s206 + $0x388] sm:$0xff] %v433
                %v435 = vld [vmem:[%s205 + $0x720] sm:$0xff]
                %436 = vst [vmem:[%s206 + $0x390] sm:$0xff] %v435
                %v437 = vld [vmem:[%s205 + $0x728] sm:$0xff]
                %438 = vst [vmem:[%s206 + $0x398] sm:$0xff] %v437
                %v439 = vld [vmem:[%s205 + $0x740] sm:$0xff]
                %440 = vst [vmem:[%s206 + $0x3a0] sm:$0xff] %v439
                %v441 = vld [vmem:[%s205 + $0x748] sm:$0xff]
                %442 = vst [vmem:[%s206 + $0x3a8] sm:$0xff] %v441
                %v443 = vld [vmem:[%s205 + $0x760] sm:$0xff]
                %444 = vst [vmem:[%s206 + $0x3b0] sm:$0xff] %v443
                %v445 = vld [vmem:[%s205 + $0x768] sm:$0xff]
                %446 = vst [vmem:[%s206 + $0x3b8] sm:$0xff] %v445
                %v447 = vld [vmem:[%s205 + $0x780] sm:$0xff]
                %448 = vst [vmem:[%s206 + $0x3c0] sm:$0xff] %v447
                %v449 = vld [vmem:[%s205 + $0x788] sm:$0xff]
                %450 = vst [vmem:[%s206 + $0x3c8] sm:$0xff] %v449
                %v451 = vld [vmem:[%s205 + $0x7a0] sm:$0xff]
                %452 = vst [vmem:[%s206 + $0x3d0] sm:$0xff] %v451
                %v453 = vld [vmem:[%s205 + $0x7a8] sm:$0xff]
                %454 = vst [vmem:[%s206 + $0x3d8] sm:$0xff] %v453
                %v455 = vld [vmem:[%s205 + $0x7c0] sm:$0xff]
                %456 = vst [vmem:[%s206 + $0x3e0] sm:$0xff] %v455
                %v457 = vld [vmem:[%s205 + $0x7c8] sm:$0xff]
                %458 = vst [vmem:[%s206 + $0x3e8] sm:$0xff] %v457
                %v459 = vld [vmem:[%s205 + $0x7e0] sm:$0xff]
                %460 = vst [vmem:[%s206 + $0x3f0] sm:$0xff] %v459
                %v461 = vld [vmem:[%s205 + $0x7e8] sm:$0xff]
                %462 = vst [vmem:[%s206 + $0x3f8] sm:$0xff] %v461
                %v463 = vld [vmem:[%s205 + $0x800] sm:$0xff]
                %464 = vst [vmem:[%s206 + $0x400] sm:$0xff] %v463
                %v465 = vld [vmem:[%s205 + $0x808] sm:$0xff]
                %466 = vst [vmem:[%s206 + $0x408] sm:$0xff] %v465
                %v467 = vld [vmem:[%s205 + $0x820] sm:$0xff]
                %468 = vst [vmem:[%s206 + $0x410] sm:$0xff] %v467
                %v469 = vld [vmem:[%s205 + $0x828] sm:$0xff]
                %470 = vst [vmem:[%s206 + $0x418] sm:$0xff] %v469
                %v471 = vld [vmem:[%s205 + $0x840] sm:$0xff]
                %472 = vst [vmem:[%s206 + $0x420] sm:$0xff] %v471
                %v473 = vld [vmem:[%s205 + $0x848] sm:$0xff]
                %474 = vst [vmem:[%s206 + $0x428] sm:$0xff] %v473
                %v475 = vld [vmem:[%s205 + $0x860] sm:$0xff]
                %476 = vst [vmem:[%s206 + $0x430] sm:$0xff] %v475
                %v477 = vld [vmem:[%s205 + $0x868] sm:$0xff]
                %478 = vst [vmem:[%s206 + $0x438] sm:$0xff] %v477
                %v479 = vld [vmem:[%s205 + $0x880] sm:$0xff]
                %480 = vst [vmem:[%s206 + $0x440] sm:$0xff] %v479
                %v481 = vld [vmem:[%s205 + $0x888] sm:$0xff]
                %482 = vst [vmem:[%s206 + $0x448] sm:$0xff] %v481
                %v483 = vld [vmem:[%s205 + $0x8a0] sm:$0xff]
                %484 = vst [vmem:[%s206 + $0x450] sm:$0xff] %v483
                %v485 = vld [vmem:[%s205 + $0x8a8] sm:$0xff]
                %486 = vst [vmem:[%s206 + $0x458] sm:$0xff] %v485
                %v487 = vld [vmem:[%s205 + $0x8c0] sm:$0xff]
                %488 = vst [vmem:[%s206 + $0x460] sm:$0xff] %v487
                %v489 = vld [vmem:[%s205 + $0x8c8] sm:$0xff]
                %490 = vst [vmem:[%s206 + $0x468] sm:$0xff] %v489
                %v491 = vld [vmem:[%s205 + $0x8e0] sm:$0xff]
                %492 = vst [vmem:[%s206 + $0x470] sm:$0xff] %v491
                %v493 = vld [vmem:[%s205 + $0x8e8] sm:$0xff]
                %494 = vst [vmem:[%s206 + $0x478] sm:$0xff] %v493
                %v495 = vld [vmem:[%s205 + $0x900] sm:$0xff]
                %496 = vst [vmem:[%s206 + $0x480] sm:$0xff] %v495
                %v497 = vld [vmem:[%s205 + $0x908] sm:$0xff]
                %498 = vst [vmem:[%s206 + $0x488] sm:$0xff] %v497
                %v499 = vld [vmem:[%s205 + $0x920] sm:$0xff]
                %500 = vst [vmem:[%s206 + $0x490] sm:$0xff] %v499
                %v501 = vld [vmem:[%s205 + $0x928] sm:$0xff]
                %502 = vst [vmem:[%s206 + $0x498] sm:$0xff] %v501
                %v503 = vld [vmem:[%s205 + $0x940] sm:$0xff]
                %504 = vst [vmem:[%s206 + $0x4a0] sm:$0xff] %v503
                %v505 = vld [vmem:[%s205 + $0x948] sm:$0xff]
                %506 = vst [vmem:[%s206 + $0x4a8] sm:$0xff] %v505
                %v507 = vld [vmem:[%s205 + $0x960] sm:$0xff]
                %508 = vst [vmem:[%s206 + $0x4b0] sm:$0xff] %v507
                %v509 = vld [vmem:[%s205 + $0x968] sm:$0xff]
                %510 = vst [vmem:[%s206 + $0x4b8] sm:$0xff] %v509
                %v511 = vld [vmem:[%s205 + $0x980] sm:$0xff]
                %512 = vst [vmem:[%s206 + $0x4c0] sm:$0xff] %v511
                %v513 = vld [vmem:[%s205 + $0x988] sm:$0xff]
                %514 = vst [vmem:[%s206 + $0x4c8] sm:$0xff] %v513
                %v515 = vld [vmem:[%s205 + $0x9a0] sm:$0xff]
                %516 = vst [vmem:[%s206 + $0x4d0] sm:$0xff] %v515
                %v517 = vld [vmem:[%s205 + $0x9a8] sm:$0xff]
                %518 = vst [vmem:[%s206 + $0x4d8] sm:$0xff] %v517
                %v519 = vld [vmem:[%s205 + $0x9c0] sm:$0xff]
                %520 = vst [vmem:[%s206 + $0x4e0] sm:$0xff] %v519
                %v521 = vld [vmem:[%s205 + $0x9c8] sm:$0xff]
                %522 = vst [vmem:[%s206 + $0x4e8] sm:$0xff] %v521
                %v523 = vld [vmem:[%s205 + $0x9e0] sm:$0xff]
                %524 = vst [vmem:[%s206 + $0x4f0] sm:$0xff] %v523
                %v525 = vld [vmem:[%s205 + $0x9e8] sm:$0xff]
                %526 = vst [vmem:[%s206 + $0x4f8] sm:$0xff] %v525
                %v527 = vld [vmem:[%s205 + $0xa00] sm:$0xff]
                %528 = vst [vmem:[%s206 + $0x500] sm:$0xff] %v527
                %v529 = vld [vmem:[%s205 + $0xa08] sm:$0xff]
                %530 = vst [vmem:[%s206 + $0x508] sm:$0xff] %v529
                %v531 = vld [vmem:[%s205 + $0xa20] sm:$0xff]
                %532 = vst [vmem:[%s206 + $0x510] sm:$0xff] %v531
                %v533 = vld [vmem:[%s205 + $0xa28] sm:$0xff]
                %534 = vst [vmem:[%s206 + $0x518] sm:$0xff] %v533
                %v535 = vld [vmem:[%s205 + $0xa40] sm:$0xff]
                %536 = vst [vmem:[%s206 + $0x520] sm:$0xff] %v535
                %v537 = vld [vmem:[%s205 + $0xa48] sm:$0xff]
                %538 = vst [vmem:[%s206 + $0x528] sm:$0xff] %v537
                %v539 = vld [vmem:[%s205 + $0xa60] sm:$0xff]
                %540 = vst [vmem:[%s206 + $0x530] sm:$0xff] %v539
                %v541 = vld [vmem:[%s205 + $0xa68] sm:$0xff]
                %542 = vst [vmem:[%s206 + $0x538] sm:$0xff] %v541
                %v543 = vld [vmem:[%s205 + $0xa80] sm:$0xff]
                %544 = vst [vmem:[%s206 + $0x540] sm:$0xff] %v543
                %v545 = vld [vmem:[%s205 + $0xa88] sm:$0xff]
                %546 = vst [vmem:[%s206 + $0x548] sm:$0xff] %v545
                %v547 = vld [vmem:[%s205 + $0xaa0] sm:$0xff]
                %548 = vst [vmem:[%s206 + $0x550] sm:$0xff] %v547
                %v549 = vld [vmem:[%s205 + $0xaa8] sm:$0xff]
                %550 = vst [vmem:[%s206 + $0x558] sm:$0xff] %v549
                %v551 = vld [vmem:[%s205 + $0xac0] sm:$0xff]
                %552 = vst [vmem:[%s206 + $0x560] sm:$0xff] %v551
                %v553 = vld [vmem:[%s205 + $0xac8] sm:$0xff]
                %554 = vst [vmem:[%s206 + $0x568] sm:$0xff] %v553
                %v555 = vld [vmem:[%s205 + $0xae0] sm:$0xff]
                %556 = vst [vmem:[%s206 + $0x570] sm:$0xff] %v555
                %v557 = vld [vmem:[%s205 + $0xae8] sm:$0xff]
                %558 = vst [vmem:[%s206 + $0x578] sm:$0xff] %v557
                %v559 = vld [vmem:[%s205 + $0xb00] sm:$0xff]
                %560 = vst [vmem:[%s206 + $0x580] sm:$0xff] %v559
                %v561 = vld [vmem:[%s205 + $0xb08] sm:$0xff]
                %562 = vst [vmem:[%s206 + $0x588] sm:$0xff] %v561
                %v563 = vld [vmem:[%s205 + $0xb20] sm:$0xff]
                %564 = vst [vmem:[%s206 + $0x590] sm:$0xff] %v563
                %v565 = vld [vmem:[%s205 + $0xb28] sm:$0xff]
                %566 = vst [vmem:[%s206 + $0x598] sm:$0xff] %v565
                %v567 = vld [vmem:[%s205 + $0xb40] sm:$0xff]
                %568 = vst [vmem:[%s206 + $0x5a0] sm:$0xff] %v567
                %v569 = vld [vmem:[%s205 + $0xb48] sm:$0xff]
                %570 = vst [vmem:[%s206 + $0x5a8] sm:$0xff] %v569
                %v571 = vld [vmem:[%s205 + $0xb60] sm:$0xff]
                %572 = vst [vmem:[%s206 + $0x5b0] sm:$0xff] %v571
                %v573 = vld [vmem:[%s205 + $0xb68] sm:$0xff]
                %574 = vst [vmem:[%s206 + $0x5b8] sm:$0xff] %v573
                %v575 = vld [vmem:[%s205 + $0xb80] sm:$0xff]
                %576 = vst [vmem:[%s206 + $0x5c0] sm:$0xff] %v575
                %v577 = vld [vmem:[%s205 + $0xb88] sm:$0xff]
                %578 = vst [vmem:[%s206 + $0x5c8] sm:$0xff] %v577
                %v579 = vld [vmem:[%s205 + $0xba0] sm:$0xff]
                %580 = vst [vmem:[%s206 + $0x5d0] sm:$0xff] %v579
                %v581 = vld [vmem:[%s205 + $0xba8] sm:$0xff]
                %582 = vst [vmem:[%s206 + $0x5d8] sm:$0xff] %v581
                %v583 = vld [vmem:[%s205 + $0xbc0] sm:$0xff]
                %584 = vst [vmem:[%s206 + $0x5e0] sm:$0xff] %v583
                %v585 = vld [vmem:[%s205 + $0xbc8] sm:$0xff]
                %586 = vst [vmem:[%s206 + $0x5e8] sm:$0xff] %v585
                %v587 = vld [vmem:[%s205 + $0xbe0] sm:$0xff]
                %588 = vst [vmem:[%s206 + $0x5f0] sm:$0xff] %v587
                %v589 = vld [vmem:[%s205 + $0xbe8] sm:$0xff]
                %590 = vst [vmem:[%s206 + $0x5f8] sm:$0xff] %v589
                %v591 = vld [vmem:[%s205 + $0xc00] sm:$0xff]
                %592 = vst [vmem:[%s206 + $0x600] sm:$0xff] %v591
                %v593 = vld [vmem:[%s205 + $0xc08] sm:$0xff]
                %594 = vst [vmem:[%s206 + $0x608] sm:$0xff] %v593
                %v595 = vld [vmem:[%s205 + $0xc20] sm:$0xff]
                %596 = vst [vmem:[%s206 + $0x610] sm:$0xff] %v595
                %v597 = vld [vmem:[%s205 + $0xc28] sm:$0xff]
                %598 = vst [vmem:[%s206 + $0x618] sm:$0xff] %v597
                %v599 = vld [vmem:[%s205 + $0xc40] sm:$0xff]
                %600 = vst [vmem:[%s206 + $0x620] sm:$0xff] %v599
                %v601 = vld [vmem:[%s205 + $0xc48] sm:$0xff]
                %602 = vst [vmem:[%s206 + $0x628] sm:$0xff] %v601
                %v603 = vld [vmem:[%s205 + $0xc60] sm:$0xff]
                %604 = vst [vmem:[%s206 + $0x630] sm:$0xff] %v603
                %v605 = vld [vmem:[%s205 + $0xc68] sm:$0xff]
                %606 = vst [vmem:[%s206 + $0x638] sm:$0xff] %v605
                %v607 = vld [vmem:[%s205 + $0xc80] sm:$0xff]
                %608 = vst [vmem:[%s206 + $0x640] sm:$0xff] %v607
                %v609 = vld [vmem:[%s205 + $0xc88] sm:$0xff]
                %610 = vst [vmem:[%s206 + $0x648] sm:$0xff] %v609
                %v611 = vld [vmem:[%s205 + $0xca0] sm:$0xff]
                %612 = vst [vmem:[%s206 + $0x650] sm:$0xff] %v611
                %v613 = vld [vmem:[%s205 + $0xca8] sm:$0xff]
                %614 = vst [vmem:[%s206 + $0x658] sm:$0xff] %v613
                %v615 = vld [vmem:[%s205 + $0xcc0] sm:$0xff]
                %616 = vst [vmem:[%s206 + $0x660] sm:$0xff] %v615
                %v617 = vld [vmem:[%s205 + $0xcc8] sm:$0xff]
                %618 = vst [vmem:[%s206 + $0x668] sm:$0xff] %v617
                %v619 = vld [vmem:[%s205 + $0xce0] sm:$0xff]
                %620 = vst [vmem:[%s206 + $0x670] sm:$0xff] %v619
                %v621 = vld [vmem:[%s205 + $0xce8] sm:$0xff]
                %622 = vst [vmem:[%s206 + $0x678] sm:$0xff] %v621
                %v623 = vld [vmem:[%s205 + $0xd00] sm:$0xff]
                %624 = vst [vmem:[%s206 + $0x680] sm:$0xff] %v623
                %v625 = vld [vmem:[%s205 + $0xd08] sm:$0xff]
                %626 = vst [vmem:[%s206 + $0x688] sm:$0xff] %v625
                %v627 = vld [vmem:[%s205 + $0xd20] sm:$0xff]
                %628 = vst [vmem:[%s206 + $0x690] sm:$0xff] %v627
                %v629 = vld [vmem:[%s205 + $0xd28] sm:$0xff]
                %630 = vst [vmem:[%s206 + $0x698] sm:$0xff] %v629
                %v631 = vld [vmem:[%s205 + $0xd40] sm:$0xff]
                %632 = vst [vmem:[%s206 + $0x6a0] sm:$0xff] %v631
                %v633 = vld [vmem:[%s205 + $0xd48] sm:$0xff]
                %634 = vst [vmem:[%s206 + $0x6a8] sm:$0xff] %v633
                %v635 = vld [vmem:[%s205 + $0xd60] sm:$0xff]
                %636 = vst [vmem:[%s206 + $0x6b0] sm:$0xff] %v635
                %v637 = vld [vmem:[%s205 + $0xd68] sm:$0xff]
                %638 = vst [vmem:[%s206 + $0x6b8] sm:$0xff] %v637
                %v639 = vld [vmem:[%s205 + $0xd80] sm:$0xff]
                %640 = vst [vmem:[%s206 + $0x6c0] sm:$0xff] %v639
                %v641 = vld [vmem:[%s205 + $0xd88] sm:$0xff]
                %642 = vst [vmem:[%s206 + $0x6c8] sm:$0xff] %v641
                %v643 = vld [vmem:[%s205 + $0xda0] sm:$0xff]
                %644 = vst [vmem:[%s206 + $0x6d0] sm:$0xff] %v643
                %v645 = vld [vmem:[%s205 + $0xda8] sm:$0xff]
                %646 = vst [vmem:[%s206 + $0x6d8] sm:$0xff] %v645
                %v647 = vld [vmem:[%s205 + $0xdc0] sm:$0xff]
                %648 = vst [vmem:[%s206 + $0x6e0] sm:$0xff] %v647
                %v649 = vld [vmem:[%s205 + $0xdc8] sm:$0xff]
                %650 = vst [vmem:[%s206 + $0x6e8] sm:$0xff] %v649
                %v651 = vld [vmem:[%s205 + $0xde0] sm:$0xff]
                %652 = vst [vmem:[%s206 + $0x6f0] sm:$0xff] %v651
                %v653 = vld [vmem:[%s205 + $0xde8] sm:$0xff]
                %654 = vst [vmem:[%s206 + $0x6f8] sm:$0xff] %v653
                %v655 = vld [vmem:[%s205 + $0xe00] sm:$0xff]
                %656 = vst [vmem:[%s206 + $0x700] sm:$0xff] %v655
                %v657 = vld [vmem:[%s205 + $0xe08] sm:$0xff]
                %658 = vst [vmem:[%s206 + $0x708] sm:$0xff] %v657
                %v659 = vld [vmem:[%s205 + $0xe20] sm:$0xff]
                %660 = vst [vmem:[%s206 + $0x710] sm:$0xff] %v659
                %v661 = vld [vmem:[%s205 + $0xe28] sm:$0xff]
                %662 = vst [vmem:[%s206 + $0x718] sm:$0xff] %v661
                %v663 = vld [vmem:[%s205 + $0xe40] sm:$0xff]
                %664 = vst [vmem:[%s206 + $0x720] sm:$0xff] %v663
                %v665 = vld [vmem:[%s205 + $0xe48] sm:$0xff]
                %666 = vst [vmem:[%s206 + $0x728] sm:$0xff] %v665
                %v667 = vld [vmem:[%s205 + $0xe60] sm:$0xff]
                %668 = vst [vmem:[%s206 + $0x730] sm:$0xff] %v667
                %v669 = vld [vmem:[%s205 + $0xe68] sm:$0xff]
                %670 = vst [vmem:[%s206 + $0x738] sm:$0xff] %v669
                %v671 = vld [vmem:[%s205 + $0xe80] sm:$0xff]
                %672 = vst [vmem:[%s206 + $0x740] sm:$0xff] %v671
                %v673 = vld [vmem:[%s205 + $0xe88] sm:$0xff]
                %674 = vst [vmem:[%s206 + $0x748] sm:$0xff] %v673
                %v675 = vld [vmem:[%s205 + $0xea0] sm:$0xff]
                %676 = vst [vmem:[%s206 + $0x750] sm:$0xff] %v675
                %v677 = vld [vmem:[%s205 + $0xea8] sm:$0xff]
                %678 = vst [vmem:[%s206 + $0x758] sm:$0xff] %v677
                %v679 = vld [vmem:[%s205 + $0xec0] sm:$0xff]
                %680 = vst [vmem:[%s206 + $0x760] sm:$0xff] %v679
                %v681 = vld [vmem:[%s205 + $0xec8] sm:$0xff]
                %682 = vst [vmem:[%s206 + $0x768] sm:$0xff] %v681
                %v683 = vld [vmem:[%s205 + $0xee0] sm:$0xff]
                %684 = vst [vmem:[%s206 + $0x770] sm:$0xff] %v683
                %v685 = vld [vmem:[%s205 + $0xee8] sm:$0xff]
                %686 = vst [vmem:[%s206 + $0x778] sm:$0xff] %v685
                %v687 = vld [vmem:[%s205 + $0xf00] sm:$0xff]
                %688 = vst [vmem:[%s206 + $0x780] sm:$0xff] %v687
                %v689 = vld [vmem:[%s205 + $0xf08] sm:$0xff]
                %690 = vst [vmem:[%s206 + $0x788] sm:$0xff] %v689
                %v691 = vld [vmem:[%s205 + $0xf20] sm:$0xff]
                %692 = vst [vmem:[%s206 + $0x790] sm:$0xff] %v691
                %v693 = vld [vmem:[%s205 + $0xf28] sm:$0xff]
                %694 = vst [vmem:[%s206 + $0x798] sm:$0xff] %v693
                %v695 = vld [vmem:[%s205 + $0xf40] sm:$0xff]
                %696 = vst [vmem:[%s206 + $0x7a0] sm:$0xff] %v695
                %v697 = vld [vmem:[%s205 + $0xf48] sm:$0xff]
                %698 = vst [vmem:[%s206 + $0x7a8] sm:$0xff] %v697
                %v699 = vld [vmem:[%s205 + $0xf60] sm:$0xff]
                %700 = vst [vmem:[%s206 + $0x7b0] sm:$0xff] %v699
                %v701 = vld [vmem:[%s205 + $0xf68] sm:$0xff]
                %702 = vst [vmem:[%s206 + $0x7b8] sm:$0xff] %v701
                %v703 = vld [vmem:[%s205 + $0xf80] sm:$0xff]
                %704 = vst [vmem:[%s206 + $0x7c0] sm:$0xff] %v703
                %v705 = vld [vmem:[%s205 + $0xf88] sm:$0xff]
                %706 = vst [vmem:[%s206 + $0x7c8] sm:$0xff] %v705
                %v707 = vld [vmem:[%s205 + $0xfa0] sm:$0xff]
                %708 = vst [vmem:[%s206 + $0x7d0] sm:$0xff] %v707
                %v709 = vld [vmem:[%s205 + $0xfa8] sm:$0xff]
                %710 = vst [vmem:[%s206 + $0x7d8] sm:$0xff] %v709
                %v711 = vld [vmem:[%s205 + $0xfc0] sm:$0xff]
                %712 = vst [vmem:[%s206 + $0x7e0] sm:$0xff] %v711
                %v713 = vld [vmem:[%s205 + $0xfc8] sm:$0xff]
                %714 = vst [vmem:[%s206 + $0x7e8] sm:$0xff] %v713
                %v715 = vld [vmem:[%s205 + $0xfe0] sm:$0xff]
                %716 = vst [vmem:[%s206 + $0x7f0] sm:$0xff] %v715
                %v717 = vld [vmem:[%s205 + $0xfe8] sm:$0xff]
                %718 = vst [vmem:[%s206 + $0x7f8] sm:$0xff] %v717
                %v719 = vld [vmem:[%s205 + $0x1000] sm:$0xff]
                %720 = vst [vmem:[%s206 + $0x800] sm:$0xff] %v719
                %v721 = vld [vmem:[%s205 + $0x1008] sm:$0xff]
                %722 = vst [vmem:[%s206 + $0x808] sm:$0xff] %v721
                %v723 = vld [vmem:[%s205 + $0x1020] sm:$0xff]
                %724 = vst [vmem:[%s206 + $0x810] sm:$0xff] %v723
                %v725 = vld [vmem:[%s205 + $0x1028] sm:$0xff]
                %726 = vst [vmem:[%s206 + $0x818] sm:$0xff] %v725
                %v727 = vld [vmem:[%s205 + $0x1040] sm:$0xff]
                %728 = vst [vmem:[%s206 + $0x820] sm:$0xff] %v727
                %v729 = vld [vmem:[%s205 + $0x1048] sm:$0xff]
                %730 = vst [vmem:[%s206 + $0x828] sm:$0xff] %v729
                %v731 = vld [vmem:[%s205 + $0x1060] sm:$0xff]
                %732 = vst [vmem:[%s206 + $0x830] sm:$0xff] %v731
                %v733 = vld [vmem:[%s205 + $0x1068] sm:$0xff]
                %734 = vst [vmem:[%s206 + $0x838] sm:$0xff] %v733
                %v735 = vld [vmem:[%s205 + $0x1080] sm:$0xff]
                %736 = vst [vmem:[%s206 + $0x840] sm:$0xff] %v735
                %v737 = vld [vmem:[%s205 + $0x1088] sm:$0xff]
                %738 = vst [vmem:[%s206 + $0x848] sm:$0xff] %v737
                %v739 = vld [vmem:[%s205 + $0x10a0] sm:$0xff]
                %740 = vst [vmem:[%s206 + $0x850] sm:$0xff] %v739
                %v741 = vld [vmem:[%s205 + $0x10a8] sm:$0xff]
                %742 = vst [vmem:[%s206 + $0x858] sm:$0xff] %v741
                %v743 = vld [vmem:[%s205 + $0x10c0] sm:$0xff]
                %744 = vst [vmem:[%s206 + $0x860] sm:$0xff] %v743
                %v745 = vld [vmem:[%s205 + $0x10c8] sm:$0xff]
                %746 = vst [vmem:[%s206 + $0x868] sm:$0xff] %v745
                %v747 = vld [vmem:[%s205 + $0x10e0] sm:$0xff]
                %748 = vst [vmem:[%s206 + $0x870] sm:$0xff] %v747
                %v749 = vld [vmem:[%s205 + $0x10e8] sm:$0xff]
                %750 = vst [vmem:[%s206 + $0x878] sm:$0xff] %v749
                %v751 = vld [vmem:[%s205 + $0x1100] sm:$0xff]
                %752 = vst [vmem:[%s206 + $0x880] sm:$0xff] %v751
                %v753 = vld [vmem:[%s205 + $0x1108] sm:$0xff]
                %754 = vst [vmem:[%s206 + $0x888] sm:$0xff] %v753
                %v755 = vld [vmem:[%s205 + $0x1120] sm:$0xff]
                %756 = vst [vmem:[%s206 + $0x890] sm:$0xff] %v755
                %v757 = vld [vmem:[%s205 + $0x1128] sm:$0xff]
                %758 = vst [vmem:[%s206 + $0x898] sm:$0xff] %v757
                %v759 = vld [vmem:[%s205 + $0x1140] sm:$0xff]
                %760 = vst [vmem:[%s206 + $0x8a0] sm:$0xff] %v759
                %v761 = vld [vmem:[%s205 + $0x1148] sm:$0xff]
                %762 = vst [vmem:[%s206 + $0x8a8] sm:$0xff] %v761
                %v763 = vld [vmem:[%s205 + $0x1160] sm:$0xff]
                %764 = vst [vmem:[%s206 + $0x8b0] sm:$0xff] %v763
                %v765 = vld [vmem:[%s205 + $0x1168] sm:$0xff]
                %766 = vst [vmem:[%s206 + $0x8b8] sm:$0xff] %v765
                %v767 = vld [vmem:[%s205 + $0x1180] sm:$0xff]
                %768 = vst [vmem:[%s206 + $0x8c0] sm:$0xff] %v767
                %v769 = vld [vmem:[%s205 + $0x1188] sm:$0xff]
                %770 = vst [vmem:[%s206 + $0x8c8] sm:$0xff] %v769
                %v771 = vld [vmem:[%s205 + $0x11a0] sm:$0xff]
                %772 = vst [vmem:[%s206 + $0x8d0] sm:$0xff] %v771
                %v773 = vld [vmem:[%s205 + $0x11a8] sm:$0xff]
                %774 = vst [vmem:[%s206 + $0x8d8] sm:$0xff] %v773
                %v775 = vld [vmem:[%s205 + $0x11c0] sm:$0xff]
                %776 = vst [vmem:[%s206 + $0x8e0] sm:$0xff] %v775
                %v777 = vld [vmem:[%s205 + $0x11c8] sm:$0xff]
                %778 = vst [vmem:[%s206 + $0x8e8] sm:$0xff] %v777
                %v779 = vld [vmem:[%s205 + $0x11e0] sm:$0xff]
                %780 = vst [vmem:[%s206 + $0x8f0] sm:$0xff] %v779
                %v781 = vld [vmem:[%s205 + $0x11e8] sm:$0xff]
                %782 = vst [vmem:[%s206 + $0x8f8] sm:$0xff] %v781
                %v783 = vld [vmem:[%s205 + $0x1200] sm:$0xff]
                %784 = vst [vmem:[%s206 + $0x900] sm:$0xff] %v783
                %v785 = vld [vmem:[%s205 + $0x1208] sm:$0xff]
                %786 = vst [vmem:[%s206 + $0x908] sm:$0xff] %v785
                %v787 = vld [vmem:[%s205 + $0x1220] sm:$0xff]
                %788 = vst [vmem:[%s206 + $0x910] sm:$0xff] %v787
                %v789 = vld [vmem:[%s205 + $0x1228] sm:$0xff]
                %790 = vst [vmem:[%s206 + $0x918] sm:$0xff] %v789
                %v791 = vld [vmem:[%s205 + $0x1240] sm:$0xff]
                %792 = vst [vmem:[%s206 + $0x920] sm:$0xff] %v791
                %v793 = vld [vmem:[%s205 + $0x1248] sm:$0xff]
                %794 = vst [vmem:[%s206 + $0x928] sm:$0xff] %v793
                %v795 = vld [vmem:[%s205 + $0x1260] sm:$0xff]
                %796 = vst [vmem:[%s206 + $0x930] sm:$0xff] %v795
                %v797 = vld [vmem:[%s205 + $0x1268] sm:$0xff]
                %798 = vst [vmem:[%s206 + $0x938] sm:$0xff] %v797
                %v799 = vld [vmem:[%s205 + $0x1280] sm:$0xff]
                %800 = vst [vmem:[%s206 + $0x940] sm:$0xff] %v799
                %v801 = vld [vmem:[%s205 + $0x1288] sm:$0xff]
                %802 = vst [vmem:[%s206 + $0x948] sm:$0xff] %v801
                %v803 = vld [vmem:[%s205 + $0x12a0] sm:$0xff]
                %804 = vst [vmem:[%s206 + $0x950] sm:$0xff] %v803
                %v805 = vld [vmem:[%s205 + $0x12a8] sm:$0xff]
                %806 = vst [vmem:[%s206 + $0x958] sm:$0xff] %v805
                %v807 = vld [vmem:[%s205 + $0x12c0] sm:$0xff]
                %808 = vst [vmem:[%s206 + $0x960] sm:$0xff] %v807
                %v809 = vld [vmem:[%s205 + $0x12c8] sm:$0xff]
                %810 = vst [vmem:[%s206 + $0x968] sm:$0xff] %v809
                %v811 = vld [vmem:[%s205 + $0x12e0] sm:$0xff]
                %812 = vst [vmem:[%s206 + $0x970] sm:$0xff] %v811
                %v813 = vld [vmem:[%s205 + $0x12e8] sm:$0xff]
                %814 = vst [vmem:[%s206 + $0x978] sm:$0xff] %v813
                %v815 = vld [vmem:[%s205 + $0x1300] sm:$0xff]
                %816 = vst [vmem:[%s206 + $0x980] sm:$0xff] %v815
                %v817 = vld [vmem:[%s205 + $0x1308] sm:$0xff]
                %818 = vst [vmem:[%s206 + $0x988] sm:$0xff] %v817
                %v819 = vld [vmem:[%s205 + $0x1320] sm:$0xff]
                %820 = vst [vmem:[%s206 + $0x990] sm:$0xff] %v819
                %v821 = vld [vmem:[%s205 + $0x1328] sm:$0xff]
                %822 = vst [vmem:[%s206 + $0x998] sm:$0xff] %v821
                %v823 = vld [vmem:[%s205 + $0x1340] sm:$0xff]
                %824 = vst [vmem:[%s206 + $0x9a0] sm:$0xff] %v823
                %v825 = vld [vmem:[%s205 + $0x1348] sm:$0xff]
                %826 = vst [vmem:[%s206 + $0x9a8] sm:$0xff] %v825
                %v827 = vld [vmem:[%s205 + $0x1360] sm:$0xff]
                %828 = vst [vmem:[%s206 + $0x9b0] sm:$0xff] %v827
                %v829 = vld [vmem:[%s205 + $0x1368] sm:$0xff]
                %830 = vst [vmem:[%s206 + $0x9b8] sm:$0xff] %v829
                %v831 = vld [vmem:[%s205 + $0x1380] sm:$0xff]
                %832 = vst [vmem:[%s206 + $0x9c0] sm:$0xff] %v831
                %v833 = vld [vmem:[%s205 + $0x1388] sm:$0xff]
                %834 = vst [vmem:[%s206 + $0x9c8] sm:$0xff] %v833
                %v835 = vld [vmem:[%s205 + $0x13a0] sm:$0xff]
                %836 = vst [vmem:[%s206 + $0x9d0] sm:$0xff] %v835
                %v837 = vld [vmem:[%s205 + $0x13a8] sm:$0xff]
                %838 = vst [vmem:[%s206 + $0x9d8] sm:$0xff] %v837
                %v839 = vld [vmem:[%s205 + $0x13c0] sm:$0xff]
                %840 = vst [vmem:[%s206 + $0x9e0] sm:$0xff] %v839
                %v841 = vld [vmem:[%s205 + $0x13c8] sm:$0xff]
                %842 = vst [vmem:[%s206 + $0x9e8] sm:$0xff] %v841
                %v843 = vld [vmem:[%s205 + $0x13e0] sm:$0xff]
                %844 = vst [vmem:[%s206 + $0x9f0] sm:$0xff] %v843
                %v845 = vld [vmem:[%s205 + $0x13e8] sm:$0xff]
                %846 = vst [vmem:[%s206 + $0x9f8] sm:$0xff] %v845
                %v847 = vld [vmem:[%s205 + $0x1400] sm:$0xff]
                %848 = vst [vmem:[%s206 + $0xa00] sm:$0xff] %v847
                %v849 = vld [vmem:[%s205 + $0x1408] sm:$0xff]
                %850 = vst [vmem:[%s206 + $0xa08] sm:$0xff] %v849
                %v851 = vld [vmem:[%s205 + $0x1420] sm:$0xff]
                %852 = vst [vmem:[%s206 + $0xa10] sm:$0xff] %v851
                %v853 = vld [vmem:[%s205 + $0x1428] sm:$0xff]
                %854 = vst [vmem:[%s206 + $0xa18] sm:$0xff] %v853
                %v855 = vld [vmem:[%s205 + $0x1440] sm:$0xff]
                %856 = vst [vmem:[%s206 + $0xa20] sm:$0xff] %v855
                %v857 = vld [vmem:[%s205 + $0x1448] sm:$0xff]
                %858 = vst [vmem:[%s206 + $0xa28] sm:$0xff] %v857
                %v859 = vld [vmem:[%s205 + $0x1460] sm:$0xff]
                %860 = vst [vmem:[%s206 + $0xa30] sm:$0xff] %v859
                %v861 = vld [vmem:[%s205 + $0x1468] sm:$0xff]
                %862 = vst [vmem:[%s206 + $0xa38] sm:$0xff] %v861
                %v863 = vld [vmem:[%s205 + $0x1480] sm:$0xff]
                %864 = vst [vmem:[%s206 + $0xa40] sm:$0xff] %v863
                %v865 = vld [vmem:[%s205 + $0x1488] sm:$0xff]
                %866 = vst [vmem:[%s206 + $0xa48] sm:$0xff] %v865
                %v867 = vld [vmem:[%s205 + $0x14a0] sm:$0xff]
                %868 = vst [vmem:[%s206 + $0xa50] sm:$0xff] %v867
                %v869 = vld [vmem:[%s205 + $0x14a8] sm:$0xff]
                %870 = vst [vmem:[%s206 + $0xa58] sm:$0xff] %v869
                %v871 = vld [vmem:[%s205 + $0x14c0] sm:$0xff]
                %872 = vst [vmem:[%s206 + $0xa60] sm:$0xff] %v871
                %v873 = vld [vmem:[%s205 + $0x14c8] sm:$0xff]
                %874 = vst [vmem:[%s206 + $0xa68] sm:$0xff] %v873
                %v875 = vld [vmem:[%s205 + $0x14e0] sm:$0xff]
                %876 = vst [vmem:[%s206 + $0xa70] sm:$0xff] %v875
                %v877 = vld [vmem:[%s205 + $0x14e8] sm:$0xff]
                %878 = vst [vmem:[%s206 + $0xa78] sm:$0xff] %v877
                %v879 = vld [vmem:[%s205 + $0x1500] sm:$0xff]
                %880 = vst [vmem:[%s206 + $0xa80] sm:$0xff] %v879
                %v881 = vld [vmem:[%s205 + $0x1508] sm:$0xff]
                %882 = vst [vmem:[%s206 + $0xa88] sm:$0xff] %v881
                %v883 = vld [vmem:[%s205 + $0x1520] sm:$0xff]
                %884 = vst [vmem:[%s206 + $0xa90] sm:$0xff] %v883
                %v885 = vld [vmem:[%s205 + $0x1528] sm:$0xff]
                %886 = vst [vmem:[%s206 + $0xa98] sm:$0xff] %v885
                %v887 = vld [vmem:[%s205 + $0x1540] sm:$0xff]
                %888 = vst [vmem:[%s206 + $0xaa0] sm:$0xff] %v887
                %v889 = vld [vmem:[%s205 + $0x1548] sm:$0xff]
                %890 = vst [vmem:[%s206 + $0xaa8] sm:$0xff] %v889
                %v891 = vld [vmem:[%s205 + $0x1560] sm:$0xff]
                %892 = vst [vmem:[%s206 + $0xab0] sm:$0xff] %v891
                %v893 = vld [vmem:[%s205 + $0x1568] sm:$0xff]
                %894 = vst [vmem:[%s206 + $0xab8] sm:$0xff] %v893
                %v895 = vld [vmem:[%s205 + $0x1580] sm:$0xff]
                %896 = vst [vmem:[%s206 + $0xac0] sm:$0xff] %v895
                %v897 = vld [vmem:[%s205 + $0x1588] sm:$0xff]
                %898 = vst [vmem:[%s206 + $0xac8] sm:$0xff] %v897
                %v899 = vld [vmem:[%s205 + $0x15a0] sm:$0xff]
                %900 = vst [vmem:[%s206 + $0xad0] sm:$0xff] %v899
                %v901 = vld [vmem:[%s205 + $0x15a8] sm:$0xff]
                %902 = vst [vmem:[%s206 + $0xad8] sm:$0xff] %v901
                %v903 = vld [vmem:[%s205 + $0x15c0] sm:$0xff]
                %904 = vst [vmem:[%s206 + $0xae0] sm:$0xff] %v903
                %v905 = vld [vmem:[%s205 + $0x15c8] sm:$0xff]
                %906 = vst [vmem:[%s206 + $0xae8] sm:$0xff] %v905
                %v907 = vld [vmem:[%s205 + $0x15e0] sm:$0xff]
                %908 = vst [vmem:[%s206 + $0xaf0] sm:$0xff] %v907
                %v909 = vld [vmem:[%s205 + $0x15e8] sm:$0xff]
                %910 = vst [vmem:[%s206 + $0xaf8] sm:$0xff] %v909
                %v911 = vld [vmem:[%s205 + $0x1600] sm:$0xff]
                %912 = vst [vmem:[%s206 + $0xb00] sm:$0xff] %v911
                %v913 = vld [vmem:[%s205 + $0x1608] sm:$0xff]
                %914 = vst [vmem:[%s206 + $0xb08] sm:$0xff] %v913
                %v915 = vld [vmem:[%s205 + $0x1620] sm:$0xff]
                %916 = vst [vmem:[%s206 + $0xb10] sm:$0xff] %v915
                %v917 = vld [vmem:[%s205 + $0x1628] sm:$0xff]
                %918 = vst [vmem:[%s206 + $0xb18] sm:$0xff] %v917
                %v919 = vld [vmem:[%s205 + $0x1640] sm:$0xff]
                %920 = vst [vmem:[%s206 + $0xb20] sm:$0xff] %v919
                %v921 = vld [vmem:[%s205 + $0x1648] sm:$0xff]
                %922 = vst [vmem:[%s206 + $0xb28] sm:$0xff] %v921
                %v923 = vld [vmem:[%s205 + $0x1660] sm:$0xff]
                %924 = vst [vmem:[%s206 + $0xb30] sm:$0xff] %v923
                %v925 = vld [vmem:[%s205 + $0x1668] sm:$0xff]
                %926 = vst [vmem:[%s206 + $0xb38] sm:$0xff] %v925
                %v927 = vld [vmem:[%s205 + $0x1680] sm:$0xff]
                %928 = vst [vmem:[%s206 + $0xb40] sm:$0xff] %v927
                %v929 = vld [vmem:[%s205 + $0x1688] sm:$0xff]
                %930 = vst [vmem:[%s206 + $0xb48] sm:$0xff] %v929
                %v931 = vld [vmem:[%s205 + $0x16a0] sm:$0xff]
                %932 = vst [vmem:[%s206 + $0xb50] sm:$0xff] %v931
                %v933 = vld [vmem:[%s205 + $0x16a8] sm:$0xff]
                %934 = vst [vmem:[%s206 + $0xb58] sm:$0xff] %v933
                %v935 = vld [vmem:[%s205 + $0x16c0] sm:$0xff]
                %936 = vst [vmem:[%s206 + $0xb60] sm:$0xff] %v935
                %v937 = vld [vmem:[%s205 + $0x16c8] sm:$0xff]
                %938 = vst [vmem:[%s206 + $0xb68] sm:$0xff] %v937
                %v939 = vld [vmem:[%s205 + $0x16e0] sm:$0xff]
                %940 = vst [vmem:[%s206 + $0xb70] sm:$0xff] %v939
                %v941 = vld [vmem:[%s205 + $0x16e8] sm:$0xff]
                %942 = vst [vmem:[%s206 + $0xb78] sm:$0xff] %v941
                %v943 = vld [vmem:[%s205 + $0x1700] sm:$0xff]
                %944 = vst [vmem:[%s206 + $0xb80] sm:$0xff] %v943
                %v945 = vld [vmem:[%s205 + $0x1708] sm:$0xff]
                %946 = vst [vmem:[%s206 + $0xb88] sm:$0xff] %v945
                %v947 = vld [vmem:[%s205 + $0x1720] sm:$0xff]
                %948 = vst [vmem:[%s206 + $0xb90] sm:$0xff] %v947
                %v949 = vld [vmem:[%s205 + $0x1728] sm:$0xff]
                %950 = vst [vmem:[%s206 + $0xb98] sm:$0xff] %v949
                %v951 = vld [vmem:[%s205 + $0x1740] sm:$0xff]
                %952 = vst [vmem:[%s206 + $0xba0] sm:$0xff] %v951
                %v953 = vld [vmem:[%s205 + $0x1748] sm:$0xff]
                %954 = vst [vmem:[%s206 + $0xba8] sm:$0xff] %v953
                %v955 = vld [vmem:[%s205 + $0x1760] sm:$0xff]
                %956 = vst [vmem:[%s206 + $0xbb0] sm:$0xff] %v955
                %v957 = vld [vmem:[%s205 + $0x1768] sm:$0xff]
                %958 = vst [vmem:[%s206 + $0xbb8] sm:$0xff] %v957
                %v959 = vld [vmem:[%s205 + $0x1780] sm:$0xff]
                %960 = vst [vmem:[%s206 + $0xbc0] sm:$0xff] %v959
                %v961 = vld [vmem:[%s205 + $0x1788] sm:$0xff]
                %962 = vst [vmem:[%s206 + $0xbc8] sm:$0xff] %v961
                %v963 = vld [vmem:[%s205 + $0x17a0] sm:$0xff]
                %964 = vst [vmem:[%s206 + $0xbd0] sm:$0xff] %v963
                %v965 = vld [vmem:[%s205 + $0x17a8] sm:$0xff]
                %966 = vst [vmem:[%s206 + $0xbd8] sm:$0xff] %v965
                %v967 = vld [vmem:[%s205 + $0x17c0] sm:$0xff]
                %968 = vst [vmem:[%s206 + $0xbe0] sm:$0xff] %v967
                %v969 = vld [vmem:[%s205 + $0x17c8] sm:$0xff]
                %970 = vst [vmem:[%s206 + $0xbe8] sm:$0xff] %v969
                %v971 = vld [vmem:[%s205 + $0x17e0] sm:$0xff]
                %972 = vst [vmem:[%s206 + $0xbf0] sm:$0xff] %v971
                %v973 = vld [vmem:[%s205 + $0x17e8] sm:$0xff]
                %974 = vst [vmem:[%s206 + $0xbf8] sm:$0xff] %v973
                %v975 = vld [vmem:[%s205 + $0x1800] sm:$0xff]
                %976 = vst [vmem:[%s206 + $0xc00] sm:$0xff] %v975
                %v977 = vld [vmem:[%s205 + $0x1808] sm:$0xff]
                %978 = vst [vmem:[%s206 + $0xc08] sm:$0xff] %v977
                %v979 = vld [vmem:[%s205 + $0x1820] sm:$0xff]
                %980 = vst [vmem:[%s206 + $0xc10] sm:$0xff] %v979
                %v981 = vld [vmem:[%s205 + $0x1828] sm:$0xff]
                %982 = vst [vmem:[%s206 + $0xc18] sm:$0xff] %v981
                %v983 = vld [vmem:[%s205 + $0x1840] sm:$0xff]
                %984 = vst [vmem:[%s206 + $0xc20] sm:$0xff] %v983
                %v985 = vld [vmem:[%s205 + $0x1848] sm:$0xff]
                %986 = vst [vmem:[%s206 + $0xc28] sm:$0xff] %v985
                %v987 = vld [vmem:[%s205 + $0x1860] sm:$0xff]
                %988 = vst [vmem:[%s206 + $0xc30] sm:$0xff] %v987
                %v989 = vld [vmem:[%s205 + $0x1868] sm:$0xff]
                %990 = vst [vmem:[%s206 + $0xc38] sm:$0xff] %v989
                %v991 = vld [vmem:[%s205 + $0x1880] sm:$0xff]
                %992 = vst [vmem:[%s206 + $0xc40] sm:$0xff] %v991
                %v993 = vld [vmem:[%s205 + $0x1888] sm:$0xff]
                %994 = vst [vmem:[%s206 + $0xc48] sm:$0xff] %v993
                %v995 = vld [vmem:[%s205 + $0x18a0] sm:$0xff]
                %996 = vst [vmem:[%s206 + $0xc50] sm:$0xff] %v995
                %v997 = vld [vmem:[%s205 + $0x18a8] sm:$0xff]
                %998 = vst [vmem:[%s206 + $0xc58] sm:$0xff] %v997
                %v999 = vld [vmem:[%s205 + $0x18c0] sm:$0xff]
                %1000 = vst [vmem:[%s206 + $0xc60] sm:$0xff] %v999
                %v1001 = vld [vmem:[%s205 + $0x18c8] sm:$0xff]
                %1002 = vst [vmem:[%s206 + $0xc68] sm:$0xff] %v1001
                %v1003 = vld [vmem:[%s205 + $0x18e0] sm:$0xff]
                %1004 = vst [vmem:[%s206 + $0xc70] sm:$0xff] %v1003
                %v1005 = vld [vmem:[%s205 + $0x18e8] sm:$0xff]
                %1006 = vst [vmem:[%s206 + $0xc78] sm:$0xff] %v1005
                %v1007 = vld [vmem:[%s205 + $0x1900] sm:$0xff]
                %1008 = vst [vmem:[%s206 + $0xc80] sm:$0xff] %v1007
                %v1009 = vld [vmem:[%s205 + $0x1908] sm:$0xff]
                %1010 = vst [vmem:[%s206 + $0xc88] sm:$0xff] %v1009
                %v1011 = vld [vmem:[%s205 + $0x1920] sm:$0xff]
                %1012 = vst [vmem:[%s206 + $0xc90] sm:$0xff] %v1011
                %v1013 = vld [vmem:[%s205 + $0x1928] sm:$0xff]
                %1014 = vst [vmem:[%s206 + $0xc98] sm:$0xff] %v1013
                %v1015 = vld [vmem:[%s205 + $0x1940] sm:$0xff]
                %1016 = vst [vmem:[%s206 + $0xca0] sm:$0xff] %v1015
                %v1017 = vld [vmem:[%s205 + $0x1948] sm:$0xff]
                %1018 = vst [vmem:[%s206 + $0xca8] sm:$0xff] %v1017
                %v1019 = vld [vmem:[%s205 + $0x1960] sm:$0xff]
                %1020 = vst [vmem:[%s206 + $0xcb0] sm:$0xff] %v1019
                %v1021 = vld [vmem:[%s205 + $0x1968] sm:$0xff]
                %1022 = vst [vmem:[%s206 + $0xcb8] sm:$0xff] %v1021
                %v1023 = vld [vmem:[%s205 + $0x1980] sm:$0xff]
                %1024 = vst [vmem:[%s206 + $0xcc0] sm:$0xff] %v1023
                %v1025 = vld [vmem:[%s205 + $0x1988] sm:$0xff]
                %1026 = vst [vmem:[%s206 + $0xcc8] sm:$0xff] %v1025
                %v1027 = vld [vmem:[%s205 + $0x19a0] sm:$0xff]
                %1028 = vst [vmem:[%s206 + $0xcd0] sm:$0xff] %v1027
                %v1029 = vld [vmem:[%s205 + $0x19a8] sm:$0xff]
                %1030 = vst [vmem:[%s206 + $0xcd8] sm:$0xff] %v1029
                %v1031 = vld [vmem:[%s205 + $0x19c0] sm:$0xff]
                %1032 = vst [vmem:[%s206 + $0xce0] sm:$0xff] %v1031
                %v1033 = vld [vmem:[%s205 + $0x19c8] sm:$0xff]
                %1034 = vst [vmem:[%s206 + $0xce8] sm:$0xff] %v1033
                %v1035 = vld [vmem:[%s205 + $0x19e0] sm:$0xff]
                %1036 = vst [vmem:[%s206 + $0xcf0] sm:$0xff] %v1035
                %v1037 = vld [vmem:[%s205 + $0x19e8] sm:$0xff]
                %1038 = vst [vmem:[%s206 + $0xcf8] sm:$0xff] %v1037
                %v1039 = vld [vmem:[%s205 + $0x1a00] sm:$0xff]
                %1040 = vst [vmem:[%s206 + $0xd00] sm:$0xff] %v1039
                %v1041 = vld [vmem:[%s205 + $0x1a08] sm:$0xff]
                %1042 = vst [vmem:[%s206 + $0xd08] sm:$0xff] %v1041
                %v1043 = vld [vmem:[%s205 + $0x1a20] sm:$0xff]
                %1044 = vst [vmem:[%s206 + $0xd10] sm:$0xff] %v1043
                %v1045 = vld [vmem:[%s205 + $0x1a28] sm:$0xff]
                %1046 = vst [vmem:[%s206 + $0xd18] sm:$0xff] %v1045
                %v1047 = vld [vmem:[%s205 + $0x1a40] sm:$0xff]
                %1048 = vst [vmem:[%s206 + $0xd20] sm:$0xff] %v1047
                %v1049 = vld [vmem:[%s205 + $0x1a48] sm:$0xff]
                %1050 = vst [vmem:[%s206 + $0xd28] sm:$0xff] %v1049
                %v1051 = vld [vmem:[%s205 + $0x1a60] sm:$0xff]
                %1052 = vst [vmem:[%s206 + $0xd30] sm:$0xff] %v1051
                %v1053 = vld [vmem:[%s205 + $0x1a68] sm:$0xff]
                %1054 = vst [vmem:[%s206 + $0xd38] sm:$0xff] %v1053
                %v1055 = vld [vmem:[%s205 + $0x1a80] sm:$0xff]
                %1056 = vst [vmem:[%s206 + $0xd40] sm:$0xff] %v1055
                %v1057 = vld [vmem:[%s205 + $0x1a88] sm:$0xff]
                %1058 = vst [vmem:[%s206 + $0xd48] sm:$0xff] %v1057
                %v1059 = vld [vmem:[%s205 + $0x1aa0] sm:$0xff]
                %1060 = vst [vmem:[%s206 + $0xd50] sm:$0xff] %v1059
                %v1061 = vld [vmem:[%s205 + $0x1aa8] sm:$0xff]
                %1062 = vst [vmem:[%s206 + $0xd58] sm:$0xff] %v1061
                %v1063 = vld [vmem:[%s205 + $0x1ac0] sm:$0xff]
                %1064 = vst [vmem:[%s206 + $0xd60] sm:$0xff] %v1063
                %v1065 = vld [vmem:[%s205 + $0x1ac8] sm:$0xff]
                %1066 = vst [vmem:[%s206 + $0xd68] sm:$0xff] %v1065
                %v1067 = vld [vmem:[%s205 + $0x1ae0] sm:$0xff]
                %1068 = vst [vmem:[%s206 + $0xd70] sm:$0xff] %v1067
                %v1069 = vld [vmem:[%s205 + $0x1ae8] sm:$0xff]
                %1070 = vst [vmem:[%s206 + $0xd78] sm:$0xff] %v1069
                %v1071 = vld [vmem:[%s205 + $0x1b00] sm:$0xff]
                %1072 = vst [vmem:[%s206 + $0xd80] sm:$0xff] %v1071
                %v1073 = vld [vmem:[%s205 + $0x1b08] sm:$0xff]
                %1074 = vst [vmem:[%s206 + $0xd88] sm:$0xff] %v1073
                %v1075 = vld [vmem:[%s205 + $0x1b20] sm:$0xff]
                %1076 = vst [vmem:[%s206 + $0xd90] sm:$0xff] %v1075
                %v1077 = vld [vmem:[%s205 + $0x1b28] sm:$0xff]
                %1078 = vst [vmem:[%s206 + $0xd98] sm:$0xff] %v1077
                %v1079 = vld [vmem:[%s205 + $0x1b40] sm:$0xff]
                %1080 = vst [vmem:[%s206 + $0xda0] sm:$0xff] %v1079
                %v1081 = vld [vmem:[%s205 + $0x1b48] sm:$0xff]
                %1082 = vst [vmem:[%s206 + $0xda8] sm:$0xff] %v1081
                %v1083 = vld [vmem:[%s205 + $0x1b60] sm:$0xff]
                %1084 = vst [vmem:[%s206 + $0xdb0] sm:$0xff] %v1083
                %v1085 = vld [vmem:[%s205 + $0x1b68] sm:$0xff]
                %1086 = vst [vmem:[%s206 + $0xdb8] sm:$0xff] %v1085
                %v1087 = vld [vmem:[%s205 + $0x1b80] sm:$0xff]
                %1088 = vst [vmem:[%s206 + $0xdc0] sm:$0xff] %v1087
                %v1089 = vld [vmem:[%s205 + $0x1b88] sm:$0xff]
                %1090 = vst [vmem:[%s206 + $0xdc8] sm:$0xff] %v1089
                %v1091 = vld [vmem:[%s205 + $0x1ba0] sm:$0xff]
                %1092 = vst [vmem:[%s206 + $0xdd0] sm:$0xff] %v1091
                %v1093 = vld [vmem:[%s205 + $0x1ba8] sm:$0xff]
                %1094 = vst [vmem:[%s206 + $0xdd8] sm:$0xff] %v1093
                %v1095 = vld [vmem:[%s205 + $0x1bc0] sm:$0xff]
                %1096 = vst [vmem:[%s206 + $0xde0] sm:$0xff] %v1095
                %v1097 = vld [vmem:[%s205 + $0x1bc8] sm:$0xff]
                %1098 = vst [vmem:[%s206 + $0xde8] sm:$0xff] %v1097
                %v1099 = vld [vmem:[%s205 + $0x1be0] sm:$0xff]
                %1100 = vst [vmem:[%s206 + $0xdf0] sm:$0xff] %v1099
                %v1101 = vld [vmem:[%s205 + $0x1be8] sm:$0xff]
                %1102 = vst [vmem:[%s206 + $0xdf8] sm:$0xff] %v1101
                %v1103 = vld [vmem:[%s205 + $0x1c00] sm:$0xff]
                %1104 = vst [vmem:[%s206 + $0xe00] sm:$0xff] %v1103
                %v1105 = vld [vmem:[%s205 + $0x1c08] sm:$0xff]
                %1106 = vst [vmem:[%s206 + $0xe08] sm:$0xff] %v1105
                %v1107 = vld [vmem:[%s205 + $0x1c20] sm:$0xff]
                %1108 = vst [vmem:[%s206 + $0xe10] sm:$0xff] %v1107
                %v1109 = vld [vmem:[%s205 + $0x1c28] sm:$0xff]
                %1110 = vst [vmem:[%s206 + $0xe18] sm:$0xff] %v1109
                %v1111 = vld [vmem:[%s205 + $0x1c40] sm:$0xff]
                %1112 = vst [vmem:[%s206 + $0xe20] sm:$0xff] %v1111
                %v1113 = vld [vmem:[%s205 + $0x1c48] sm:$0xff]
                %1114 = vst [vmem:[%s206 + $0xe28] sm:$0xff] %v1113
                %v1115 = vld [vmem:[%s205 + $0x1c60] sm:$0xff]
                %1116 = vst [vmem:[%s206 + $0xe30] sm:$0xff] %v1115
                %v1117 = vld [vmem:[%s205 + $0x1c68] sm:$0xff]
                %1118 = vst [vmem:[%s206 + $0xe38] sm:$0xff] %v1117
                %v1119 = vld [vmem:[%s205 + $0x1c80] sm:$0xff]
                %1120 = vst [vmem:[%s206 + $0xe40] sm:$0xff] %v1119
                %v1121 = vld [vmem:[%s205 + $0x1c88] sm:$0xff]
                %1122 = vst [vmem:[%s206 + $0xe48] sm:$0xff] %v1121
                %v1123 = vld [vmem:[%s205 + $0x1ca0] sm:$0xff]
                %1124 = vst [vmem:[%s206 + $0xe50] sm:$0xff] %v1123
                %v1125 = vld [vmem:[%s205 + $0x1ca8] sm:$0xff]
                %1126 = vst [vmem:[%s206 + $0xe58] sm:$0xff] %v1125
                %v1127 = vld [vmem:[%s205 + $0x1cc0] sm:$0xff]
                %1128 = vst [vmem:[%s206 + $0xe60] sm:$0xff] %v1127
                %v1129 = vld [vmem:[%s205 + $0x1cc8] sm:$0xff]
                %1130 = vst [vmem:[%s206 + $0xe68] sm:$0xff] %v1129
                %v1131 = vld [vmem:[%s205 + $0x1ce0] sm:$0xff]
                %1132 = vst [vmem:[%s206 + $0xe70] sm:$0xff] %v1131
                %v1133 = vld [vmem:[%s205 + $0x1ce8] sm:$0xff]
                %1134 = vst [vmem:[%s206 + $0xe78] sm:$0xff] %v1133
                %v1135 = vld [vmem:[%s205 + $0x1d00] sm:$0xff]
                %1136 = vst [vmem:[%s206 + $0xe80] sm:$0xff] %v1135
                %v1137 = vld [vmem:[%s205 + $0x1d08] sm:$0xff]
                %1138 = vst [vmem:[%s206 + $0xe88] sm:$0xff] %v1137
                %v1139 = vld [vmem:[%s205 + $0x1d20] sm:$0xff]
                %1140 = vst [vmem:[%s206 + $0xe90] sm:$0xff] %v1139
                %v1141 = vld [vmem:[%s205 + $0x1d28] sm:$0xff]
                %1142 = vst [vmem:[%s206 + $0xe98] sm:$0xff] %v1141
                %v1143 = vld [vmem:[%s205 + $0x1d40] sm:$0xff]
                %1144 = vst [vmem:[%s206 + $0xea0] sm:$0xff] %v1143
                %v1145 = vld [vmem:[%s205 + $0x1d48] sm:$0xff]
                %1146 = vst [vmem:[%s206 + $0xea8] sm:$0xff] %v1145
                %v1147 = vld [vmem:[%s205 + $0x1d60] sm:$0xff]
                %1148 = vst [vmem:[%s206 + $0xeb0] sm:$0xff] %v1147
                %v1149 = vld [vmem:[%s205 + $0x1d68] sm:$0xff]
                %1150 = vst [vmem:[%s206 + $0xeb8] sm:$0xff] %v1149
                %v1151 = vld [vmem:[%s205 + $0x1d80] sm:$0xff]
                %1152 = vst [vmem:[%s206 + $0xec0] sm:$0xff] %v1151
                %v1153 = vld [vmem:[%s205 + $0x1d88] sm:$0xff]
                %1154 = vst [vmem:[%s206 + $0xec8] sm:$0xff] %v1153
                %v1155 = vld [vmem:[%s205 + $0x1da0] sm:$0xff]
                %1156 = vst [vmem:[%s206 + $0xed0] sm:$0xff] %v1155
                %v1157 = vld [vmem:[%s205 + $0x1da8] sm:$0xff]
                %1158 = vst [vmem:[%s206 + $0xed8] sm:$0xff] %v1157
                %v1159 = vld [vmem:[%s205 + $0x1dc0] sm:$0xff]
                %1160 = vst [vmem:[%s206 + $0xee0] sm:$0xff] %v1159
                %v1161 = vld [vmem:[%s205 + $0x1dc8] sm:$0xff]
                %1162 = vst [vmem:[%s206 + $0xee8] sm:$0xff] %v1161
                %v1163 = vld [vmem:[%s205 + $0x1de0] sm:$0xff]
                %1164 = vst [vmem:[%s206 + $0xef0] sm:$0xff] %v1163
                %v1165 = vld [vmem:[%s205 + $0x1de8] sm:$0xff]
                %1166 = vst [vmem:[%s206 + $0xef8] sm:$0xff] %v1165
                %v1167 = vld [vmem:[%s205 + $0x1e00] sm:$0xff]
                %1168 = vst [vmem:[%s206 + $0xf00] sm:$0xff] %v1167
                %v1169 = vld [vmem:[%s205 + $0x1e08] sm:$0xff]
                %1170 = vst [vmem:[%s206 + $0xf08] sm:$0xff] %v1169
                %v1171 = vld [vmem:[%s205 + $0x1e20] sm:$0xff]
                %1172 = vst [vmem:[%s206 + $0xf10] sm:$0xff] %v1171
                %v1173 = vld [vmem:[%s205 + $0x1e28] sm:$0xff]
                %1174 = vst [vmem:[%s206 + $0xf18] sm:$0xff] %v1173
                %v1175 = vld [vmem:[%s205 + $0x1e40] sm:$0xff]
                %1176 = vst [vmem:[%s206 + $0xf20] sm:$0xff] %v1175
                %v1177 = vld [vmem:[%s205 + $0x1e48] sm:$0xff]
                %1178 = vst [vmem:[%s206 + $0xf28] sm:$0xff] %v1177
                %v1179 = vld [vmem:[%s205 + $0x1e60] sm:$0xff]
                %1180 = vst [vmem:[%s206 + $0xf30] sm:$0xff] %v1179
                %v1181 = vld [vmem:[%s205 + $0x1e68] sm:$0xff]
                %1182 = vst [vmem:[%s206 + $0xf38] sm:$0xff] %v1181
                %v1183 = vld [vmem:[%s205 + $0x1e80] sm:$0xff]
                %1184 = vst [vmem:[%s206 + $0xf40] sm:$0xff] %v1183
                %v1185 = vld [vmem:[%s205 + $0x1e88] sm:$0xff]
                %1186 = vst [vmem:[%s206 + $0xf48] sm:$0xff] %v1185
                %v1187 = vld [vmem:[%s205 + $0x1ea0] sm:$0xff]
                %1188 = vst [vmem:[%s206 + $0xf50] sm:$0xff] %v1187
                %v1189 = vld [vmem:[%s205 + $0x1ea8] sm:$0xff]
                %1190 = vst [vmem:[%s206 + $0xf58] sm:$0xff] %v1189
                %v1191 = vld [vmem:[%s205 + $0x1ec0] sm:$0xff]
                %1192 = vst [vmem:[%s206 + $0xf60] sm:$0xff] %v1191
                %v1193 = vld [vmem:[%s205 + $0x1ec8] sm:$0xff]
                %1194 = vst [vmem:[%s206 + $0xf68] sm:$0xff] %v1193
                %v1195 = vld [vmem:[%s205 + $0x1ee0] sm:$0xff]
                %1196 = vst [vmem:[%s206 + $0xf70] sm:$0xff] %v1195
                %v1197 = vld [vmem:[%s205 + $0x1ee8] sm:$0xff]
                %1198 = vst [vmem:[%s206 + $0xf78] sm:$0xff] %v1197
                %v1199 = vld [vmem:[%s205 + $0x1f00] sm:$0xff]
                %1200 = vst [vmem:[%s206 + $0xf80] sm:$0xff] %v1199
                %v1201 = vld [vmem:[%s205 + $0x1f08] sm:$0xff]
                %1202 = vst [vmem:[%s206 + $0xf88] sm:$0xff] %v1201
                %v1203 = vld [vmem:[%s205 + $0x1f20] sm:$0xff]
                %1204 = vst [vmem:[%s206 + $0xf90] sm:$0xff] %v1203
                %v1205 = vld [vmem:[%s205 + $0x1f28] sm:$0xff]
                %1206 = vst [vmem:[%s206 + $0xf98] sm:$0xff] %v1205
                %v1207 = vld [vmem:[%s205 + $0x1f40] sm:$0xff]
                %1208 = vst [vmem:[%s206 + $0xfa0] sm:$0xff] %v1207
                %v1209 = vld [vmem:[%s205 + $0x1f48] sm:$0xff]
                %1210 = vst [vmem:[%s206 + $0xfa8] sm:$0xff] %v1209
                %v1211 = vld [vmem:[%s205 + $0x1f60] sm:$0xff]
                %1212 = vst [vmem:[%s206 + $0xfb0] sm:$0xff] %v1211
                %v1213 = vld [vmem:[%s205 + $0x1f68] sm:$0xff]
                %1214 = vst [vmem:[%s206 + $0xfb8] sm:$0xff] %v1213
                %v1215 = vld [vmem:[%s205 + $0x1f80] sm:$0xff]
                %1216 = vst [vmem:[%s206 + $0xfc0] sm:$0xff] %v1215
                %v1217 = vld [vmem:[%s205 + $0x1f88] sm:$0xff]
                %1218 = vst [vmem:[%s206 + $0xfc8] sm:$0xff] %v1217
                %v1219 = vld [vmem:[%s205 + $0x1fa0] sm:$0xff]
                %1220 = vst [vmem:[%s206 + $0xfd0] sm:$0xff] %v1219
                %v1221 = vld [vmem:[%s205 + $0x1fa8] sm:$0xff]
                %1222 = vst [vmem:[%s206 + $0xfd8] sm:$0xff] %v1221
                %v1223 = vld [vmem:[%s205 + $0x1fc0] sm:$0xff]
                %1224 = vst [vmem:[%s206 + $0xfe0] sm:$0xff] %v1223
                %v1225 = vld [vmem:[%s205 + $0x1fc8] sm:$0xff]
                %1226 = vst [vmem:[%s206 + $0xfe8] sm:$0xff] %v1225
                %v1227 = vld [vmem:[%s205 + $0x1fe0] sm:$0xff]
                %1228 = vst [vmem:[%s206 + $0xff0] sm:$0xff] %v1227
                %v1229 = vld [vmem:[%s205 + $0x1fe8] sm:$0xff]
                %1230 = vst [vmem:[%s206 + $0xff8] sm:$0xff] %v1229
              $region37: #{view_selector_forward.1} parent=31 // loop_footer
                %s204 = sadd.s32 1, %s200
              $region38: #{view_selector_forward.1} parent=31 // loop_footer_branch
                %199 = sbr.rel target = $region34
              $region39: #{view_selector_forward.1} parent=31 // loop_exit
                _
            $region32: #{view_selector_forward.1} parent=27 // pred_fallthru
              _
            // Predicated region
            $region40: #{view_selector_forward.1} parent=27 // pred_check
              _
            $region41: #{view_selector_forward.1} parent=27 // pred_check_branch
              %1232 = sbr.rel target = $region43
            $region42: #{view_selector_forward.1} parent=27 // pred_region
              _
            $region43: #{view_selector_forward.1} parent=27 // pred_fallthru
              _
          $region28: #{view_selector_forward.1} parent=23 // pred_fallthru
            _
          %1233 = vnop
        $region24: #{view_selector_forward.1} parent=19 // pred_fallthru
          _
        // Predicated region
        $region44: #{view_selector_forward.1} parent=19 // pred_check
          %p1234 = pneg %p96
        $region45: #{view_selector_forward.1} parent=19 // pred_check_branch
          %1236 = sbr.rel (%p1234) target = $region47
        $region46: #{view_selector_forward.1} parent=19 // pred_region
          %s1237 = smul.u32 4, %s17
          %p1238 = scmp.lt.s32.totalorder %s1237, 7
          %s1239 = scalar_select %p1238, %s1237, 7
          %s1240 = scalar_lea.vmem %s2, %s1239
          %s1241 = smul.u32 4, %s17
        $region47: #{view_selector_forward.1} parent=19 // pred_fallthru
          _
        // Predicated region
        $region48: #{view_selector_forward.1} parent=19 // pred_check
          %p1242 = pneg %p122
        $region49: #{view_selector_forward.1} parent=19 // pred_check_branch
          %1244 = sbr.rel (%p1242) target = $region51
        $region50: #{view_selector_forward.1} parent=19 // pred_region
          %s1245 = smul.u32 64, %s17
          %p1246 = scmp.lt.s32.totalorder %s1245, 127
          %s1247 = scalar_select %p1246, %s1245, 127
          %s1248 = smul.addr %s1247, 4
          %s1249 = scalar_lea.vmem %s3, %s1248
          %s1250 = smul.u32 64, %s17
        $region51: #{view_selector_forward.1} parent=19 // pred_fallthru
          _
      $region20: #{view_selector_forward.1} parent=5 // pred_fallthru
        _
      %p1251 = scmp.le.s32.totalorder 1, %s10
      %p1252 = scmp.lt.s32.totalorder %s10, 3
      %p1253 = pnand %p1251, %p1252
      %p1254 = pneg %p1253
      // Predicated region
      $region52: #{view_selector_forward.1} parent=5 // pred_check
        _
      $region53: #{view_selector_forward.1} parent=5 // pred_check_branch
        %1256 = sbr.rel (%p1253) target = $region55
      $region54: #{view_selector_forward.1} parent=5 // pred_region
        %s1257 = ssub.s32 %s10, 1
        %s1258 = sand.u32 %s63, 1
        %s1259 = sand.u32 %s63, 1
        %s1260 = smul.addr %s1259, 4096
        %s1261 = scalar_lea.vmem [#allocation3], %s1260
        // Predicated region
        $region56: #{view_selector_forward.1} parent=54 // pred_check
          %p1262 = pneg %p76
        $region57: #{view_selector_forward.1} parent=54 // pred_check_branch
          %1264 = sbr.rel (%p1262) target = $region59
        $region58: #{view_selector_forward.1} parent=54 // pred_region
          _
        $region59: #{view_selector_forward.1} parent=54 // pred_fallthru
          _
        %s1265 = smul.u32 16, %s20
        %p1266 = scmp.lt.s32.totalorder %s1265, 15
        %s1267 = scalar_select %p1266, %s1265, 15
        %s1268 = smul.addr %s1267, 4
        %s1269 = scalar_lea.vmem %s0, %s1268
        %p1270 = pneg %p48
        %p1271 = pneg %p45
        %s1272 = sand.u32 %s63, 1
        %s1273 = sand.u32 %s63, 1
        %s1274 = smul.addr %s1273, 4096
        %s1275 = scalar_lea.vmem [#allocation3], %s1274
        %p1276 = pneg %p76
        %p1277 = pneg %p73
        %s1278 = smul.u32 4, %s19
        %p1279 = scmp.lt.s32.totalorder %s1278, 7
        %s1280 = scalar_select %p1279, %s1278, 7
        %s1281 = scalar_lea.vmem %s2, %s1280
        %p1282 = pneg %p102
        %p1283 = pneg %p99
        %s1284 = smul.u32 64, %s19
        %p1285 = scmp.lt.s32.totalorder %s1284, 127
        %s1286 = scalar_select %p1285, %s1284, 127
        %s1287 = smul.addr %s1286, 4
        %s1288 = scalar_lea.vmem %s3, %s1287
        %p1289 = pneg %p128
        %p1290 = pneg %p125
        %p1291 = pneg %p154
        %p1292 = pneg %p151
        %p1293 = scmp.lt.s32.totalorder %s19, 1
        %s1294 = scalar_select %p1293, %s19, 1
        %s1295 = smul.addr %s1294, 8
        %s1296 = scalar_lea.vmem %s4, %s1295
        %s1297 = smul.u32 16, %s20
        %p1298 = scmp.lt.s32.totalorder %s1297, 15
        %s1299 = scalar_select %p1298, %s1297, 15
        %s1300 = smul.addr %s1299, 4
        %s1301 = scalar_lea.vmem %s0, %s1300
        %s1302 = smul.u32 16, %s20
        %s1303 = smul.u32 256, %s20
        %s1304 = smul.u32 4, %s19
        %s1305 = smul.u32 4, %s19
        %p1306 = scmp.lt.s32.totalorder %s1305, 7
        %s1307 = scalar_select %p1306, %s1305, 7
        %s1308 = scalar_lea.vmem %s2, %s1307
        %s1309 = smul.u32 4, %s19
        %s1310 = smul.u32 64, %s19
        %p1311 = scmp.lt.s32.totalorder %s1310, 127
        %s1312 = scalar_select %p1311, %s1310, 127
        %s1313 = smul.addr %s1312, 4
        %s1314 = scalar_lea.vmem %s3, %s1313
        %s1315 = smul.u32 64, %s19
        %p1316 = scmp.lt.s32.totalorder %s19, 1
        %s1317 = scalar_select %p1316, %s19, 1
        %s1318 = smul.addr %s1317, 8
        %s1319 = scalar_lea.vmem %s4, %s1318
        %p1321 = scmp.eq.s32.totalorder %s20, 0
        // Predicated region
        $region60: #{view_selector_forward.1} parent=54 // pred_check
          %p1322 = pneg %p1321
        $region61: #{view_selector_forward.1} parent=54 // pred_check_branch
          %1324 = sbr.rel (%p1322) target = $region63
        $region62: #{view_selector_forward.1} parent=54 // pred_region
          %1325 = vst [vmem:[#allocation2] sm:$0xff] 0.0
          %1326 = vst [vmem:[#allocation2 + $0x8] sm:$0xff] 0.0
          %1327 = vst [vmem:[#allocation2 + $0x10] sm:$0xff] 0.0
          %1328 = vst [vmem:[#allocation2 + $0x18] sm:$0xff] 0.0
        $region63: #{view_selector_forward.1} parent=54 // pred_fallthru
          _
        %v1329 = vld [vmem:[#allocation2] sm:$0xff]
        %v1330 = vld [vmem:[#allocation2 + $0x8] sm:$0xff]
        %v1331 = vld [vmem:[#allocation2 + $0x10] sm:$0xff]
        %v1332 = vld [vmem:[#allocation2 + $0x18] sm:$0xff]
        %v1333 = vld [vmem:[%s1301] sm:$0xff]
        %v1334 = vld [vmem:[%s1301 + $0x8] sm:$0xff]
        %v1335 = vld [vmem:[%s1301 + $0x10] sm:$0xff]
        %v1336 = vld [vmem:[%s1301 + $0x18] sm:$0xff]
        %v1337 = vld [vmem:[%s1301 + $0x20] sm:$0xff]
        %v1338 = vld [vmem:[%s1301 + $0x28] sm:$0xff]
        %v1339 = vld [vmem:[%s1301 + $0x30] sm:$0xff]
        %v1340 = vld [vmem:[%s1301 + $0x38] sm:$0xff]
        %v1341 = vld [vmem:[%s1261] sm:$0xff]
        %v1342 = vld [vmem:[%s1261 + $0x8] sm:$0xff]
        %v1343 = vld [vmem:[%s1261 + $0x10] sm:$0xff]
        %v1344 = vld [vmem:[%s1261 + $0x18] sm:$0xff]
        %v1345 = vld [vmem:[%s1261 + $0x20] sm:$0xff]
        %v1346 = vld [vmem:[%s1261 + $0x28] sm:$0xff]
        %v1347 = vld [vmem:[%s1261 + $0x30] sm:$0xff]
        %v1348 = vld [vmem:[%s1261 + $0x38] sm:$0xff]
        %v1349 = vld [vmem:[%s1261 + $0x40] sm:$0xff]
        %v1350 = vld [vmem:[%s1261 + $0x48] sm:$0xff]
        %v1351 = vld [vmem:[%s1261 + $0x50] sm:$0xff]
        %v1352 = vld [vmem:[%s1261 + $0x58] sm:$0xff]
        %v1353 = vld [vmem:[%s1261 + $0x60] sm:$0xff]
        %v1354 = vld [vmem:[%s1261 + $0x68] sm:$0xff]
        %v1355 = vld [vmem:[%s1261 + $0x70] sm:$0xff]
        %v1356 = vld [vmem:[%s1261 + $0x78] sm:$0xff]
        %v1357 = vld [vmem:[%s1261 + $0x80] sm:$0xff]
        %v1358 = vld [vmem:[%s1261 + $0x88] sm:$0xff]
        %v1359 = vld [vmem:[%s1261 + $0x90] sm:$0xff]
        %v1360 = vld [vmem:[%s1261 + $0x98] sm:$0xff]
        %v1361 = vld [vmem:[%s1261 + $0xa0] sm:$0xff]
        %v1362 = vld [vmem:[%s1261 + $0xa8] sm:$0xff]
        %v1363 = vld [vmem:[%s1261 + $0xb0] sm:$0xff]
        %v1364 = vld [vmem:[%s1261 + $0xb8] sm:$0xff]
        %v1365 = vld [vmem:[%s1261 + $0xc0] sm:$0xff]
        %v1366 = vld [vmem:[%s1261 + $0xc8] sm:$0xff]
        %v1367 = vld [vmem:[%s1261 + $0xd0] sm:$0xff]
        %v1368 = vld [vmem:[%s1261 + $0xd8] sm:$0xff]
        %v1369 = vld [vmem:[%s1261 + $0xe0] sm:$0xff]
        %v1370 = vld [vmem:[%s1261 + $0xe8] sm:$0xff]
        %v1371 = vld [vmem:[%s1261 + $0xf0] sm:$0xff]
        %v1372 = vld [vmem:[%s1261 + $0xf8] sm:$0xff]
        %v1373 = vld [vmem:[%s1261 + $0x100] sm:$0xff]
        %v1374 = vld [vmem:[%s1261 + $0x108] sm:$0xff]
        %v1375 = vld [vmem:[%s1261 + $0x110] sm:$0xff]
        %v1376 = vld [vmem:[%s1261 + $0x118] sm:$0xff]
        %v1377 = vld [vmem:[%s1261 + $0x120] sm:$0xff]
        %v1378 = vld [vmem:[%s1261 + $0x128] sm:$0xff]
        %v1379 = vld [vmem:[%s1261 + $0x130] sm:$0xff]
        %v1380 = vld [vmem:[%s1261 + $0x138] sm:$0xff]
        %v1381 = vld [vmem:[%s1261 + $0x140] sm:$0xff]
        %v1382 = vld [vmem:[%s1261 + $0x148] sm:$0xff]
        %v1383 = vld [vmem:[%s1261 + $0x150] sm:$0xff]
        %v1384 = vld [vmem:[%s1261 + $0x158] sm:$0xff]
        %v1385 = vld [vmem:[%s1261 + $0x160] sm:$0xff]
        %v1386 = vld [vmem:[%s1261 + $0x168] sm:$0xff]
        %v1387 = vld [vmem:[%s1261 + $0x170] sm:$0xff]
        %v1388 = vld [vmem:[%s1261 + $0x178] sm:$0xff]
        %v1389 = vld [vmem:[%s1261 + $0x180] sm:$0xff]
        %v1390 = vld [vmem:[%s1261 + $0x188] sm:$0xff]
        %v1391 = vld [vmem:[%s1261 + $0x190] sm:$0xff]
        %v1392 = vld [vmem:[%s1261 + $0x198] sm:$0xff]
        %v1393 = vld [vmem:[%s1261 + $0x1a0] sm:$0xff]
        %v1394 = vld [vmem:[%s1261 + $0x1a8] sm:$0xff]
        %v1395 = vld [vmem:[%s1261 + $0x1b0] sm:$0xff]
        %v1396 = vld [vmem:[%s1261 + $0x1b8] sm:$0xff]
        %v1397 = vld [vmem:[%s1261 + $0x1c0] sm:$0xff]
        %v1398 = vld [vmem:[%s1261 + $0x1c8] sm:$0xff]
        %v1399 = vld [vmem:[%s1261 + $0x1d0] sm:$0xff]
        %v1400 = vld [vmem:[%s1261 + $0x1d8] sm:$0xff]
        %v1401 = vld [vmem:[%s1261 + $0x1e0] sm:$0xff]
        %v1402 = vld [vmem:[%s1261 + $0x1e8] sm:$0xff]
        %v1403 = vld [vmem:[%s1261 + $0x1f0] sm:$0xff]
        %v1404 = vld [vmem:[%s1261 + $0x1f8] sm:$0xff]
        %v1405 = vld [vmem:[%s1261 + $0x200] sm:$0xff]
        %v1406 = vld [vmem:[%s1261 + $0x208] sm:$0xff]
        %v1407 = vld [vmem:[%s1261 + $0x210] sm:$0xff]
        %v1408 = vld [vmem:[%s1261 + $0x218] sm:$0xff]
        %v1409 = vld [vmem:[%s1261 + $0x220] sm:$0xff]
        %v1410 = vld [vmem:[%s1261 + $0x228] sm:$0xff]
        %v1411 = vld [vmem:[%s1261 + $0x230] sm:$0xff]
        %v1412 = vld [vmem:[%s1261 + $0x238] sm:$0xff]
        %v1413 = vld [vmem:[%s1261 + $0x240] sm:$0xff]
        %v1414 = vld [vmem:[%s1261 + $0x248] sm:$0xff]
        %v1415 = vld [vmem:[%s1261 + $0x250] sm:$0xff]
        %v1416 = vld [vmem:[%s1261 + $0x258] sm:$0xff]
        %v1417 = vld [vmem:[%s1261 + $0x260] sm:$0xff]
        %v1418 = vld [vmem:[%s1261 + $0x268] sm:$0xff]
        %v1419 = vld [vmem:[%s1261 + $0x270] sm:$0xff]
        %v1420 = vld [vmem:[%s1261 + $0x278] sm:$0xff]
        %v1421 = vld [vmem:[%s1261 + $0x280] sm:$0xff]
        %v1422 = vld [vmem:[%s1261 + $0x288] sm:$0xff]
        %v1423 = vld [vmem:[%s1261 + $0x290] sm:$0xff]
        %v1424 = vld [vmem:[%s1261 + $0x298] sm:$0xff]
        %v1425 = vld [vmem:[%s1261 + $0x2a0] sm:$0xff]
        %v1426 = vld [vmem:[%s1261 + $0x2a8] sm:$0xff]
        %v1427 = vld [vmem:[%s1261 + $0x2b0] sm:$0xff]
        %v1428 = vld [vmem:[%s1261 + $0x2b8] sm:$0xff]
        %v1429 = vld [vmem:[%s1261 + $0x2c0] sm:$0xff]
        %v1430 = vld [vmem:[%s1261 + $0x2c8] sm:$0xff]
        %v1431 = vld [vmem:[%s1261 + $0x2d0] sm:$0xff]
        %v1432 = vld [vmem:[%s1261 + $0x2d8] sm:$0xff]
        %v1433 = vld [vmem:[%s1261 + $0x2e0] sm:$0xff]
        %v1434 = vld [vmem:[%s1261 + $0x2e8] sm:$0xff]
        %v1435 = vld [vmem:[%s1261 + $0x2f0] sm:$0xff]
        %v1436 = vld [vmem:[%s1261 + $0x2f8] sm:$0xff]
        %v1437 = vld [vmem:[%s1261 + $0x300] sm:$0xff]
        %v1438 = vld [vmem:[%s1261 + $0x308] sm:$0xff]
        %v1439 = vld [vmem:[%s1261 + $0x310] sm:$0xff]
        %v1440 = vld [vmem:[%s1261 + $0x318] sm:$0xff]
        %v1441 = vld [vmem:[%s1261 + $0x320] sm:$0xff]
        %v1442 = vld [vmem:[%s1261 + $0x328] sm:$0xff]
        %v1443 = vld [vmem:[%s1261 + $0x330] sm:$0xff]
        %v1444 = vld [vmem:[%s1261 + $0x338] sm:$0xff]
        %v1445 = vld [vmem:[%s1261 + $0x340] sm:$0xff]
        %v1446 = vld [vmem:[%s1261 + $0x348] sm:$0xff]
        %v1447 = vld [vmem:[%s1261 + $0x350] sm:$0xff]
        %v1448 = vld [vmem:[%s1261 + $0x358] sm:$0xff]
        %v1449 = vld [vmem:[%s1261 + $0x360] sm:$0xff]
        %v1450 = vld [vmem:[%s1261 + $0x368] sm:$0xff]
        %v1451 = vld [vmem:[%s1261 + $0x370] sm:$0xff]
        %v1452 = vld [vmem:[%s1261 + $0x378] sm:$0xff]
        %v1453 = vld [vmem:[%s1261 + $0x380] sm:$0xff]
        %v1454 = vld [vmem:[%s1261 + $0x388] sm:$0xff]
        %v1455 = vld [vmem:[%s1261 + $0x390] sm:$0xff]
        %v1456 = vld [vmem:[%s1261 + $0x398] sm:$0xff]
        %v1457 = vld [vmem:[%s1261 + $0x3a0] sm:$0xff]
        %v1458 = vld [vmem:[%s1261 + $0x3a8] sm:$0xff]
        %v1459 = vld [vmem:[%s1261 + $0x3b0] sm:$0xff]
        %v1460 = vld [vmem:[%s1261 + $0x3b8] sm:$0xff]
        %v1461 = vld [vmem:[%s1261 + $0x3c0] sm:$0xff]
        %v1462 = vld [vmem:[%s1261 + $0x3c8] sm:$0xff]
        %v1463 = vld [vmem:[%s1261 + $0x3d0] sm:$0xff]
        %v1464 = vld [vmem:[%s1261 + $0x3d8] sm:$0xff]
        %v1465 = vld [vmem:[%s1261 + $0x3e0] sm:$0xff]
        %v1466 = vld [vmem:[%s1261 + $0x3e8] sm:$0xff]
        %v1467 = vld [vmem:[%s1261 + $0x3f0] sm:$0xff]
        %v1468 = vld [vmem:[%s1261 + $0x3f8] sm:$0xff]
        %v1469 = vld [vmem:[%s1261 + $0x400] sm:$0xff]
        %v1470 = vld [vmem:[%s1261 + $0x408] sm:$0xff]
        %v1471 = vld [vmem:[%s1261 + $0x410] sm:$0xff]
        %v1472 = vld [vmem:[%s1261 + $0x418] sm:$0xff]
        %v1473 = vld [vmem:[%s1261 + $0x420] sm:$0xff]
        %v1474 = vld [vmem:[%s1261 + $0x428] sm:$0xff]
        %v1475 = vld [vmem:[%s1261 + $0x430] sm:$0xff]
        %v1476 = vld [vmem:[%s1261 + $0x438] sm:$0xff]
        %v1477 = vld [vmem:[%s1261 + $0x440] sm:$0xff]
        %v1478 = vld [vmem:[%s1261 + $0x448] sm:$0xff]
        %v1479 = vld [vmem:[%s1261 + $0x450] sm:$0xff]
        %v1480 = vld [vmem:[%s1261 + $0x458] sm:$0xff]
        %v1481 = vld [vmem:[%s1261 + $0x460] sm:$0xff]
        %v1482 = vld [vmem:[%s1261 + $0x468] sm:$0xff]
        %v1483 = vld [vmem:[%s1261 + $0x470] sm:$0xff]
        %v1484 = vld [vmem:[%s1261 + $0x478] sm:$0xff]
        %v1485 = vld [vmem:[%s1261 + $0x480] sm:$0xff]
        %v1486 = vld [vmem:[%s1261 + $0x488] sm:$0xff]
        %v1487 = vld [vmem:[%s1261 + $0x490] sm:$0xff]
        %v1488 = vld [vmem:[%s1261 + $0x498] sm:$0xff]
        %v1489 = vld [vmem:[%s1261 + $0x4a0] sm:$0xff]
        %v1490 = vld [vmem:[%s1261 + $0x4a8] sm:$0xff]
        %v1491 = vld [vmem:[%s1261 + $0x4b0] sm:$0xff]
        %v1492 = vld [vmem:[%s1261 + $0x4b8] sm:$0xff]
        %v1493 = vld [vmem:[%s1261 + $0x4c0] sm:$0xff]
        %v1494 = vld [vmem:[%s1261 + $0x4c8] sm:$0xff]
        %v1495 = vld [vmem:[%s1261 + $0x4d0] sm:$0xff]
        %v1496 = vld [vmem:[%s1261 + $0x4d8] sm:$0xff]
        %v1497 = vld [vmem:[%s1261 + $0x4e0] sm:$0xff]
        %v1498 = vld [vmem:[%s1261 + $0x4e8] sm:$0xff]
        %v1499 = vld [vmem:[%s1261 + $0x4f0] sm:$0xff]
        %v1500 = vld [vmem:[%s1261 + $0x4f8] sm:$0xff]
        %v1501 = vld [vmem:[%s1261 + $0x500] sm:$0xff]
        %v1502 = vld [vmem:[%s1261 + $0x508] sm:$0xff]
        %v1503 = vld [vmem:[%s1261 + $0x510] sm:$0xff]
        %v1504 = vld [vmem:[%s1261 + $0x518] sm:$0xff]
        %v1505 = vld [vmem:[%s1261 + $0x520] sm:$0xff]
        %v1506 = vld [vmem:[%s1261 + $0x528] sm:$0xff]
        %v1507 = vld [vmem:[%s1261 + $0x530] sm:$0xff]
        %v1508 = vld [vmem:[%s1261 + $0x538] sm:$0xff]
        %v1509 = vld [vmem:[%s1261 + $0x540] sm:$0xff]
        %v1510 = vld [vmem:[%s1261 + $0x548] sm:$0xff]
        %v1511 = vld [vmem:[%s1261 + $0x550] sm:$0xff]
        %v1512 = vld [vmem:[%s1261 + $0x558] sm:$0xff]
        %v1513 = vld [vmem:[%s1261 + $0x560] sm:$0xff]
        %v1514 = vld [vmem:[%s1261 + $0x568] sm:$0xff]
        %v1515 = vld [vmem:[%s1261 + $0x570] sm:$0xff]
        %v1516 = vld [vmem:[%s1261 + $0x578] sm:$0xff]
        %v1517 = vld [vmem:[%s1261 + $0x580] sm:$0xff]
        %v1518 = vld [vmem:[%s1261 + $0x588] sm:$0xff]
        %v1519 = vld [vmem:[%s1261 + $0x590] sm:$0xff]
        %v1520 = vld [vmem:[%s1261 + $0x598] sm:$0xff]
        %v1521 = vld [vmem:[%s1261 + $0x5a0] sm:$0xff]
        %v1522 = vld [vmem:[%s1261 + $0x5a8] sm:$0xff]
        %v1523 = vld [vmem:[%s1261 + $0x5b0] sm:$0xff]
        %v1524 = vld [vmem:[%s1261 + $0x5b8] sm:$0xff]
        %v1525 = vld [vmem:[%s1261 + $0x5c0] sm:$0xff]
        %v1526 = vld [vmem:[%s1261 + $0x5c8] sm:$0xff]
        %v1527 = vld [vmem:[%s1261 + $0x5d0] sm:$0xff]
        %v1528 = vld [vmem:[%s1261 + $0x5d8] sm:$0xff]
        %v1529 = vld [vmem:[%s1261 + $0x5e0] sm:$0xff]
        %v1530 = vld [vmem:[%s1261 + $0x5e8] sm:$0xff]
        %v1531 = vld [vmem:[%s1261 + $0x5f0] sm:$0xff]
        %v1532 = vld [vmem:[%s1261 + $0x5f8] sm:$0xff]
        %v1533 = vld [vmem:[%s1261 + $0x600] sm:$0xff]
        %v1534 = vld [vmem:[%s1261 + $0x608] sm:$0xff]
        %v1535 = vld [vmem:[%s1261 + $0x610] sm:$0xff]
        %v1536 = vld [vmem:[%s1261 + $0x618] sm:$0xff]
        %v1537 = vld [vmem:[%s1261 + $0x620] sm:$0xff]
        %v1538 = vld [vmem:[%s1261 + $0x628] sm:$0xff]
        %v1539 = vld [vmem:[%s1261 + $0x630] sm:$0xff]
        %v1540 = vld [vmem:[%s1261 + $0x638] sm:$0xff]
        %v1541 = vld [vmem:[%s1261 + $0x640] sm:$0xff]
        %v1542 = vld [vmem:[%s1261 + $0x648] sm:$0xff]
        %v1543 = vld [vmem:[%s1261 + $0x650] sm:$0xff]
        %v1544 = vld [vmem:[%s1261 + $0x658] sm:$0xff]
        %v1545 = vld [vmem:[%s1261 + $0x660] sm:$0xff]
        %v1546 = vld [vmem:[%s1261 + $0x668] sm:$0xff]
        %v1547 = vld [vmem:[%s1261 + $0x670] sm:$0xff]
        %v1548 = vld [vmem:[%s1261 + $0x678] sm:$0xff]
        %v1549 = vld [vmem:[%s1261 + $0x680] sm:$0xff]
        %v1550 = vld [vmem:[%s1261 + $0x688] sm:$0xff]
        %v1551 = vld [vmem:[%s1261 + $0x690] sm:$0xff]
        %v1552 = vld [vmem:[%s1261 + $0x698] sm:$0xff]
        %v1553 = vld [vmem:[%s1261 + $0x6a0] sm:$0xff]
        %v1554 = vld [vmem:[%s1261 + $0x6a8] sm:$0xff]
        %v1555 = vld [vmem:[%s1261 + $0x6b0] sm:$0xff]
        %v1556 = vld [vmem:[%s1261 + $0x6b8] sm:$0xff]
        %v1557 = vld [vmem:[%s1261 + $0x6c0] sm:$0xff]
        %v1558 = vld [vmem:[%s1261 + $0x6c8] sm:$0xff]
        %v1559 = vld [vmem:[%s1261 + $0x6d0] sm:$0xff]
        %v1560 = vld [vmem:[%s1261 + $0x6d8] sm:$0xff]
        %v1561 = vld [vmem:[%s1261 + $0x6e0] sm:$0xff]
        %v1562 = vld [vmem:[%s1261 + $0x6e8] sm:$0xff]
        %v1563 = vld [vmem:[%s1261 + $0x6f0] sm:$0xff]
        %v1564 = vld [vmem:[%s1261 + $0x6f8] sm:$0xff]
        %v1565 = vld [vmem:[%s1261 + $0x700] sm:$0xff]
        %v1566 = vld [vmem:[%s1261 + $0x708] sm:$0xff]
        %v1567 = vld [vmem:[%s1261 + $0x710] sm:$0xff]
        %v1568 = vld [vmem:[%s1261 + $0x718] sm:$0xff]
        %v1569 = vld [vmem:[%s1261 + $0x720] sm:$0xff]
        %v1570 = vld [vmem:[%s1261 + $0x728] sm:$0xff]
        %v1571 = vld [vmem:[%s1261 + $0x730] sm:$0xff]
        %v1572 = vld [vmem:[%s1261 + $0x738] sm:$0xff]
        %v1573 = vld [vmem:[%s1261 + $0x740] sm:$0xff]
        %v1574 = vld [vmem:[%s1261 + $0x748] sm:$0xff]
        %v1575 = vld [vmem:[%s1261 + $0x750] sm:$0xff]
        %v1576 = vld [vmem:[%s1261 + $0x758] sm:$0xff]
        %v1577 = vld [vmem:[%s1261 + $0x760] sm:$0xff]
        %v1578 = vld [vmem:[%s1261 + $0x768] sm:$0xff]
        %v1579 = vld [vmem:[%s1261 + $0x770] sm:$0xff]
        %v1580 = vld [vmem:[%s1261 + $0x778] sm:$0xff]
        %v1581 = vld [vmem:[%s1261 + $0x780] sm:$0xff]
        %v1582 = vld [vmem:[%s1261 + $0x788] sm:$0xff]
        %v1583 = vld [vmem:[%s1261 + $0x790] sm:$0xff]
        %v1584 = vld [vmem:[%s1261 + $0x798] sm:$0xff]
        %v1585 = vld [vmem:[%s1261 + $0x7a0] sm:$0xff]
        %v1586 = vld [vmem:[%s1261 + $0x7a8] sm:$0xff]
        %v1587 = vld [vmem:[%s1261 + $0x7b0] sm:$0xff]
        %v1588 = vld [vmem:[%s1261 + $0x7b8] sm:$0xff]
        %v1589 = vld [vmem:[%s1261 + $0x7c0] sm:$0xff]
        %v1590 = vld [vmem:[%s1261 + $0x7c8] sm:$0xff]
        %v1591 = vld [vmem:[%s1261 + $0x7d0] sm:$0xff]
        %v1592 = vld [vmem:[%s1261 + $0x7d8] sm:$0xff]
        %v1593 = vld [vmem:[%s1261 + $0x7e0] sm:$0xff]
        %v1594 = vld [vmem:[%s1261 + $0x7e8] sm:$0xff]
        %v1595 = vld [vmem:[%s1261 + $0x7f0] sm:$0xff]
        %v1596 = vld [vmem:[%s1261 + $0x7f8] sm:$0xff]
        %v1597 = vld [vmem:[%s1261 + $0x800] sm:$0xff]
        %v1598 = vld [vmem:[%s1261 + $0x808] sm:$0xff]
        %v1599 = vld [vmem:[%s1261 + $0x810] sm:$0xff]
        %v1600 = vld [vmem:[%s1261 + $0x818] sm:$0xff]
        %v1601 = vld [vmem:[%s1261 + $0x820] sm:$0xff]
        %v1602 = vld [vmem:[%s1261 + $0x828] sm:$0xff]
        %v1603 = vld [vmem:[%s1261 + $0x830] sm:$0xff]
        %v1604 = vld [vmem:[%s1261 + $0x838] sm:$0xff]
        %v1605 = vld [vmem:[%s1261 + $0x840] sm:$0xff]
        %v1606 = vld [vmem:[%s1261 + $0x848] sm:$0xff]
        %v1607 = vld [vmem:[%s1261 + $0x850] sm:$0xff]
        %v1608 = vld [vmem:[%s1261 + $0x858] sm:$0xff]
        %v1609 = vld [vmem:[%s1261 + $0x860] sm:$0xff]
        %v1610 = vld [vmem:[%s1261 + $0x868] sm:$0xff]
        %v1611 = vld [vmem:[%s1261 + $0x870] sm:$0xff]
        %v1612 = vld [vmem:[%s1261 + $0x878] sm:$0xff]
        %v1613 = vld [vmem:[%s1261 + $0x880] sm:$0xff]
        %v1614 = vld [vmem:[%s1261 + $0x888] sm:$0xff]
        %v1615 = vld [vmem:[%s1261 + $0x890] sm:$0xff]
        %v1616 = vld [vmem:[%s1261 + $0x898] sm:$0xff]
        %v1617 = vld [vmem:[%s1261 + $0x8a0] sm:$0xff]
        %v1618 = vld [vmem:[%s1261 + $0x8a8] sm:$0xff]
        %v1619 = vld [vmem:[%s1261 + $0x8b0] sm:$0xff]
        %v1620 = vld [vmem:[%s1261 + $0x8b8] sm:$0xff]
        %v1621 = vld [vmem:[%s1261 + $0x8c0] sm:$0xff]
        %v1622 = vld [vmem:[%s1261 + $0x8c8] sm:$0xff]
        %v1623 = vld [vmem:[%s1261 + $0x8d0] sm:$0xff]
        %v1624 = vld [vmem:[%s1261 + $0x8d8] sm:$0xff]
        %v1625 = vld [vmem:[%s1261 + $0x8e0] sm:$0xff]
        %v1626 = vld [vmem:[%s1261 + $0x8e8] sm:$0xff]
        %v1627 = vld [vmem:[%s1261 + $0x8f0] sm:$0xff]
        %v1628 = vld [vmem:[%s1261 + $0x8f8] sm:$0xff]
        %v1629 = vld [vmem:[%s1261 + $0x900] sm:$0xff]
        %v1630 = vld [vmem:[%s1261 + $0x908] sm:$0xff]
        %v1631 = vld [vmem:[%s1261 + $0x910] sm:$0xff]
        %v1632 = vld [vmem:[%s1261 + $0x918] sm:$0xff]
        %v1633 = vld [vmem:[%s1261 + $0x920] sm:$0xff]
        %v1634 = vld [vmem:[%s1261 + $0x928] sm:$0xff]
        %v1635 = vld [vmem:[%s1261 + $0x930] sm:$0xff]
        %v1636 = vld [vmem:[%s1261 + $0x938] sm:$0xff]
        %v1637 = vld [vmem:[%s1261 + $0x940] sm:$0xff]
        %v1638 = vld [vmem:[%s1261 + $0x948] sm:$0xff]
        %v1639 = vld [vmem:[%s1261 + $0x950] sm:$0xff]
        %v1640 = vld [vmem:[%s1261 + $0x958] sm:$0xff]
        %v1641 = vld [vmem:[%s1261 + $0x960] sm:$0xff]
        %v1642 = vld [vmem:[%s1261 + $0x968] sm:$0xff]
        %v1643 = vld [vmem:[%s1261 + $0x970] sm:$0xff]
        %v1644 = vld [vmem:[%s1261 + $0x978] sm:$0xff]
        %v1645 = vld [vmem:[%s1261 + $0x980] sm:$0xff]
        %v1646 = vld [vmem:[%s1261 + $0x988] sm:$0xff]
        %v1647 = vld [vmem:[%s1261 + $0x990] sm:$0xff]
        %v1648 = vld [vmem:[%s1261 + $0x998] sm:$0xff]
        %v1649 = vld [vmem:[%s1261 + $0x9a0] sm:$0xff]
        %v1650 = vld [vmem:[%s1261 + $0x9a8] sm:$0xff]
        %v1651 = vld [vmem:[%s1261 + $0x9b0] sm:$0xff]
        %v1652 = vld [vmem:[%s1261 + $0x9b8] sm:$0xff]
        %v1653 = vld [vmem:[%s1261 + $0x9c0] sm:$0xff]
        %v1654 = vld [vmem:[%s1261 + $0x9c8] sm:$0xff]
        %v1655 = vld [vmem:[%s1261 + $0x9d0] sm:$0xff]
        %v1656 = vld [vmem:[%s1261 + $0x9d8] sm:$0xff]
        %v1657 = vld [vmem:[%s1261 + $0x9e0] sm:$0xff]
        %v1658 = vld [vmem:[%s1261 + $0x9e8] sm:$0xff]
        %v1659 = vld [vmem:[%s1261 + $0x9f0] sm:$0xff]
        %v1660 = vld [vmem:[%s1261 + $0x9f8] sm:$0xff]
        %v1661 = vld [vmem:[%s1261 + $0xa00] sm:$0xff]
        %v1662 = vld [vmem:[%s1261 + $0xa08] sm:$0xff]
        %v1663 = vld [vmem:[%s1261 + $0xa10] sm:$0xff]
        %v1664 = vld [vmem:[%s1261 + $0xa18] sm:$0xff]
        %v1665 = vld [vmem:[%s1261 + $0xa20] sm:$0xff]
        %v1666 = vld [vmem:[%s1261 + $0xa28] sm:$0xff]
        %v1667 = vld [vmem:[%s1261 + $0xa30] sm:$0xff]
        %v1668 = vld [vmem:[%s1261 + $0xa38] sm:$0xff]
        %v1669 = vld [vmem:[%s1261 + $0xa40] sm:$0xff]
        %v1670 = vld [vmem:[%s1261 + $0xa48] sm:$0xff]
        %v1671 = vld [vmem:[%s1261 + $0xa50] sm:$0xff]
        %v1672 = vld [vmem:[%s1261 + $0xa58] sm:$0xff]
        %v1673 = vld [vmem:[%s1261 + $0xa60] sm:$0xff]
        %v1674 = vld [vmem:[%s1261 + $0xa68] sm:$0xff]
        %v1675 = vld [vmem:[%s1261 + $0xa70] sm:$0xff]
        %v1676 = vld [vmem:[%s1261 + $0xa78] sm:$0xff]
        %v1677 = vld [vmem:[%s1261 + $0xa80] sm:$0xff]
        %v1678 = vld [vmem:[%s1261 + $0xa88] sm:$0xff]
        %v1679 = vld [vmem:[%s1261 + $0xa90] sm:$0xff]
        %v1680 = vld [vmem:[%s1261 + $0xa98] sm:$0xff]
        %v1681 = vld [vmem:[%s1261 + $0xaa0] sm:$0xff]
        %v1682 = vld [vmem:[%s1261 + $0xaa8] sm:$0xff]
        %v1683 = vld [vmem:[%s1261 + $0xab0] sm:$0xff]
        %v1684 = vld [vmem:[%s1261 + $0xab8] sm:$0xff]
        %v1685 = vld [vmem:[%s1261 + $0xac0] sm:$0xff]
        %v1686 = vld [vmem:[%s1261 + $0xac8] sm:$0xff]
        %v1687 = vld [vmem:[%s1261 + $0xad0] sm:$0xff]
        %v1688 = vld [vmem:[%s1261 + $0xad8] sm:$0xff]
        %v1689 = vld [vmem:[%s1261 + $0xae0] sm:$0xff]
        %v1690 = vld [vmem:[%s1261 + $0xae8] sm:$0xff]
        %v1691 = vld [vmem:[%s1261 + $0xaf0] sm:$0xff]
        %v1692 = vld [vmem:[%s1261 + $0xaf8] sm:$0xff]
        %v1693 = vld [vmem:[%s1261 + $0xb00] sm:$0xff]
        %v1694 = vld [vmem:[%s1261 + $0xb08] sm:$0xff]
        %v1695 = vld [vmem:[%s1261 + $0xb10] sm:$0xff]
        %v1696 = vld [vmem:[%s1261 + $0xb18] sm:$0xff]
        %v1697 = vld [vmem:[%s1261 + $0xb20] sm:$0xff]
        %v1698 = vld [vmem:[%s1261 + $0xb28] sm:$0xff]
        %v1699 = vld [vmem:[%s1261 + $0xb30] sm:$0xff]
        %v1700 = vld [vmem:[%s1261 + $0xb38] sm:$0xff]
        %v1701 = vld [vmem:[%s1261 + $0xb40] sm:$0xff]
        %v1702 = vld [vmem:[%s1261 + $0xb48] sm:$0xff]
        %v1703 = vld [vmem:[%s1261 + $0xb50] sm:$0xff]
        %v1704 = vld [vmem:[%s1261 + $0xb58] sm:$0xff]
        %v1705 = vld [vmem:[%s1261 + $0xb60] sm:$0xff]
        %v1706 = vld [vmem:[%s1261 + $0xb68] sm:$0xff]
        %v1707 = vld [vmem:[%s1261 + $0xb70] sm:$0xff]
        %v1708 = vld [vmem:[%s1261 + $0xb78] sm:$0xff]
        %v1709 = vld [vmem:[%s1261 + $0xb80] sm:$0xff]
        %v1710 = vld [vmem:[%s1261 + $0xb88] sm:$0xff]
        %v1711 = vld [vmem:[%s1261 + $0xb90] sm:$0xff]
        %v1712 = vld [vmem:[%s1261 + $0xb98] sm:$0xff]
        %v1713 = vld [vmem:[%s1261 + $0xba0] sm:$0xff]
        %v1714 = vld [vmem:[%s1261 + $0xba8] sm:$0xff]
        %v1715 = vld [vmem:[%s1261 + $0xbb0] sm:$0xff]
        %v1716 = vld [vmem:[%s1261 + $0xbb8] sm:$0xff]
        %v1717 = vld [vmem:[%s1261 + $0xbc0] sm:$0xff]
        %v1718 = vld [vmem:[%s1261 + $0xbc8] sm:$0xff]
        %v1719 = vld [vmem:[%s1261 + $0xbd0] sm:$0xff]
        %v1720 = vld [vmem:[%s1261 + $0xbd8] sm:$0xff]
        %v1721 = vld [vmem:[%s1261 + $0xbe0] sm:$0xff]
        %v1722 = vld [vmem:[%s1261 + $0xbe8] sm:$0xff]
        %v1723 = vld [vmem:[%s1261 + $0xbf0] sm:$0xff]
        %v1724 = vld [vmem:[%s1261 + $0xbf8] sm:$0xff]
        %v1725 = vld [vmem:[%s1261 + $0xc00] sm:$0xff]
        %v1726 = vld [vmem:[%s1261 + $0xc08] sm:$0xff]
        %v1727 = vld [vmem:[%s1261 + $0xc10] sm:$0xff]
        %v1728 = vld [vmem:[%s1261 + $0xc18] sm:$0xff]
        %v1729 = vld [vmem:[%s1261 + $0xc20] sm:$0xff]
        %v1730 = vld [vmem:[%s1261 + $0xc28] sm:$0xff]
        %v1731 = vld [vmem:[%s1261 + $0xc30] sm:$0xff]
        %v1732 = vld [vmem:[%s1261 + $0xc38] sm:$0xff]
        %v1733 = vld [vmem:[%s1261 + $0xc40] sm:$0xff]
        %v1734 = vld [vmem:[%s1261 + $0xc48] sm:$0xff]
        %v1735 = vld [vmem:[%s1261 + $0xc50] sm:$0xff]
        %v1736 = vld [vmem:[%s1261 + $0xc58] sm:$0xff]
        %v1737 = vld [vmem:[%s1261 + $0xc60] sm:$0xff]
        %v1738 = vld [vmem:[%s1261 + $0xc68] sm:$0xff]
        %v1739 = vld [vmem:[%s1261 + $0xc70] sm:$0xff]
        %v1740 = vld [vmem:[%s1261 + $0xc78] sm:$0xff]
        %v1741 = vld [vmem:[%s1261 + $0xc80] sm:$0xff]
        %v1742 = vld [vmem:[%s1261 + $0xc88] sm:$0xff]
        %v1743 = vld [vmem:[%s1261 + $0xc90] sm:$0xff]
        %v1744 = vld [vmem:[%s1261 + $0xc98] sm:$0xff]
        %v1745 = vld [vmem:[%s1261 + $0xca0] sm:$0xff]
        %v1746 = vld [vmem:[%s1261 + $0xca8] sm:$0xff]
        %v1747 = vld [vmem:[%s1261 + $0xcb0] sm:$0xff]
        %v1748 = vld [vmem:[%s1261 + $0xcb8] sm:$0xff]
        %v1749 = vld [vmem:[%s1261 + $0xcc0] sm:$0xff]
        %v1750 = vld [vmem:[%s1261 + $0xcc8] sm:$0xff]
        %v1751 = vld [vmem:[%s1261 + $0xcd0] sm:$0xff]
        %v1752 = vld [vmem:[%s1261 + $0xcd8] sm:$0xff]
        %v1753 = vld [vmem:[%s1261 + $0xce0] sm:$0xff]
        %v1754 = vld [vmem:[%s1261 + $0xce8] sm:$0xff]
        %v1755 = vld [vmem:[%s1261 + $0xcf0] sm:$0xff]
        %v1756 = vld [vmem:[%s1261 + $0xcf8] sm:$0xff]
        %v1757 = vld [vmem:[%s1261 + $0xd00] sm:$0xff]
        %v1758 = vld [vmem:[%s1261 + $0xd08] sm:$0xff]
        %v1759 = vld [vmem:[%s1261 + $0xd10] sm:$0xff]
        %v1760 = vld [vmem:[%s1261 + $0xd18] sm:$0xff]
        %v1761 = vld [vmem:[%s1261 + $0xd20] sm:$0xff]
        %v1762 = vld [vmem:[%s1261 + $0xd28] sm:$0xff]
        %v1763 = vld [vmem:[%s1261 + $0xd30] sm:$0xff]
        %v1764 = vld [vmem:[%s1261 + $0xd38] sm:$0xff]
        %v1765 = vld [vmem:[%s1261 + $0xd40] sm:$0xff]
        %v1766 = vld [vmem:[%s1261 + $0xd48] sm:$0xff]
        %v1767 = vld [vmem:[%s1261 + $0xd50] sm:$0xff]
        %v1768 = vld [vmem:[%s1261 + $0xd58] sm:$0xff]
        %v1769 = vld [vmem:[%s1261 + $0xd60] sm:$0xff]
        %v1770 = vld [vmem:[%s1261 + $0xd68] sm:$0xff]
        %v1771 = vld [vmem:[%s1261 + $0xd70] sm:$0xff]
        %v1772 = vld [vmem:[%s1261 + $0xd78] sm:$0xff]
        %v1773 = vld [vmem:[%s1261 + $0xd80] sm:$0xff]
        %v1774 = vld [vmem:[%s1261 + $0xd88] sm:$0xff]
        %v1775 = vld [vmem:[%s1261 + $0xd90] sm:$0xff]
        %v1776 = vld [vmem:[%s1261 + $0xd98] sm:$0xff]
        %v1777 = vld [vmem:[%s1261 + $0xda0] sm:$0xff]
        %v1778 = vld [vmem:[%s1261 + $0xda8] sm:$0xff]
        %v1779 = vld [vmem:[%s1261 + $0xdb0] sm:$0xff]
        %v1780 = vld [vmem:[%s1261 + $0xdb8] sm:$0xff]
        %v1781 = vld [vmem:[%s1261 + $0xdc0] sm:$0xff]
        %v1782 = vld [vmem:[%s1261 + $0xdc8] sm:$0xff]
        %v1783 = vld [vmem:[%s1261 + $0xdd0] sm:$0xff]
        %v1784 = vld [vmem:[%s1261 + $0xdd8] sm:$0xff]
        %v1785 = vld [vmem:[%s1261 + $0xde0] sm:$0xff]
        %v1786 = vld [vmem:[%s1261 + $0xde8] sm:$0xff]
        %v1787 = vld [vmem:[%s1261 + $0xdf0] sm:$0xff]
        %v1788 = vld [vmem:[%s1261 + $0xdf8] sm:$0xff]
        %v1789 = vld [vmem:[%s1261 + $0xe00] sm:$0xff]
        %v1790 = vld [vmem:[%s1261 + $0xe08] sm:$0xff]
        %v1791 = vld [vmem:[%s1261 + $0xe10] sm:$0xff]
        %v1792 = vld [vmem:[%s1261 + $0xe18] sm:$0xff]
        %v1793 = vld [vmem:[%s1261 + $0xe20] sm:$0xff]
        %v1794 = vld [vmem:[%s1261 + $0xe28] sm:$0xff]
        %v1795 = vld [vmem:[%s1261 + $0xe30] sm:$0xff]
        %v1796 = vld [vmem:[%s1261 + $0xe38] sm:$0xff]
        %v1797 = vld [vmem:[%s1261 + $0xe40] sm:$0xff]
        %v1798 = vld [vmem:[%s1261 + $0xe48] sm:$0xff]
        %v1799 = vld [vmem:[%s1261 + $0xe50] sm:$0xff]
        %v1800 = vld [vmem:[%s1261 + $0xe58] sm:$0xff]
        %v1801 = vld [vmem:[%s1261 + $0xe60] sm:$0xff]
        %v1802 = vld [vmem:[%s1261 + $0xe68] sm:$0xff]
        %v1803 = vld [vmem:[%s1261 + $0xe70] sm:$0xff]
        %v1804 = vld [vmem:[%s1261 + $0xe78] sm:$0xff]
        %v1805 = vld [vmem:[%s1261 + $0xe80] sm:$0xff]
        %v1806 = vld [vmem:[%s1261 + $0xe88] sm:$0xff]
        %v1807 = vld [vmem:[%s1261 + $0xe90] sm:$0xff]
        %v1808 = vld [vmem:[%s1261 + $0xe98] sm:$0xff]
        %v1809 = vld [vmem:[%s1261 + $0xea0] sm:$0xff]
        %v1810 = vld [vmem:[%s1261 + $0xea8] sm:$0xff]
        %v1811 = vld [vmem:[%s1261 + $0xeb0] sm:$0xff]
        %v1812 = vld [vmem:[%s1261 + $0xeb8] sm:$0xff]
        %v1813 = vld [vmem:[%s1261 + $0xec0] sm:$0xff]
        %v1814 = vld [vmem:[%s1261 + $0xec8] sm:$0xff]
        %v1815 = vld [vmem:[%s1261 + $0xed0] sm:$0xff]
        %v1816 = vld [vmem:[%s1261 + $0xed8] sm:$0xff]
        %v1817 = vld [vmem:[%s1261 + $0xee0] sm:$0xff]
        %v1818 = vld [vmem:[%s1261 + $0xee8] sm:$0xff]
        %v1819 = vld [vmem:[%s1261 + $0xef0] sm:$0xff]
        %v1820 = vld [vmem:[%s1261 + $0xef8] sm:$0xff]
        %v1821 = vld [vmem:[%s1261 + $0xf00] sm:$0xff]
        %v1822 = vld [vmem:[%s1261 + $0xf08] sm:$0xff]
        %v1823 = vld [vmem:[%s1261 + $0xf10] sm:$0xff]
        %v1824 = vld [vmem:[%s1261 + $0xf18] sm:$0xff]
        %v1825 = vld [vmem:[%s1261 + $0xf20] sm:$0xff]
        %v1826 = vld [vmem:[%s1261 + $0xf28] sm:$0xff]
        %v1827 = vld [vmem:[%s1261 + $0xf30] sm:$0xff]
        %v1828 = vld [vmem:[%s1261 + $0xf38] sm:$0xff]
        %v1829 = vld [vmem:[%s1261 + $0xf40] sm:$0xff]
        %v1830 = vld [vmem:[%s1261 + $0xf48] sm:$0xff]
        %v1831 = vld [vmem:[%s1261 + $0xf50] sm:$0xff]
        %v1832 = vld [vmem:[%s1261 + $0xf58] sm:$0xff]
        %v1833 = vld [vmem:[%s1261 + $0xf60] sm:$0xff]
        %v1834 = vld [vmem:[%s1261 + $0xf68] sm:$0xff]
        %v1835 = vld [vmem:[%s1261 + $0xf70] sm:$0xff]
        %v1836 = vld [vmem:[%s1261 + $0xf78] sm:$0xff]
        %v1837 = vld [vmem:[%s1261 + $0xf80] sm:$0xff]
        %v1838 = vld [vmem:[%s1261 + $0xf88] sm:$0xff]
        %v1839 = vld [vmem:[%s1261 + $0xf90] sm:$0xff]
        %v1840 = vld [vmem:[%s1261 + $0xf98] sm:$0xff]
        %v1841 = vld [vmem:[%s1261 + $0xfa0] sm:$0xff]
        %v1842 = vld [vmem:[%s1261 + $0xfa8] sm:$0xff]
        %v1843 = vld [vmem:[%s1261 + $0xfb0] sm:$0xff]
        %v1844 = vld [vmem:[%s1261 + $0xfb8] sm:$0xff]
        %v1845 = vld [vmem:[%s1261 + $0xfc0] sm:$0xff]
        %v1846 = vld [vmem:[%s1261 + $0xfc8] sm:$0xff]
        %v1847 = vld [vmem:[%s1261 + $0xfd0] sm:$0xff]
        %v1848 = vld [vmem:[%s1261 + $0xfd8] sm:$0xff]
        %v1849 = vld [vmem:[%s1261 + $0xfe0] sm:$0xff]
        %v1850 = vld [vmem:[%s1261 + $0xfe8] sm:$0xff]
        %v1851 = vld [vmem:[%s1261 + $0xff0] sm:$0xff]
        %v1852 = vld [vmem:[%s1261 + $0xff8] sm:$0xff]
        %v1861 = vunpack.c.l.b16 %v1333
        %v1862 = vunpack.c.h.b16 %v1333
        %v1863 = vunpack.c.l.b16 %v1334
        %v1864 = vunpack.c.h.b16 %v1334
        %v1865 = vunpack.c.l.b16 %v1335
        %v1866 = vunpack.c.h.b16 %v1335
        %v1867 = vunpack.c.l.b16 %v1336
        %v1868 = vunpack.c.h.b16 %v1336
        %v1869 = vunpack.c.l.b16 %v1337
        %v1870 = vunpack.c.h.b16 %v1337
        %v1871 = vunpack.c.l.b16 %v1338
        %v1872 = vunpack.c.h.b16 %v1338
        %v1873 = vunpack.c.l.b16 %v1339
        %v1874 = vunpack.c.h.b16 %v1339
        %v1875 = vunpack.c.l.b16 %v1340
        %v1876 = vunpack.c.h.b16 %v1340
        %v1877 = vpack.c.b16 %v1861, %v1861
        %v1878 = vpack.c.b16 %v1862, %v1862
        %v1879 = vpack.c.b16 %v1863, %v1863
        %v1880 = vpack.c.b16 %v1864, %v1864
        %v1881 = vpack.c.b16 %v1865, %v1865
        %v1882 = vpack.c.b16 %v1866, %v1866
        %v1883 = vpack.c.b16 %v1867, %v1867
        %v1884 = vpack.c.b16 %v1868, %v1868
        %v1885 = vpack.c.b16 %v1869, %v1869
        %v1886 = vpack.c.b16 %v1870, %v1870
        %v1887 = vpack.c.b16 %v1871, %v1871
        %v1888 = vpack.c.b16 %v1872, %v1872
        %v1889 = vpack.c.b16 %v1873, %v1873
        %v1890 = vpack.c.b16 %v1874, %v1874
        %v1891 = vpack.c.b16 %v1875, %v1875
        %v1892 = vpack.c.b16 %v1876, %v1876
        %v2421 = vunpack.c.l.b16 %v1341
        %v2422 = vunpack.c.h.b16 %v1341
        %v2423 = vunpack.c.l.b16 %v1342
        %v2424 = vunpack.c.h.b16 %v1342
        %v2425 = vunpack.c.l.b16 %v1343
        %v2426 = vunpack.c.h.b16 %v1343
        %v2427 = vunpack.c.l.b16 %v1344
        %v2428 = vunpack.c.h.b16 %v1344
        %v2429 = vunpack.c.l.b16 %v1345
        %v2430 = vunpack.c.h.b16 %v1345
        %v2431 = vunpack.c.l.b16 %v1346
        %v2432 = vunpack.c.h.b16 %v1346
        %v2433 = vunpack.c.l.b16 %v1347
        %v2434 = vunpack.c.h.b16 %v1347
        %v2435 = vunpack.c.l.b16 %v1348
        %v2436 = vunpack.c.h.b16 %v1348
        %v2437 = vunpack.c.l.b16 %v1349
        %v2438 = vunpack.c.h.b16 %v1349
        %v2439 = vunpack.c.l.b16 %v1350
        %v2440 = vunpack.c.h.b16 %v1350
        %v2441 = vunpack.c.l.b16 %v1351
        %v2442 = vunpack.c.h.b16 %v1351
        %v2443 = vunpack.c.l.b16 %v1352
        %v2444 = vunpack.c.h.b16 %v1352
        %v2445 = vunpack.c.l.b16 %v1353
        %v2446 = vunpack.c.h.b16 %v1353
        %v2447 = vunpack.c.l.b16 %v1354
        %v2448 = vunpack.c.h.b16 %v1354
        %v2449 = vunpack.c.l.b16 %v1355
        %v2450 = vunpack.c.h.b16 %v1355
        %v2451 = vunpack.c.l.b16 %v1356
        %v2452 = vunpack.c.h.b16 %v1356
        %v2453 = vunpack.c.l.b16 %v1357
        %v2454 = vunpack.c.h.b16 %v1357
        %v2455 = vunpack.c.l.b16 %v1358
        %v2456 = vunpack.c.h.b16 %v1358
        %v2457 = vunpack.c.l.b16 %v1359
        %v2458 = vunpack.c.h.b16 %v1359
        %v2459 = vunpack.c.l.b16 %v1360
        %v2460 = vunpack.c.h.b16 %v1360
        %v2461 = vunpack.c.l.b16 %v1361
        %v2462 = vunpack.c.h.b16 %v1361
        %v2463 = vunpack.c.l.b16 %v1362
        %v2464 = vunpack.c.h.b16 %v1362
        %v2465 = vunpack.c.l.b16 %v1363
        %v2466 = vunpack.c.h.b16 %v1363
        %v2467 = vunpack.c.l.b16 %v1364
        %v2468 = vunpack.c.h.b16 %v1364
        %v2469 = vunpack.c.l.b16 %v1365
        %v2470 = vunpack.c.h.b16 %v1365
        %v2471 = vunpack.c.l.b16 %v1366
        %v2472 = vunpack.c.h.b16 %v1366
        %v2473 = vunpack.c.l.b16 %v1367
        %v2474 = vunpack.c.h.b16 %v1367
        %v2475 = vunpack.c.l.b16 %v1368
        %v2476 = vunpack.c.h.b16 %v1368
        %v2477 = vunpack.c.l.b16 %v1369
        %v2478 = vunpack.c.h.b16 %v1369
        %v2479 = vunpack.c.l.b16 %v1370
        %v2480 = vunpack.c.h.b16 %v1370
        %v2481 = vunpack.c.l.b16 %v1371
        %v2482 = vunpack.c.h.b16 %v1371
        %v2483 = vunpack.c.l.b16 %v1372
        %v2484 = vunpack.c.h.b16 %v1372
        %v2485 = vunpack.c.l.b16 %v1373
        %v2486 = vunpack.c.h.b16 %v1373
        %v2487 = vunpack.c.l.b16 %v1374
        %v2488 = vunpack.c.h.b16 %v1374
        %v2489 = vunpack.c.l.b16 %v1375
        %v2490 = vunpack.c.h.b16 %v1375
        %v2491 = vunpack.c.l.b16 %v1376
        %v2492 = vunpack.c.h.b16 %v1376
        %v2493 = vunpack.c.l.b16 %v1377
        %v2494 = vunpack.c.h.b16 %v1377
        %v2495 = vunpack.c.l.b16 %v1378
        %v2496 = vunpack.c.h.b16 %v1378
        %v2497 = vunpack.c.l.b16 %v1379
        %v2498 = vunpack.c.h.b16 %v1379
        %v2499 = vunpack.c.l.b16 %v1380
        %v2500 = vunpack.c.h.b16 %v1380
        %v2501 = vunpack.c.l.b16 %v1381
        %v2502 = vunpack.c.h.b16 %v1381
        %v2503 = vunpack.c.l.b16 %v1382
        %v2504 = vunpack.c.h.b16 %v1382
        %v2505 = vunpack.c.l.b16 %v1383
        %v2506 = vunpack.c.h.b16 %v1383
        %v2507 = vunpack.c.l.b16 %v1384
        %v2508 = vunpack.c.h.b16 %v1384
        %v2509 = vunpack.c.l.b16 %v1385
        %v2510 = vunpack.c.h.b16 %v1385
        %v2511 = vunpack.c.l.b16 %v1386
        %v2512 = vunpack.c.h.b16 %v1386
        %v2513 = vunpack.c.l.b16 %v1387
        %v2514 = vunpack.c.h.b16 %v1387
        %v2515 = vunpack.c.l.b16 %v1388
        %v2516 = vunpack.c.h.b16 %v1388
        %v2517 = vunpack.c.l.b16 %v1389
        %v2518 = vunpack.c.h.b16 %v1389
        %v2519 = vunpack.c.l.b16 %v1390
        %v2520 = vunpack.c.h.b16 %v1390
        %v2521 = vunpack.c.l.b16 %v1391
        %v2522 = vunpack.c.h.b16 %v1391
        %v2523 = vunpack.c.l.b16 %v1392
        %v2524 = vunpack.c.h.b16 %v1392
        %v2525 = vunpack.c.l.b16 %v1393
        %v2526 = vunpack.c.h.b16 %v1393
        %v2527 = vunpack.c.l.b16 %v1394
        %v2528 = vunpack.c.h.b16 %v1394
        %v2529 = vunpack.c.l.b16 %v1395
        %v2530 = vunpack.c.h.b16 %v1395
        %v2531 = vunpack.c.l.b16 %v1396
        %v2532 = vunpack.c.h.b16 %v1396
        %v2533 = vunpack.c.l.b16 %v1397
        %v2534 = vunpack.c.h.b16 %v1397
        %v2535 = vunpack.c.l.b16 %v1398
        %v2536 = vunpack.c.h.b16 %v1398
        %v2537 = vunpack.c.l.b16 %v1399
        %v2538 = vunpack.c.h.b16 %v1399
        %v2539 = vunpack.c.l.b16 %v1400
        %v2540 = vunpack.c.h.b16 %v1400
        %v2541 = vunpack.c.l.b16 %v1401
        %v2542 = vunpack.c.h.b16 %v1401
        %v2543 = vunpack.c.l.b16 %v1402
        %v2544 = vunpack.c.h.b16 %v1402
        %v2545 = vunpack.c.l.b16 %v1403
        %v2546 = vunpack.c.h.b16 %v1403
        %v2547 = vunpack.c.l.b16 %v1404
        %v2548 = vunpack.c.h.b16 %v1404
        %v2549 = vunpack.c.l.b16 %v1405
        %v2550 = vunpack.c.h.b16 %v1405
        %v2551 = vunpack.c.l.b16 %v1406
        %v2552 = vunpack.c.h.b16 %v1406
        %v2553 = vunpack.c.l.b16 %v1407
        %v2554 = vunpack.c.h.b16 %v1407
        %v2555 = vunpack.c.l.b16 %v1408
        %v2556 = vunpack.c.h.b16 %v1408
        %v2557 = vunpack.c.l.b16 %v1409
        %v2558 = vunpack.c.h.b16 %v1409
        %v2559 = vunpack.c.l.b16 %v1410
        %v2560 = vunpack.c.h.b16 %v1410
        %v2561 = vunpack.c.l.b16 %v1411
        %v2562 = vunpack.c.h.b16 %v1411
        %v2563 = vunpack.c.l.b16 %v1412
        %v2564 = vunpack.c.h.b16 %v1412
        %v2565 = vunpack.c.l.b16 %v1413
        %v2566 = vunpack.c.h.b16 %v1413
        %v2567 = vunpack.c.l.b16 %v1414
        %v2568 = vunpack.c.h.b16 %v1414
        %v2569 = vunpack.c.l.b16 %v1415
        %v2570 = vunpack.c.h.b16 %v1415
        %v2571 = vunpack.c.l.b16 %v1416
        %v2572 = vunpack.c.h.b16 %v1416
        %v2573 = vunpack.c.l.b16 %v1417
        %v2574 = vunpack.c.h.b16 %v1417
        %v2575 = vunpack.c.l.b16 %v1418
        %v2576 = vunpack.c.h.b16 %v1418
        %v2577 = vunpack.c.l.b16 %v1419
        %v2578 = vunpack.c.h.b16 %v1419
        %v2579 = vunpack.c.l.b16 %v1420
        %v2580 = vunpack.c.h.b16 %v1420
        %v2581 = vunpack.c.l.b16 %v1421
        %v2582 = vunpack.c.h.b16 %v1421
        %v2583 = vunpack.c.l.b16 %v1422
        %v2584 = vunpack.c.h.b16 %v1422
        %v2585 = vunpack.c.l.b16 %v1423
        %v2586 = vunpack.c.h.b16 %v1423
        %v2587 = vunpack.c.l.b16 %v1424
        %v2588 = vunpack.c.h.b16 %v1424
        %v2589 = vunpack.c.l.b16 %v1425
        %v2590 = vunpack.c.h.b16 %v1425
        %v2591 = vunpack.c.l.b16 %v1426
        %v2592 = vunpack.c.h.b16 %v1426
        %v2593 = vunpack.c.l.b16 %v1427
        %v2594 = vunpack.c.h.b16 %v1427
        %v2595 = vunpack.c.l.b16 %v1428
        %v2596 = vunpack.c.h.b16 %v1428
        %v2597 = vunpack.c.l.b16 %v1429
        %v2598 = vunpack.c.h.b16 %v1429
        %v2599 = vunpack.c.l.b16 %v1430
        %v2600 = vunpack.c.h.b16 %v1430
        %v2601 = vunpack.c.l.b16 %v1431
        %v2602 = vunpack.c.h.b16 %v1431
        %v2603 = vunpack.c.l.b16 %v1432
        %v2604 = vunpack.c.h.b16 %v1432
        %v2605 = vunpack.c.l.b16 %v1433
        %v2606 = vunpack.c.h.b16 %v1433
        %v2607 = vunpack.c.l.b16 %v1434
        %v2608 = vunpack.c.h.b16 %v1434
        %v2609 = vunpack.c.l.b16 %v1435
        %v2610 = vunpack.c.h.b16 %v1435
        %v2611 = vunpack.c.l.b16 %v1436
        %v2612 = vunpack.c.h.b16 %v1436
        %v2613 = vunpack.c.l.b16 %v1437
        %v2614 = vunpack.c.h.b16 %v1437
        %v2615 = vunpack.c.l.b16 %v1438
        %v2616 = vunpack.c.h.b16 %v1438
        %v2617 = vunpack.c.l.b16 %v1439
        %v2618 = vunpack.c.h.b16 %v1439
        %v2619 = vunpack.c.l.b16 %v1440
        %v2620 = vunpack.c.h.b16 %v1440
        %v2621 = vunpack.c.l.b16 %v1441
        %v2622 = vunpack.c.h.b16 %v1441
        %v2623 = vunpack.c.l.b16 %v1442
        %v2624 = vunpack.c.h.b16 %v1442
        %v2625 = vunpack.c.l.b16 %v1443
        %v2626 = vunpack.c.h.b16 %v1443
        %v2627 = vunpack.c.l.b16 %v1444
        %v2628 = vunpack.c.h.b16 %v1444
        %v2629 = vunpack.c.l.b16 %v1445
        %v2630 = vunpack.c.h.b16 %v1445
        %v2631 = vunpack.c.l.b16 %v1446
        %v2632 = vunpack.c.h.b16 %v1446
        %v2633 = vunpack.c.l.b16 %v1447
        %v2634 = vunpack.c.h.b16 %v1447
        %v2635 = vunpack.c.l.b16 %v1448
        %v2636 = vunpack.c.h.b16 %v1448
        %v2637 = vunpack.c.l.b16 %v1449
        %v2638 = vunpack.c.h.b16 %v1449
        %v2639 = vunpack.c.l.b16 %v1450
        %v2640 = vunpack.c.h.b16 %v1450
        %v2641 = vunpack.c.l.b16 %v1451
        %v2642 = vunpack.c.h.b16 %v1451
        %v2643 = vunpack.c.l.b16 %v1452
        %v2644 = vunpack.c.h.b16 %v1452
        %v2645 = vunpack.c.l.b16 %v1453
        %v2646 = vunpack.c.h.b16 %v1453
        %v2647 = vunpack.c.l.b16 %v1454
        %v2648 = vunpack.c.h.b16 %v1454
        %v2649 = vunpack.c.l.b16 %v1455
        %v2650 = vunpack.c.h.b16 %v1455
        %v2651 = vunpack.c.l.b16 %v1456
        %v2652 = vunpack.c.h.b16 %v1456
        %v2653 = vunpack.c.l.b16 %v1457
        %v2654 = vunpack.c.h.b16 %v1457
        %v2655 = vunpack.c.l.b16 %v1458
        %v2656 = vunpack.c.h.b16 %v1458
        %v2657 = vunpack.c.l.b16 %v1459
        %v2658 = vunpack.c.h.b16 %v1459
        %v2659 = vunpack.c.l.b16 %v1460
        %v2660 = vunpack.c.h.b16 %v1460
        %v2661 = vunpack.c.l.b16 %v1461
        %v2662 = vunpack.c.h.b16 %v1461
        %v2663 = vunpack.c.l.b16 %v1462
        %v2664 = vunpack.c.h.b16 %v1462
        %v2665 = vunpack.c.l.b16 %v1463
        %v2666 = vunpack.c.h.b16 %v1463
        %v2667 = vunpack.c.l.b16 %v1464
        %v2668 = vunpack.c.h.b16 %v1464
        %v2669 = vunpack.c.l.b16 %v1465
        %v2670 = vunpack.c.h.b16 %v1465
        %v2671 = vunpack.c.l.b16 %v1466
        %v2672 = vunpack.c.h.b16 %v1466
        %v2673 = vunpack.c.l.b16 %v1467
        %v2674 = vunpack.c.h.b16 %v1467
        %v2675 = vunpack.c.l.b16 %v1468
        %v2676 = vunpack.c.h.b16 %v1468
        %v2677 = vunpack.c.l.b16 %v1469
        %v2678 = vunpack.c.h.b16 %v1469
        %v2679 = vunpack.c.l.b16 %v1470
        %v2680 = vunpack.c.h.b16 %v1470
        %v2681 = vunpack.c.l.b16 %v1471
        %v2682 = vunpack.c.h.b16 %v1471
        %v2683 = vunpack.c.l.b16 %v1472
        %v2684 = vunpack.c.h.b16 %v1472
        %v2685 = vunpack.c.l.b16 %v1473
        %v2686 = vunpack.c.h.b16 %v1473
        %v2687 = vunpack.c.l.b16 %v1474
        %v2688 = vunpack.c.h.b16 %v1474
        %v2689 = vunpack.c.l.b16 %v1475
        %v2690 = vunpack.c.h.b16 %v1475
        %v2691 = vunpack.c.l.b16 %v1476
        %v2692 = vunpack.c.h.b16 %v1476
        %v2693 = vunpack.c.l.b16 %v1477
        %v2694 = vunpack.c.h.b16 %v1477
        %v2695 = vunpack.c.l.b16 %v1478
        %v2696 = vunpack.c.h.b16 %v1478
        %v2697 = vunpack.c.l.b16 %v1479
        %v2698 = vunpack.c.h.b16 %v1479
        %v2699 = vunpack.c.l.b16 %v1480
        %v2700 = vunpack.c.h.b16 %v1480
        %v2701 = vunpack.c.l.b16 %v1481
        %v2702 = vunpack.c.h.b16 %v1481
        %v2703 = vunpack.c.l.b16 %v1482
        %v2704 = vunpack.c.h.b16 %v1482
        %v2705 = vunpack.c.l.b16 %v1483
        %v2706 = vunpack.c.h.b16 %v1483
        %v2707 = vunpack.c.l.b16 %v1484
        %v2708 = vunpack.c.h.b16 %v1484
        %v2709 = vunpack.c.l.b16 %v1485
        %v2710 = vunpack.c.h.b16 %v1485
        %v2711 = vunpack.c.l.b16 %v1486
        %v2712 = vunpack.c.h.b16 %v1486
        %v2713 = vunpack.c.l.b16 %v1487
        %v2714 = vunpack.c.h.b16 %v1487
        %v2715 = vunpack.c.l.b16 %v1488
        %v2716 = vunpack.c.h.b16 %v1488
        %v2717 = vunpack.c.l.b16 %v1489
        %v2718 = vunpack.c.h.b16 %v1489
        %v2719 = vunpack.c.l.b16 %v1490
        %v2720 = vunpack.c.h.b16 %v1490
        %v2721 = vunpack.c.l.b16 %v1491
        %v2722 = vunpack.c.h.b16 %v1491
        %v2723 = vunpack.c.l.b16 %v1492
        %v2724 = vunpack.c.h.b16 %v1492
        %v2725 = vunpack.c.l.b16 %v1493
        %v2726 = vunpack.c.h.b16 %v1493
        %v2727 = vunpack.c.l.b16 %v1494
        %v2728 = vunpack.c.h.b16 %v1494
        %v2729 = vunpack.c.l.b16 %v1495
        %v2730 = vunpack.c.h.b16 %v1495
        %v2731 = vunpack.c.l.b16 %v1496
        %v2732 = vunpack.c.h.b16 %v1496
        %v2733 = vunpack.c.l.b16 %v1497
        %v2734 = vunpack.c.h.b16 %v1497
        %v2735 = vunpack.c.l.b16 %v1498
        %v2736 = vunpack.c.h.b16 %v1498
        %v2737 = vunpack.c.l.b16 %v1499
        %v2738 = vunpack.c.h.b16 %v1499
        %v2739 = vunpack.c.l.b16 %v1500
        %v2740 = vunpack.c.h.b16 %v1500
        %v2741 = vunpack.c.l.b16 %v1501
        %v2742 = vunpack.c.h.b16 %v1501
        %v2743 = vunpack.c.l.b16 %v1502
        %v2744 = vunpack.c.h.b16 %v1502
        %v2745 = vunpack.c.l.b16 %v1503
        %v2746 = vunpack.c.h.b16 %v1503
        %v2747 = vunpack.c.l.b16 %v1504
        %v2748 = vunpack.c.h.b16 %v1504
        %v2749 = vunpack.c.l.b16 %v1505
        %v2750 = vunpack.c.h.b16 %v1505
        %v2751 = vunpack.c.l.b16 %v1506
        %v2752 = vunpack.c.h.b16 %v1506
        %v2753 = vunpack.c.l.b16 %v1507
        %v2754 = vunpack.c.h.b16 %v1507
        %v2755 = vunpack.c.l.b16 %v1508
        %v2756 = vunpack.c.h.b16 %v1508
        %v2757 = vunpack.c.l.b16 %v1509
        %v2758 = vunpack.c.h.b16 %v1509
        %v2759 = vunpack.c.l.b16 %v1510
        %v2760 = vunpack.c.h.b16 %v1510
        %v2761 = vunpack.c.l.b16 %v1511
        %v2762 = vunpack.c.h.b16 %v1511
        %v2763 = vunpack.c.l.b16 %v1512
        %v2764 = vunpack.c.h.b16 %v1512
        %v2765 = vunpack.c.l.b16 %v1513
        %v2766 = vunpack.c.h.b16 %v1513
        %v2767 = vunpack.c.l.b16 %v1514
        %v2768 = vunpack.c.h.b16 %v1514
        %v2769 = vunpack.c.l.b16 %v1515
        %v2770 = vunpack.c.h.b16 %v1515
        %v2771 = vunpack.c.l.b16 %v1516
        %v2772 = vunpack.c.h.b16 %v1516
        %v2773 = vunpack.c.l.b16 %v1517
        %v2774 = vunpack.c.h.b16 %v1517
        %v2775 = vunpack.c.l.b16 %v1518
        %v2776 = vunpack.c.h.b16 %v1518
        %v2777 = vunpack.c.l.b16 %v1519
        %v2778 = vunpack.c.h.b16 %v1519
        %v2779 = vunpack.c.l.b16 %v1520
        %v2780 = vunpack.c.h.b16 %v1520
        %v2781 = vunpack.c.l.b16 %v1521
        %v2782 = vunpack.c.h.b16 %v1521
        %v2783 = vunpack.c.l.b16 %v1522
        %v2784 = vunpack.c.h.b16 %v1522
        %v2785 = vunpack.c.l.b16 %v1523
        %v2786 = vunpack.c.h.b16 %v1523
        %v2787 = vunpack.c.l.b16 %v1524
        %v2788 = vunpack.c.h.b16 %v1524
        %v2789 = vunpack.c.l.b16 %v1525
        %v2790 = vunpack.c.h.b16 %v1525
        %v2791 = vunpack.c.l.b16 %v1526
        %v2792 = vunpack.c.h.b16 %v1526
        %v2793 = vunpack.c.l.b16 %v1527
        %v2794 = vunpack.c.h.b16 %v1527
        %v2795 = vunpack.c.l.b16 %v1528
        %v2796 = vunpack.c.h.b16 %v1528
        %v2797 = vunpack.c.l.b16 %v1529
        %v2798 = vunpack.c.h.b16 %v1529
        %v2799 = vunpack.c.l.b16 %v1530
        %v2800 = vunpack.c.h.b16 %v1530
        %v2801 = vunpack.c.l.b16 %v1531
        %v2802 = vunpack.c.h.b16 %v1531
        %v2803 = vunpack.c.l.b16 %v1532
        %v2804 = vunpack.c.h.b16 %v1532
        %v2805 = vunpack.c.l.b16 %v1533
        %v2806 = vunpack.c.h.b16 %v1533
        %v2807 = vunpack.c.l.b16 %v1534
        %v2808 = vunpack.c.h.b16 %v1534
        %v2809 = vunpack.c.l.b16 %v1535
        %v2810 = vunpack.c.h.b16 %v1535
        %v2811 = vunpack.c.l.b16 %v1536
        %v2812 = vunpack.c.h.b16 %v1536
        %v2813 = vunpack.c.l.b16 %v1537
        %v2814 = vunpack.c.h.b16 %v1537
        %v2815 = vunpack.c.l.b16 %v1538
        %v2816 = vunpack.c.h.b16 %v1538
        %v2817 = vunpack.c.l.b16 %v1539
        %v2818 = vunpack.c.h.b16 %v1539
        %v2819 = vunpack.c.l.b16 %v1540
        %v2820 = vunpack.c.h.b16 %v1540
        %v2821 = vunpack.c.l.b16 %v1541
        %v2822 = vunpack.c.h.b16 %v1541
        %v2823 = vunpack.c.l.b16 %v1542
        %v2824 = vunpack.c.h.b16 %v1542
        %v2825 = vunpack.c.l.b16 %v1543
        %v2826 = vunpack.c.h.b16 %v1543
        %v2827 = vunpack.c.l.b16 %v1544
        %v2828 = vunpack.c.h.b16 %v1544
        %v2829 = vunpack.c.l.b16 %v1545
        %v2830 = vunpack.c.h.b16 %v1545
        %v2831 = vunpack.c.l.b16 %v1546
        %v2832 = vunpack.c.h.b16 %v1546
        %v2833 = vunpack.c.l.b16 %v1547
        %v2834 = vunpack.c.h.b16 %v1547
        %v2835 = vunpack.c.l.b16 %v1548
        %v2836 = vunpack.c.h.b16 %v1548
        %v2837 = vunpack.c.l.b16 %v1549
        %v2838 = vunpack.c.h.b16 %v1549
        %v2839 = vunpack.c.l.b16 %v1550
        %v2840 = vunpack.c.h.b16 %v1550
        %v2841 = vunpack.c.l.b16 %v1551
        %v2842 = vunpack.c.h.b16 %v1551
        %v2843 = vunpack.c.l.b16 %v1552
        %v2844 = vunpack.c.h.b16 %v1552
        %v2845 = vunpack.c.l.b16 %v1553
        %v2846 = vunpack.c.h.b16 %v1553
        %v2847 = vunpack.c.l.b16 %v1554
        %v2848 = vunpack.c.h.b16 %v1554
        %v2849 = vunpack.c.l.b16 %v1555
        %v2850 = vunpack.c.h.b16 %v1555
        %v2851 = vunpack.c.l.b16 %v1556
        %v2852 = vunpack.c.h.b16 %v1556
        %v2853 = vunpack.c.l.b16 %v1557
        %v2854 = vunpack.c.h.b16 %v1557
        %v2855 = vunpack.c.l.b16 %v1558
        %v2856 = vunpack.c.h.b16 %v1558
        %v2857 = vunpack.c.l.b16 %v1559
        %v2858 = vunpack.c.h.b16 %v1559
        %v2859 = vunpack.c.l.b16 %v1560
        %v2860 = vunpack.c.h.b16 %v1560
        %v2861 = vunpack.c.l.b16 %v1561
        %v2862 = vunpack.c.h.b16 %v1561
        %v2863 = vunpack.c.l.b16 %v1562
        %v2864 = vunpack.c.h.b16 %v1562
        %v2865 = vunpack.c.l.b16 %v1563
        %v2866 = vunpack.c.h.b16 %v1563
        %v2867 = vunpack.c.l.b16 %v1564
        %v2868 = vunpack.c.h.b16 %v1564
        %v2869 = vunpack.c.l.b16 %v1565
        %v2870 = vunpack.c.h.b16 %v1565
        %v2871 = vunpack.c.l.b16 %v1566
        %v2872 = vunpack.c.h.b16 %v1566
        %v2873 = vunpack.c.l.b16 %v1567
        %v2874 = vunpack.c.h.b16 %v1567
        %v2875 = vunpack.c.l.b16 %v1568
        %v2876 = vunpack.c.h.b16 %v1568
        %v2877 = vunpack.c.l.b16 %v1569
        %v2878 = vunpack.c.h.b16 %v1569
        %v2879 = vunpack.c.l.b16 %v1570
        %v2880 = vunpack.c.h.b16 %v1570
        %v2881 = vunpack.c.l.b16 %v1571
        %v2882 = vunpack.c.h.b16 %v1571
        %v2883 = vunpack.c.l.b16 %v1572
        %v2884 = vunpack.c.h.b16 %v1572
        %v2885 = vunpack.c.l.b16 %v1573
        %v2886 = vunpack.c.h.b16 %v1573
        %v2887 = vunpack.c.l.b16 %v1574
        %v2888 = vunpack.c.h.b16 %v1574
        %v2889 = vunpack.c.l.b16 %v1575
        %v2890 = vunpack.c.h.b16 %v1575
        %v2891 = vunpack.c.l.b16 %v1576
        %v2892 = vunpack.c.h.b16 %v1576
        %v2893 = vunpack.c.l.b16 %v1577
        %v2894 = vunpack.c.h.b16 %v1577
        %v2895 = vunpack.c.l.b16 %v1578
        %v2896 = vunpack.c.h.b16 %v1578
        %v2897 = vunpack.c.l.b16 %v1579
        %v2898 = vunpack.c.h.b16 %v1579
        %v2899 = vunpack.c.l.b16 %v1580
        %v2900 = vunpack.c.h.b16 %v1580
        %v2901 = vunpack.c.l.b16 %v1581
        %v2902 = vunpack.c.h.b16 %v1581
        %v2903 = vunpack.c.l.b16 %v1582
        %v2904 = vunpack.c.h.b16 %v1582
        %v2905 = vunpack.c.l.b16 %v1583
        %v2906 = vunpack.c.h.b16 %v1583
        %v2907 = vunpack.c.l.b16 %v1584
        %v2908 = vunpack.c.h.b16 %v1584
        %v2909 = vunpack.c.l.b16 %v1585
        %v2910 = vunpack.c.h.b16 %v1585
        %v2911 = vunpack.c.l.b16 %v1586
        %v2912 = vunpack.c.h.b16 %v1586
        %v2913 = vunpack.c.l.b16 %v1587
        %v2914 = vunpack.c.h.b16 %v1587
        %v2915 = vunpack.c.l.b16 %v1588
        %v2916 = vunpack.c.h.b16 %v1588
        %v2917 = vunpack.c.l.b16 %v1589
        %v2918 = vunpack.c.h.b16 %v1589
        %v2919 = vunpack.c.l.b16 %v1590
        %v2920 = vunpack.c.h.b16 %v1590
        %v2921 = vunpack.c.l.b16 %v1591
        %v2922 = vunpack.c.h.b16 %v1591
        %v2923 = vunpack.c.l.b16 %v1592
        %v2924 = vunpack.c.h.b16 %v1592
        %v2925 = vunpack.c.l.b16 %v1593
        %v2926 = vunpack.c.h.b16 %v1593
        %v2927 = vunpack.c.l.b16 %v1594
        %v2928 = vunpack.c.h.b16 %v1594
        %v2929 = vunpack.c.l.b16 %v1595
        %v2930 = vunpack.c.h.b16 %v1595
        %v2931 = vunpack.c.l.b16 %v1596
        %v2932 = vunpack.c.h.b16 %v1596
        %v2933 = vunpack.c.l.b16 %v1597
        %v2934 = vunpack.c.h.b16 %v1597
        %v2935 = vunpack.c.l.b16 %v1598
        %v2936 = vunpack.c.h.b16 %v1598
        %v2937 = vunpack.c.l.b16 %v1599
        %v2938 = vunpack.c.h.b16 %v1599
        %v2939 = vunpack.c.l.b16 %v1600
        %v2940 = vunpack.c.h.b16 %v1600
        %v2941 = vunpack.c.l.b16 %v1601
        %v2942 = vunpack.c.h.b16 %v1601
        %v2943 = vunpack.c.l.b16 %v1602
        %v2944 = vunpack.c.h.b16 %v1602
        %v2945 = vunpack.c.l.b16 %v1603
        %v2946 = vunpack.c.h.b16 %v1603
        %v2947 = vunpack.c.l.b16 %v1604
        %v2948 = vunpack.c.h.b16 %v1604
        %v2949 = vunpack.c.l.b16 %v1605
        %v2950 = vunpack.c.h.b16 %v1605
        %v2951 = vunpack.c.l.b16 %v1606
        %v2952 = vunpack.c.h.b16 %v1606
        %v2953 = vunpack.c.l.b16 %v1607
        %v2954 = vunpack.c.h.b16 %v1607
        %v2955 = vunpack.c.l.b16 %v1608
        %v2956 = vunpack.c.h.b16 %v1608
        %v2957 = vunpack.c.l.b16 %v1609
        %v2958 = vunpack.c.h.b16 %v1609
        %v2959 = vunpack.c.l.b16 %v1610
        %v2960 = vunpack.c.h.b16 %v1610
        %v2961 = vunpack.c.l.b16 %v1611
        %v2962 = vunpack.c.h.b16 %v1611
        %v2963 = vunpack.c.l.b16 %v1612
        %v2964 = vunpack.c.h.b16 %v1612
        %v2965 = vunpack.c.l.b16 %v1613
        %v2966 = vunpack.c.h.b16 %v1613
        %v2967 = vunpack.c.l.b16 %v1614
        %v2968 = vunpack.c.h.b16 %v1614
        %v2969 = vunpack.c.l.b16 %v1615
        %v2970 = vunpack.c.h.b16 %v1615
        %v2971 = vunpack.c.l.b16 %v1616
        %v2972 = vunpack.c.h.b16 %v1616
        %v2973 = vunpack.c.l.b16 %v1617
        %v2974 = vunpack.c.h.b16 %v1617
        %v2975 = vunpack.c.l.b16 %v1618
        %v2976 = vunpack.c.h.b16 %v1618
        %v2977 = vunpack.c.l.b16 %v1619
        %v2978 = vunpack.c.h.b16 %v1619
        %v2979 = vunpack.c.l.b16 %v1620
        %v2980 = vunpack.c.h.b16 %v1620
        %v2981 = vunpack.c.l.b16 %v1621
        %v2982 = vunpack.c.h.b16 %v1621
        %v2983 = vunpack.c.l.b16 %v1622
        %v2984 = vunpack.c.h.b16 %v1622
        %v2985 = vunpack.c.l.b16 %v1623
        %v2986 = vunpack.c.h.b16 %v1623
        %v2987 = vunpack.c.l.b16 %v1624
        %v2988 = vunpack.c.h.b16 %v1624
        %v2989 = vunpack.c.l.b16 %v1625
        %v2990 = vunpack.c.h.b16 %v1625
        %v2991 = vunpack.c.l.b16 %v1626
        %v2992 = vunpack.c.h.b16 %v1626
        %v2993 = vunpack.c.l.b16 %v1627
        %v2994 = vunpack.c.h.b16 %v1627
        %v2995 = vunpack.c.l.b16 %v1628
        %v2996 = vunpack.c.h.b16 %v1628
        %v2997 = vunpack.c.l.b16 %v1629
        %v2998 = vunpack.c.h.b16 %v1629
        %v2999 = vunpack.c.l.b16 %v1630
        %v3000 = vunpack.c.h.b16 %v1630
        %v3001 = vunpack.c.l.b16 %v1631
        %v3002 = vunpack.c.h.b16 %v1631
        %v3003 = vunpack.c.l.b16 %v1632
        %v3004 = vunpack.c.h.b16 %v1632
        %v3005 = vunpack.c.l.b16 %v1633
        %v3006 = vunpack.c.h.b16 %v1633
        %v3007 = vunpack.c.l.b16 %v1634
        %v3008 = vunpack.c.h.b16 %v1634
        %v3009 = vunpack.c.l.b16 %v1635
        %v3010 = vunpack.c.h.b16 %v1635
        %v3011 = vunpack.c.l.b16 %v1636
        %v3012 = vunpack.c.h.b16 %v1636
        %v3013 = vunpack.c.l.b16 %v1637
        %v3014 = vunpack.c.h.b16 %v1637
        %v3015 = vunpack.c.l.b16 %v1638
        %v3016 = vunpack.c.h.b16 %v1638
        %v3017 = vunpack.c.l.b16 %v1639
        %v3018 = vunpack.c.h.b16 %v1639
        %v3019 = vunpack.c.l.b16 %v1640
        %v3020 = vunpack.c.h.b16 %v1640
        %v3021 = vunpack.c.l.b16 %v1641
        %v3022 = vunpack.c.h.b16 %v1641
        %v3023 = vunpack.c.l.b16 %v1642
        %v3024 = vunpack.c.h.b16 %v1642
        %v3025 = vunpack.c.l.b16 %v1643
        %v3026 = vunpack.c.h.b16 %v1643
        %v3027 = vunpack.c.l.b16 %v1644
        %v3028 = vunpack.c.h.b16 %v1644
        %v3029 = vunpack.c.l.b16 %v1645
        %v3030 = vunpack.c.h.b16 %v1645
        %v3031 = vunpack.c.l.b16 %v1646
        %v3032 = vunpack.c.h.b16 %v1646
        %v3033 = vunpack.c.l.b16 %v1647
        %v3034 = vunpack.c.h.b16 %v1647
        %v3035 = vunpack.c.l.b16 %v1648
        %v3036 = vunpack.c.h.b16 %v1648
        %v3037 = vunpack.c.l.b16 %v1649
        %v3038 = vunpack.c.h.b16 %v1649
        %v3039 = vunpack.c.l.b16 %v1650
        %v3040 = vunpack.c.h.b16 %v1650
        %v3041 = vunpack.c.l.b16 %v1651
        %v3042 = vunpack.c.h.b16 %v1651
        %v3043 = vunpack.c.l.b16 %v1652
        %v3044 = vunpack.c.h.b16 %v1652
        %v3045 = vunpack.c.l.b16 %v1653
        %v3046 = vunpack.c.h.b16 %v1653
        %v3047 = vunpack.c.l.b16 %v1654
        %v3048 = vunpack.c.h.b16 %v1654
        %v3049 = vunpack.c.l.b16 %v1655
        %v3050 = vunpack.c.h.b16 %v1655
        %v3051 = vunpack.c.l.b16 %v1656
        %v3052 = vunpack.c.h.b16 %v1656
        %v3053 = vunpack.c.l.b16 %v1657
        %v3054 = vunpack.c.h.b16 %v1657
        %v3055 = vunpack.c.l.b16 %v1658
        %v3056 = vunpack.c.h.b16 %v1658
        %v3057 = vunpack.c.l.b16 %v1659
        %v3058 = vunpack.c.h.b16 %v1659
        %v3059 = vunpack.c.l.b16 %v1660
        %v3060 = vunpack.c.h.b16 %v1660
        %v3061 = vunpack.c.l.b16 %v1661
        %v3062 = vunpack.c.h.b16 %v1661
        %v3063 = vunpack.c.l.b16 %v1662
        %v3064 = vunpack.c.h.b16 %v1662
        %v3065 = vunpack.c.l.b16 %v1663
        %v3066 = vunpack.c.h.b16 %v1663
        %v3067 = vunpack.c.l.b16 %v1664
        %v3068 = vunpack.c.h.b16 %v1664
        %v3069 = vunpack.c.l.b16 %v1665
        %v3070 = vunpack.c.h.b16 %v1665
        %v3071 = vunpack.c.l.b16 %v1666
        %v3072 = vunpack.c.h.b16 %v1666
        %v3073 = vunpack.c.l.b16 %v1667
        %v3074 = vunpack.c.h.b16 %v1667
        %v3075 = vunpack.c.l.b16 %v1668
        %v3076 = vunpack.c.h.b16 %v1668
        %v3077 = vunpack.c.l.b16 %v1669
        %v3078 = vunpack.c.h.b16 %v1669
        %v3079 = vunpack.c.l.b16 %v1670
        %v3080 = vunpack.c.h.b16 %v1670
        %v3081 = vunpack.c.l.b16 %v1671
        %v3082 = vunpack.c.h.b16 %v1671
        %v3083 = vunpack.c.l.b16 %v1672
        %v3084 = vunpack.c.h.b16 %v1672
        %v3085 = vunpack.c.l.b16 %v1673
        %v3086 = vunpack.c.h.b16 %v1673
        %v3087 = vunpack.c.l.b16 %v1674
        %v3088 = vunpack.c.h.b16 %v1674
        %v3089 = vunpack.c.l.b16 %v1675
        %v3090 = vunpack.c.h.b16 %v1675
        %v3091 = vunpack.c.l.b16 %v1676
        %v3092 = vunpack.c.h.b16 %v1676
        %v3093 = vunpack.c.l.b16 %v1677
        %v3094 = vunpack.c.h.b16 %v1677
        %v3095 = vunpack.c.l.b16 %v1678
        %v3096 = vunpack.c.h.b16 %v1678
        %v3097 = vunpack.c.l.b16 %v1679
        %v3098 = vunpack.c.h.b16 %v1679
        %v3099 = vunpack.c.l.b16 %v1680
        %v3100 = vunpack.c.h.b16 %v1680
        %v3101 = vunpack.c.l.b16 %v1681
        %v3102 = vunpack.c.h.b16 %v1681
        %v3103 = vunpack.c.l.b16 %v1682
        %v3104 = vunpack.c.h.b16 %v1682
        %v3105 = vunpack.c.l.b16 %v1683
        %v3106 = vunpack.c.h.b16 %v1683
        %v3107 = vunpack.c.l.b16 %v1684
        %v3108 = vunpack.c.h.b16 %v1684
        %v3109 = vunpack.c.l.b16 %v1685
        %v3110 = vunpack.c.h.b16 %v1685
        %v3111 = vunpack.c.l.b16 %v1686
        %v3112 = vunpack.c.h.b16 %v1686
        %v3113 = vunpack.c.l.b16 %v1687
        %v3114 = vunpack.c.h.b16 %v1687
        %v3115 = vunpack.c.l.b16 %v1688
        %v3116 = vunpack.c.h.b16 %v1688
        %v3117 = vunpack.c.l.b16 %v1689
        %v3118 = vunpack.c.h.b16 %v1689
        %v3119 = vunpack.c.l.b16 %v1690
        %v3120 = vunpack.c.h.b16 %v1690
        %v3121 = vunpack.c.l.b16 %v1691
        %v3122 = vunpack.c.h.b16 %v1691
        %v3123 = vunpack.c.l.b16 %v1692
        %v3124 = vunpack.c.h.b16 %v1692
        %v3125 = vunpack.c.l.b16 %v1693
        %v3126 = vunpack.c.h.b16 %v1693
        %v3127 = vunpack.c.l.b16 %v1694
        %v3128 = vunpack.c.h.b16 %v1694
        %v3129 = vunpack.c.l.b16 %v1695
        %v3130 = vunpack.c.h.b16 %v1695
        %v3131 = vunpack.c.l.b16 %v1696
        %v3132 = vunpack.c.h.b16 %v1696
        %v3133 = vunpack.c.l.b16 %v1697
        %v3134 = vunpack.c.h.b16 %v1697
        %v3135 = vunpack.c.l.b16 %v1698
        %v3136 = vunpack.c.h.b16 %v1698
        %v3137 = vunpack.c.l.b16 %v1699
        %v3138 = vunpack.c.h.b16 %v1699
        %v3139 = vunpack.c.l.b16 %v1700
        %v3140 = vunpack.c.h.b16 %v1700
        %v3141 = vunpack.c.l.b16 %v1701
        %v3142 = vunpack.c.h.b16 %v1701
        %v3143 = vunpack.c.l.b16 %v1702
        %v3144 = vunpack.c.h.b16 %v1702
        %v3145 = vunpack.c.l.b16 %v1703
        %v3146 = vunpack.c.h.b16 %v1703
        %v3147 = vunpack.c.l.b16 %v1704
        %v3148 = vunpack.c.h.b16 %v1704
        %v3149 = vunpack.c.l.b16 %v1705
        %v3150 = vunpack.c.h.b16 %v1705
        %v3151 = vunpack.c.l.b16 %v1706
        %v3152 = vunpack.c.h.b16 %v1706
        %v3153 = vunpack.c.l.b16 %v1707
        %v3154 = vunpack.c.h.b16 %v1707
        %v3155 = vunpack.c.l.b16 %v1708
        %v3156 = vunpack.c.h.b16 %v1708
        %v3157 = vunpack.c.l.b16 %v1709
        %v3158 = vunpack.c.h.b16 %v1709
        %v3159 = vunpack.c.l.b16 %v1710
        %v3160 = vunpack.c.h.b16 %v1710
        %v3161 = vunpack.c.l.b16 %v1711
        %v3162 = vunpack.c.h.b16 %v1711
        %v3163 = vunpack.c.l.b16 %v1712
        %v3164 = vunpack.c.h.b16 %v1712
        %v3165 = vunpack.c.l.b16 %v1713
        %v3166 = vunpack.c.h.b16 %v1713
        %v3167 = vunpack.c.l.b16 %v1714
        %v3168 = vunpack.c.h.b16 %v1714
        %v3169 = vunpack.c.l.b16 %v1715
        %v3170 = vunpack.c.h.b16 %v1715
        %v3171 = vunpack.c.l.b16 %v1716
        %v3172 = vunpack.c.h.b16 %v1716
        %v3173 = vunpack.c.l.b16 %v1717
        %v3174 = vunpack.c.h.b16 %v1717
        %v3175 = vunpack.c.l.b16 %v1718
        %v3176 = vunpack.c.h.b16 %v1718
        %v3177 = vunpack.c.l.b16 %v1719
        %v3178 = vunpack.c.h.b16 %v1719
        %v3179 = vunpack.c.l.b16 %v1720
        %v3180 = vunpack.c.h.b16 %v1720
        %v3181 = vunpack.c.l.b16 %v1721
        %v3182 = vunpack.c.h.b16 %v1721
        %v3183 = vunpack.c.l.b16 %v1722
        %v3184 = vunpack.c.h.b16 %v1722
        %v3185 = vunpack.c.l.b16 %v1723
        %v3186 = vunpack.c.h.b16 %v1723
        %v3187 = vunpack.c.l.b16 %v1724
        %v3188 = vunpack.c.h.b16 %v1724
        %v3189 = vunpack.c.l.b16 %v1725
        %v3190 = vunpack.c.h.b16 %v1725
        %v3191 = vunpack.c.l.b16 %v1726
        %v3192 = vunpack.c.h.b16 %v1726
        %v3193 = vunpack.c.l.b16 %v1727
        %v3194 = vunpack.c.h.b16 %v1727
        %v3195 = vunpack.c.l.b16 %v1728
        %v3196 = vunpack.c.h.b16 %v1728
        %v3197 = vunpack.c.l.b16 %v1729
        %v3198 = vunpack.c.h.b16 %v1729
        %v3199 = vunpack.c.l.b16 %v1730
        %v3200 = vunpack.c.h.b16 %v1730
        %v3201 = vunpack.c.l.b16 %v1731
        %v3202 = vunpack.c.h.b16 %v1731
        %v3203 = vunpack.c.l.b16 %v1732
        %v3204 = vunpack.c.h.b16 %v1732
        %v3205 = vunpack.c.l.b16 %v1733
        %v3206 = vunpack.c.h.b16 %v1733
        %v3207 = vunpack.c.l.b16 %v1734
        %v3208 = vunpack.c.h.b16 %v1734
        %v3209 = vunpack.c.l.b16 %v1735
        %v3210 = vunpack.c.h.b16 %v1735
        %v3211 = vunpack.c.l.b16 %v1736
        %v3212 = vunpack.c.h.b16 %v1736
        %v3213 = vunpack.c.l.b16 %v1737
        %v3214 = vunpack.c.h.b16 %v1737
        %v3215 = vunpack.c.l.b16 %v1738
        %v3216 = vunpack.c.h.b16 %v1738
        %v3217 = vunpack.c.l.b16 %v1739
        %v3218 = vunpack.c.h.b16 %v1739
        %v3219 = vunpack.c.l.b16 %v1740
        %v3220 = vunpack.c.h.b16 %v1740
        %v3221 = vunpack.c.l.b16 %v1741
        %v3222 = vunpack.c.h.b16 %v1741
        %v3223 = vunpack.c.l.b16 %v1742
        %v3224 = vunpack.c.h.b16 %v1742
        %v3225 = vunpack.c.l.b16 %v1743
        %v3226 = vunpack.c.h.b16 %v1743
        %v3227 = vunpack.c.l.b16 %v1744
        %v3228 = vunpack.c.h.b16 %v1744
        %v3229 = vunpack.c.l.b16 %v1745
        %v3230 = vunpack.c.h.b16 %v1745
        %v3231 = vunpack.c.l.b16 %v1746
        %v3232 = vunpack.c.h.b16 %v1746
        %v3233 = vunpack.c.l.b16 %v1747
        %v3234 = vunpack.c.h.b16 %v1747
        %v3235 = vunpack.c.l.b16 %v1748
        %v3236 = vunpack.c.h.b16 %v1748
        %v3237 = vunpack.c.l.b16 %v1749
        %v3238 = vunpack.c.h.b16 %v1749
        %v3239 = vunpack.c.l.b16 %v1750
        %v3240 = vunpack.c.h.b16 %v1750
        %v3241 = vunpack.c.l.b16 %v1751
        %v3242 = vunpack.c.h.b16 %v1751
        %v3243 = vunpack.c.l.b16 %v1752
        %v3244 = vunpack.c.h.b16 %v1752
        %v3245 = vunpack.c.l.b16 %v1753
        %v3246 = vunpack.c.h.b16 %v1753
        %v3247 = vunpack.c.l.b16 %v1754
        %v3248 = vunpack.c.h.b16 %v1754
        %v3249 = vunpack.c.l.b16 %v1755
        %v3250 = vunpack.c.h.b16 %v1755
        %v3251 = vunpack.c.l.b16 %v1756
        %v3252 = vunpack.c.h.b16 %v1756
        %v3253 = vunpack.c.l.b16 %v1757
        %v3254 = vunpack.c.h.b16 %v1757
        %v3255 = vunpack.c.l.b16 %v1758
        %v3256 = vunpack.c.h.b16 %v1758
        %v3257 = vunpack.c.l.b16 %v1759
        %v3258 = vunpack.c.h.b16 %v1759
        %v3259 = vunpack.c.l.b16 %v1760
        %v3260 = vunpack.c.h.b16 %v1760
        %v3261 = vunpack.c.l.b16 %v1761
        %v3262 = vunpack.c.h.b16 %v1761
        %v3263 = vunpack.c.l.b16 %v1762
        %v3264 = vunpack.c.h.b16 %v1762
        %v3265 = vunpack.c.l.b16 %v1763
        %v3266 = vunpack.c.h.b16 %v1763
        %v3267 = vunpack.c.l.b16 %v1764
        %v3268 = vunpack.c.h.b16 %v1764
        %v3269 = vunpack.c.l.b16 %v1765
        %v3270 = vunpack.c.h.b16 %v1765
        %v3271 = vunpack.c.l.b16 %v1766
        %v3272 = vunpack.c.h.b16 %v1766
        %v3273 = vunpack.c.l.b16 %v1767
        %v3274 = vunpack.c.h.b16 %v1767
        %v3275 = vunpack.c.l.b16 %v1768
        %v3276 = vunpack.c.h.b16 %v1768
        %v3277 = vunpack.c.l.b16 %v1769
        %v3278 = vunpack.c.h.b16 %v1769
        %v3279 = vunpack.c.l.b16 %v1770
        %v3280 = vunpack.c.h.b16 %v1770
        %v3281 = vunpack.c.l.b16 %v1771
        %v3282 = vunpack.c.h.b16 %v1771
        %v3283 = vunpack.c.l.b16 %v1772
        %v3284 = vunpack.c.h.b16 %v1772
        %v3285 = vunpack.c.l.b16 %v1773
        %v3286 = vunpack.c.h.b16 %v1773
        %v3287 = vunpack.c.l.b16 %v1774
        %v3288 = vunpack.c.h.b16 %v1774
        %v3289 = vunpack.c.l.b16 %v1775
        %v3290 = vunpack.c.h.b16 %v1775
        %v3291 = vunpack.c.l.b16 %v1776
        %v3292 = vunpack.c.h.b16 %v1776
        %v3293 = vunpack.c.l.b16 %v1777
        %v3294 = vunpack.c.h.b16 %v1777
        %v3295 = vunpack.c.l.b16 %v1778
        %v3296 = vunpack.c.h.b16 %v1778
        %v3297 = vunpack.c.l.b16 %v1779
        %v3298 = vunpack.c.h.b16 %v1779
        %v3299 = vunpack.c.l.b16 %v1780
        %v3300 = vunpack.c.h.b16 %v1780
        %v3301 = vunpack.c.l.b16 %v1781
        %v3302 = vunpack.c.h.b16 %v1781
        %v3303 = vunpack.c.l.b16 %v1782
        %v3304 = vunpack.c.h.b16 %v1782
        %v3305 = vunpack.c.l.b16 %v1783
        %v3306 = vunpack.c.h.b16 %v1783
        %v3307 = vunpack.c.l.b16 %v1784
        %v3308 = vunpack.c.h.b16 %v1784
        %v3309 = vunpack.c.l.b16 %v1785
        %v3310 = vunpack.c.h.b16 %v1785
        %v3311 = vunpack.c.l.b16 %v1786
        %v3312 = vunpack.c.h.b16 %v1786
        %v3313 = vunpack.c.l.b16 %v1787
        %v3314 = vunpack.c.h.b16 %v1787
        %v3315 = vunpack.c.l.b16 %v1788
        %v3316 = vunpack.c.h.b16 %v1788
        %v3317 = vunpack.c.l.b16 %v1789
        %v3318 = vunpack.c.h.b16 %v1789
        %v3319 = vunpack.c.l.b16 %v1790
        %v3320 = vunpack.c.h.b16 %v1790
        %v3321 = vunpack.c.l.b16 %v1791
        %v3322 = vunpack.c.h.b16 %v1791
        %v3323 = vunpack.c.l.b16 %v1792
        %v3324 = vunpack.c.h.b16 %v1792
        %v3325 = vunpack.c.l.b16 %v1793
        %v3326 = vunpack.c.h.b16 %v1793
        %v3327 = vunpack.c.l.b16 %v1794
        %v3328 = vunpack.c.h.b16 %v1794
        %v3329 = vunpack.c.l.b16 %v1795
        %v3330 = vunpack.c.h.b16 %v1795
        %v3331 = vunpack.c.l.b16 %v1796
        %v3332 = vunpack.c.h.b16 %v1796
        %v3333 = vunpack.c.l.b16 %v1797
        %v3334 = vunpack.c.h.b16 %v1797
        %v3335 = vunpack.c.l.b16 %v1798
        %v3336 = vunpack.c.h.b16 %v1798
        %v3337 = vunpack.c.l.b16 %v1799
        %v3338 = vunpack.c.h.b16 %v1799
        %v3339 = vunpack.c.l.b16 %v1800
        %v3340 = vunpack.c.h.b16 %v1800
        %v3341 = vunpack.c.l.b16 %v1801
        %v3342 = vunpack.c.h.b16 %v1801
        %v3343 = vunpack.c.l.b16 %v1802
        %v3344 = vunpack.c.h.b16 %v1802
        %v3345 = vunpack.c.l.b16 %v1803
        %v3346 = vunpack.c.h.b16 %v1803
        %v3347 = vunpack.c.l.b16 %v1804
        %v3348 = vunpack.c.h.b16 %v1804
        %v3349 = vunpack.c.l.b16 %v1805
        %v3350 = vunpack.c.h.b16 %v1805
        %v3351 = vunpack.c.l.b16 %v1806
        %v3352 = vunpack.c.h.b16 %v1806
        %v3353 = vunpack.c.l.b16 %v1807
        %v3354 = vunpack.c.h.b16 %v1807
        %v3355 = vunpack.c.l.b16 %v1808
        %v3356 = vunpack.c.h.b16 %v1808
        %v3357 = vunpack.c.l.b16 %v1809
        %v3358 = vunpack.c.h.b16 %v1809
        %v3359 = vunpack.c.l.b16 %v1810
        %v3360 = vunpack.c.h.b16 %v1810
        %v3361 = vunpack.c.l.b16 %v1811
        %v3362 = vunpack.c.h.b16 %v1811
        %v3363 = vunpack.c.l.b16 %v1812
        %v3364 = vunpack.c.h.b16 %v1812
        %v3365 = vunpack.c.l.b16 %v1813
        %v3366 = vunpack.c.h.b16 %v1813
        %v3367 = vunpack.c.l.b16 %v1814
        %v3368 = vunpack.c.h.b16 %v1814
        %v3369 = vunpack.c.l.b16 %v1815
        %v3370 = vunpack.c.h.b16 %v1815
        %v3371 = vunpack.c.l.b16 %v1816
        %v3372 = vunpack.c.h.b16 %v1816
        %v3373 = vunpack.c.l.b16 %v1817
        %v3374 = vunpack.c.h.b16 %v1817
        %v3375 = vunpack.c.l.b16 %v1818
        %v3376 = vunpack.c.h.b16 %v1818
        %v3377 = vunpack.c.l.b16 %v1819
        %v3378 = vunpack.c.h.b16 %v1819
        %v3379 = vunpack.c.l.b16 %v1820
        %v3380 = vunpack.c.h.b16 %v1820
        %v3381 = vunpack.c.l.b16 %v1821
        %v3382 = vunpack.c.h.b16 %v1821
        %v3383 = vunpack.c.l.b16 %v1822
        %v3384 = vunpack.c.h.b16 %v1822
        %v3385 = vunpack.c.l.b16 %v1823
        %v3386 = vunpack.c.h.b16 %v1823
        %v3387 = vunpack.c.l.b16 %v1824
        %v3388 = vunpack.c.h.b16 %v1824
        %v3389 = vunpack.c.l.b16 %v1825
        %v3390 = vunpack.c.h.b16 %v1825
        %v3391 = vunpack.c.l.b16 %v1826
        %v3392 = vunpack.c.h.b16 %v1826
        %v3393 = vunpack.c.l.b16 %v1827
        %v3394 = vunpack.c.h.b16 %v1827
        %v3395 = vunpack.c.l.b16 %v1828
        %v3396 = vunpack.c.h.b16 %v1828
        %v3397 = vunpack.c.l.b16 %v1829
        %v3398 = vunpack.c.h.b16 %v1829
        %v3399 = vunpack.c.l.b16 %v1830
        %v3400 = vunpack.c.h.b16 %v1830
        %v3401 = vunpack.c.l.b16 %v1831
        %v3402 = vunpack.c.h.b16 %v1831
        %v3403 = vunpack.c.l.b16 %v1832
        %v3404 = vunpack.c.h.b16 %v1832
        %v3405 = vunpack.c.l.b16 %v1833
        %v3406 = vunpack.c.h.b16 %v1833
        %v3407 = vunpack.c.l.b16 %v1834
        %v3408 = vunpack.c.h.b16 %v1834
        %v3409 = vunpack.c.l.b16 %v1835
        %v3410 = vunpack.c.h.b16 %v1835
        %v3411 = vunpack.c.l.b16 %v1836
        %v3412 = vunpack.c.h.b16 %v1836
        %v3413 = vunpack.c.l.b16 %v1837
        %v3414 = vunpack.c.h.b16 %v1837
        %v3415 = vunpack.c.l.b16 %v1838
        %v3416 = vunpack.c.h.b16 %v1838
        %v3417 = vunpack.c.l.b16 %v1839
        %v3418 = vunpack.c.h.b16 %v1839
        %v3419 = vunpack.c.l.b16 %v1840
        %v3420 = vunpack.c.h.b16 %v1840
        %v3421 = vunpack.c.l.b16 %v1841
        %v3422 = vunpack.c.h.b16 %v1841
        %v3423 = vunpack.c.l.b16 %v1842
        %v3424 = vunpack.c.h.b16 %v1842
        %v3425 = vunpack.c.l.b16 %v1843
        %v3426 = vunpack.c.h.b16 %v1843
        %v3427 = vunpack.c.l.b16 %v1844
        %v3428 = vunpack.c.h.b16 %v1844
        %v3429 = vunpack.c.l.b16 %v1845
        %v3430 = vunpack.c.h.b16 %v1845
        %v3431 = vunpack.c.l.b16 %v1846
        %v3432 = vunpack.c.h.b16 %v1846
        %v3433 = vunpack.c.l.b16 %v1847
        %v3434 = vunpack.c.h.b16 %v1847
        %v3435 = vunpack.c.l.b16 %v1848
        %v3436 = vunpack.c.h.b16 %v1848
        %v3437 = vunpack.c.l.b16 %v1849
        %v3438 = vunpack.c.h.b16 %v1849
        %v3439 = vunpack.c.l.b16 %v1850
        %v3440 = vunpack.c.h.b16 %v1850
        %v3441 = vunpack.c.l.b16 %v1851
        %v3442 = vunpack.c.h.b16 %v1851
        %v3443 = vunpack.c.l.b16 %v1852
        %v3444 = vunpack.c.h.b16 %v1852
        %v3445 = vpack.c.b16 %v2425, %v2421
        %v3446 = vpack.c.b16 %v2426, %v2422
        %v3447 = vpack.c.b16 %v2427, %v2423
        %v3448 = vpack.c.b16 %v2428, %v2424
        %v3449 = vpack.c.b16 %v2433, %v2429
        %v3450 = vpack.c.b16 %v2434, %v2430
        %v3451 = vpack.c.b16 %v2435, %v2431
        %v3452 = vpack.c.b16 %v2436, %v2432
        %v3453 = vpack.c.b16 %v2441, %v2437
        %v3454 = vpack.c.b16 %v2442, %v2438
        %v3455 = vpack.c.b16 %v2443, %v2439
        %v3456 = vpack.c.b16 %v2444, %v2440
        %v3457 = vpack.c.b16 %v2449, %v2445
        %v3458 = vpack.c.b16 %v2450, %v2446
        %v3459 = vpack.c.b16 %v2451, %v2447
        %v3460 = vpack.c.b16 %v2452, %v2448
        %v3461 = vpack.c.b16 %v2457, %v2453
        %v3462 = vpack.c.b16 %v2458, %v2454
        %v3463 = vpack.c.b16 %v2459, %v2455
        %v3464 = vpack.c.b16 %v2460, %v2456
        %v3465 = vpack.c.b16 %v2465, %v2461
        %v3466 = vpack.c.b16 %v2466, %v2462
        %v3467 = vpack.c.b16 %v2467, %v2463
        %v3468 = vpack.c.b16 %v2468, %v2464
        %v3469 = vpack.c.b16 %v2473, %v2469
        %v3470 = vpack.c.b16 %v2474, %v2470
        %v3471 = vpack.c.b16 %v2475, %v2471
        %v3472 = vpack.c.b16 %v2476, %v2472
        %v3473 = vpack.c.b16 %v2481, %v2477
        %v3474 = vpack.c.b16 %v2482, %v2478
        %v3475 = vpack.c.b16 %v2483, %v2479
        %v3476 = vpack.c.b16 %v2484, %v2480
        %v3477 = vpack.c.b16 %v2489, %v2485
        %v3478 = vpack.c.b16 %v2490, %v2486
        %v3479 = vpack.c.b16 %v2491, %v2487
        %v3480 = vpack.c.b16 %v2492, %v2488
        %v3481 = vpack.c.b16 %v2497, %v2493
        %v3482 = vpack.c.b16 %v2498, %v2494
        %v3483 = vpack.c.b16 %v2499, %v2495
        %v3484 = vpack.c.b16 %v2500, %v2496
        %v3485 = vpack.c.b16 %v2505, %v2501
        %v3486 = vpack.c.b16 %v2506, %v2502
        %v3487 = vpack.c.b16 %v2507, %v2503
        %v3488 = vpack.c.b16 %v2508, %v2504
        %v3489 = vpack.c.b16 %v2513, %v2509
        %v3490 = vpack.c.b16 %v2514, %v2510
        %v3491 = vpack.c.b16 %v2515, %v2511
        %v3492 = vpack.c.b16 %v2516, %v2512
        %v3493 = vpack.c.b16 %v2521, %v2517
        %v3494 = vpack.c.b16 %v2522, %v2518
        %v3495 = vpack.c.b16 %v2523, %v2519
        %v3496 = vpack.c.b16 %v2524, %v2520
        %v3497 = vpack.c.b16 %v2529, %v2525
        %v3498 = vpack.c.b16 %v2530, %v2526
        %v3499 = vpack.c.b16 %v2531, %v2527
        %v3500 = vpack.c.b16 %v2532, %v2528
        %v3501 = vpack.c.b16 %v2537, %v2533
        %v3502 = vpack.c.b16 %v2538, %v2534
        %v3503 = vpack.c.b16 %v2539, %v2535
        %v3504 = vpack.c.b16 %v2540, %v2536
        %v3505 = vpack.c.b16 %v2545, %v2541
        %v3506 = vpack.c.b16 %v2546, %v2542
        %v3507 = vpack.c.b16 %v2547, %v2543
        %v3508 = vpack.c.b16 %v2548, %v2544
        %v3509 = vpack.c.b16 %v2553, %v2549
        %v3510 = vpack.c.b16 %v2554, %v2550
        %v3511 = vpack.c.b16 %v2555, %v2551
        %v3512 = vpack.c.b16 %v2556, %v2552
        %v3513 = vpack.c.b16 %v2561, %v2557
        %v3514 = vpack.c.b16 %v2562, %v2558
        %v3515 = vpack.c.b16 %v2563, %v2559
        %v3516 = vpack.c.b16 %v2564, %v2560
        %v3517 = vpack.c.b16 %v2569, %v2565
        %v3518 = vpack.c.b16 %v2570, %v2566
        %v3519 = vpack.c.b16 %v2571, %v2567
        %v3520 = vpack.c.b16 %v2572, %v2568
        %v3521 = vpack.c.b16 %v2577, %v2573
        %v3522 = vpack.c.b16 %v2578, %v2574
        %v3523 = vpack.c.b16 %v2579, %v2575
        %v3524 = vpack.c.b16 %v2580, %v2576
        %v3525 = vpack.c.b16 %v2585, %v2581
        %v3526 = vpack.c.b16 %v2586, %v2582
        %v3527 = vpack.c.b16 %v2587, %v2583
        %v3528 = vpack.c.b16 %v2588, %v2584
        %v3529 = vpack.c.b16 %v2593, %v2589
        %v3530 = vpack.c.b16 %v2594, %v2590
        %v3531 = vpack.c.b16 %v2595, %v2591
        %v3532 = vpack.c.b16 %v2596, %v2592
        %v3533 = vpack.c.b16 %v2601, %v2597
        %v3534 = vpack.c.b16 %v2602, %v2598
        %v3535 = vpack.c.b16 %v2603, %v2599
        %v3536 = vpack.c.b16 %v2604, %v2600
        %v3537 = vpack.c.b16 %v2609, %v2605
        %v3538 = vpack.c.b16 %v2610, %v2606
        %v3539 = vpack.c.b16 %v2611, %v2607
        %v3540 = vpack.c.b16 %v2612, %v2608
        %v3541 = vpack.c.b16 %v2617, %v2613
        %v3542 = vpack.c.b16 %v2618, %v2614
        %v3543 = vpack.c.b16 %v2619, %v2615
        %v3544 = vpack.c.b16 %v2620, %v2616
        %v3545 = vpack.c.b16 %v2625, %v2621
        %v3546 = vpack.c.b16 %v2626, %v2622
        %v3547 = vpack.c.b16 %v2627, %v2623
        %v3548 = vpack.c.b16 %v2628, %v2624
        %v3549 = vpack.c.b16 %v2633, %v2629
        %v3550 = vpack.c.b16 %v2634, %v2630
        %v3551 = vpack.c.b16 %v2635, %v2631
        %v3552 = vpack.c.b16 %v2636, %v2632
        %v3553 = vpack.c.b16 %v2641, %v2637
        %v3554 = vpack.c.b16 %v2642, %v2638
        %v3555 = vpack.c.b16 %v2643, %v2639
        %v3556 = vpack.c.b16 %v2644, %v2640
        %v3557 = vpack.c.b16 %v2649, %v2645
        %v3558 = vpack.c.b16 %v2650, %v2646
        %v3559 = vpack.c.b16 %v2651, %v2647
        %v3560 = vpack.c.b16 %v2652, %v2648
        %v3561 = vpack.c.b16 %v2657, %v2653
        %v3562 = vpack.c.b16 %v2658, %v2654
        %v3563 = vpack.c.b16 %v2659, %v2655
        %v3564 = vpack.c.b16 %v2660, %v2656
        %v3565 = vpack.c.b16 %v2665, %v2661
        %v3566 = vpack.c.b16 %v2666, %v2662
        %v3567 = vpack.c.b16 %v2667, %v2663
        %v3568 = vpack.c.b16 %v2668, %v2664
        %v3569 = vpack.c.b16 %v2673, %v2669
        %v3570 = vpack.c.b16 %v2674, %v2670
        %v3571 = vpack.c.b16 %v2675, %v2671
        %v3572 = vpack.c.b16 %v2676, %v2672
        %v3573 = vpack.c.b16 %v2681, %v2677
        %v3574 = vpack.c.b16 %v2682, %v2678
        %v3575 = vpack.c.b16 %v2683, %v2679
        %v3576 = vpack.c.b16 %v2684, %v2680
        %v3577 = vpack.c.b16 %v2689, %v2685
        %v3578 = vpack.c.b16 %v2690, %v2686
        %v3579 = vpack.c.b16 %v2691, %v2687
        %v3580 = vpack.c.b16 %v2692, %v2688
        %v3581 = vpack.c.b16 %v2697, %v2693
        %v3582 = vpack.c.b16 %v2698, %v2694
        %v3583 = vpack.c.b16 %v2699, %v2695
        %v3584 = vpack.c.b16 %v2700, %v2696
        %v3585 = vpack.c.b16 %v2705, %v2701
        %v3586 = vpack.c.b16 %v2706, %v2702
        %v3587 = vpack.c.b16 %v2707, %v2703
        %v3588 = vpack.c.b16 %v2708, %v2704
        %v3589 = vpack.c.b16 %v2713, %v2709
        %v3590 = vpack.c.b16 %v2714, %v2710
        %v3591 = vpack.c.b16 %v2715, %v2711
        %v3592 = vpack.c.b16 %v2716, %v2712
        %v3593 = vpack.c.b16 %v2721, %v2717
        %v3594 = vpack.c.b16 %v2722, %v2718
        %v3595 = vpack.c.b16 %v2723, %v2719
        %v3596 = vpack.c.b16 %v2724, %v2720
        %v3597 = vpack.c.b16 %v2729, %v2725
        %v3598 = vpack.c.b16 %v2730, %v2726
        %v3599 = vpack.c.b16 %v2731, %v2727
        %v3600 = vpack.c.b16 %v2732, %v2728
        %v3601 = vpack.c.b16 %v2737, %v2733
        %v3602 = vpack.c.b16 %v2738, %v2734
        %v3603 = vpack.c.b16 %v2739, %v2735
        %v3604 = vpack.c.b16 %v2740, %v2736
        %v3605 = vpack.c.b16 %v2745, %v2741
        %v3606 = vpack.c.b16 %v2746, %v2742
        %v3607 = vpack.c.b16 %v2747, %v2743
        %v3608 = vpack.c.b16 %v2748, %v2744
        %v3609 = vpack.c.b16 %v2753, %v2749
        %v3610 = vpack.c.b16 %v2754, %v2750
        %v3611 = vpack.c.b16 %v2755, %v2751
        %v3612 = vpack.c.b16 %v2756, %v2752
        %v3613 = vpack.c.b16 %v2761, %v2757
        %v3614 = vpack.c.b16 %v2762, %v2758
        %v3615 = vpack.c.b16 %v2763, %v2759
        %v3616 = vpack.c.b16 %v2764, %v2760
        %v3617 = vpack.c.b16 %v2769, %v2765
        %v3618 = vpack.c.b16 %v2770, %v2766
        %v3619 = vpack.c.b16 %v2771, %v2767
        %v3620 = vpack.c.b16 %v2772, %v2768
        %v3621 = vpack.c.b16 %v2777, %v2773
        %v3622 = vpack.c.b16 %v2778, %v2774
        %v3623 = vpack.c.b16 %v2779, %v2775
        %v3624 = vpack.c.b16 %v2780, %v2776
        %v3625 = vpack.c.b16 %v2785, %v2781
        %v3626 = vpack.c.b16 %v2786, %v2782
        %v3627 = vpack.c.b16 %v2787, %v2783
        %v3628 = vpack.c.b16 %v2788, %v2784
        %v3629 = vpack.c.b16 %v2793, %v2789
        %v3630 = vpack.c.b16 %v2794, %v2790
        %v3631 = vpack.c.b16 %v2795, %v2791
        %v3632 = vpack.c.b16 %v2796, %v2792
        %v3633 = vpack.c.b16 %v2801, %v2797
        %v3634 = vpack.c.b16 %v2802, %v2798
        %v3635 = vpack.c.b16 %v2803, %v2799
        %v3636 = vpack.c.b16 %v2804, %v2800
        %v3637 = vpack.c.b16 %v2809, %v2805
        %v3638 = vpack.c.b16 %v2810, %v2806
        %v3639 = vpack.c.b16 %v2811, %v2807
        %v3640 = vpack.c.b16 %v2812, %v2808
        %v3641 = vpack.c.b16 %v2817, %v2813
        %v3642 = vpack.c.b16 %v2818, %v2814
        %v3643 = vpack.c.b16 %v2819, %v2815
        %v3644 = vpack.c.b16 %v2820, %v2816
        %v3645 = vpack.c.b16 %v2825, %v2821
        %v3646 = vpack.c.b16 %v2826, %v2822
        %v3647 = vpack.c.b16 %v2827, %v2823
        %v3648 = vpack.c.b16 %v2828, %v2824
        %v3649 = vpack.c.b16 %v2833, %v2829
        %v3650 = vpack.c.b16 %v2834, %v2830
        %v3651 = vpack.c.b16 %v2835, %v2831
        %v3652 = vpack.c.b16 %v2836, %v2832
        %v3653 = vpack.c.b16 %v2841, %v2837
        %v3654 = vpack.c.b16 %v2842, %v2838
        %v3655 = vpack.c.b16 %v2843, %v2839
        %v3656 = vpack.c.b16 %v2844, %v2840
        %v3657 = vpack.c.b16 %v2849, %v2845
        %v3658 = vpack.c.b16 %v2850, %v2846
        %v3659 = vpack.c.b16 %v2851, %v2847
        %v3660 = vpack.c.b16 %v2852, %v2848
        %v3661 = vpack.c.b16 %v2857, %v2853
        %v3662 = vpack.c.b16 %v2858, %v2854
        %v3663 = vpack.c.b16 %v2859, %v2855
        %v3664 = vpack.c.b16 %v2860, %v2856
        %v3665 = vpack.c.b16 %v2865, %v2861
        %v3666 = vpack.c.b16 %v2866, %v2862
        %v3667 = vpack.c.b16 %v2867, %v2863
        %v3668 = vpack.c.b16 %v2868, %v2864
        %v3669 = vpack.c.b16 %v2873, %v2869
        %v3670 = vpack.c.b16 %v2874, %v2870
        %v3671 = vpack.c.b16 %v2875, %v2871
        %v3672 = vpack.c.b16 %v2876, %v2872
        %v3673 = vpack.c.b16 %v2881, %v2877
        %v3674 = vpack.c.b16 %v2882, %v2878
        %v3675 = vpack.c.b16 %v2883, %v2879
        %v3676 = vpack.c.b16 %v2884, %v2880
        %v3677 = vpack.c.b16 %v2889, %v2885
        %v3678 = vpack.c.b16 %v2890, %v2886
        %v3679 = vpack.c.b16 %v2891, %v2887
        %v3680 = vpack.c.b16 %v2892, %v2888
        %v3681 = vpack.c.b16 %v2897, %v2893
        %v3682 = vpack.c.b16 %v2898, %v2894
        %v3683 = vpack.c.b16 %v2899, %v2895
        %v3684 = vpack.c.b16 %v2900, %v2896
        %v3685 = vpack.c.b16 %v2905, %v2901
        %v3686 = vpack.c.b16 %v2906, %v2902
        %v3687 = vpack.c.b16 %v2907, %v2903
        %v3688 = vpack.c.b16 %v2908, %v2904
        %v3689 = vpack.c.b16 %v2913, %v2909
        %v3690 = vpack.c.b16 %v2914, %v2910
        %v3691 = vpack.c.b16 %v2915, %v2911
        %v3692 = vpack.c.b16 %v2916, %v2912
        %v3693 = vpack.c.b16 %v2921, %v2917
        %v3694 = vpack.c.b16 %v2922, %v2918
        %v3695 = vpack.c.b16 %v2923, %v2919
        %v3696 = vpack.c.b16 %v2924, %v2920
        %v3697 = vpack.c.b16 %v2929, %v2925
        %v3698 = vpack.c.b16 %v2930, %v2926
        %v3699 = vpack.c.b16 %v2931, %v2927
        %v3700 = vpack.c.b16 %v2932, %v2928
        %v3701 = vpack.c.b16 %v2937, %v2933
        %v3702 = vpack.c.b16 %v2938, %v2934
        %v3703 = vpack.c.b16 %v2939, %v2935
        %v3704 = vpack.c.b16 %v2940, %v2936
        %v3705 = vpack.c.b16 %v2945, %v2941
        %v3706 = vpack.c.b16 %v2946, %v2942
        %v3707 = vpack.c.b16 %v2947, %v2943
        %v3708 = vpack.c.b16 %v2948, %v2944
        %v3709 = vpack.c.b16 %v2953, %v2949
        %v3710 = vpack.c.b16 %v2954, %v2950
        %v3711 = vpack.c.b16 %v2955, %v2951
        %v3712 = vpack.c.b16 %v2956, %v2952
        %v3713 = vpack.c.b16 %v2961, %v2957
        %v3714 = vpack.c.b16 %v2962, %v2958
        %v3715 = vpack.c.b16 %v2963, %v2959
        %v3716 = vpack.c.b16 %v2964, %v2960
        %v3717 = vpack.c.b16 %v2969, %v2965
        %v3718 = vpack.c.b16 %v2970, %v2966
        %v3719 = vpack.c.b16 %v2971, %v2967
        %v3720 = vpack.c.b16 %v2972, %v2968
        %v3721 = vpack.c.b16 %v2977, %v2973
        %v3722 = vpack.c.b16 %v2978, %v2974
        %v3723 = vpack.c.b16 %v2979, %v2975
        %v3724 = vpack.c.b16 %v2980, %v2976
        %v3725 = vpack.c.b16 %v2985, %v2981
        %v3726 = vpack.c.b16 %v2986, %v2982
        %v3727 = vpack.c.b16 %v2987, %v2983
        %v3728 = vpack.c.b16 %v2988, %v2984
        %v3729 = vpack.c.b16 %v2993, %v2989
        %v3730 = vpack.c.b16 %v2994, %v2990
        %v3731 = vpack.c.b16 %v2995, %v2991
        %v3732 = vpack.c.b16 %v2996, %v2992
        %v3733 = vpack.c.b16 %v3001, %v2997
        %v3734 = vpack.c.b16 %v3002, %v2998
        %v3735 = vpack.c.b16 %v3003, %v2999
        %v3736 = vpack.c.b16 %v3004, %v3000
        %v3737 = vpack.c.b16 %v3009, %v3005
        %v3738 = vpack.c.b16 %v3010, %v3006
        %v3739 = vpack.c.b16 %v3011, %v3007
        %v3740 = vpack.c.b16 %v3012, %v3008
        %v3741 = vpack.c.b16 %v3017, %v3013
        %v3742 = vpack.c.b16 %v3018, %v3014
        %v3743 = vpack.c.b16 %v3019, %v3015
        %v3744 = vpack.c.b16 %v3020, %v3016
        %v3745 = vpack.c.b16 %v3025, %v3021
        %v3746 = vpack.c.b16 %v3026, %v3022
        %v3747 = vpack.c.b16 %v3027, %v3023
        %v3748 = vpack.c.b16 %v3028, %v3024
        %v3749 = vpack.c.b16 %v3033, %v3029
        %v3750 = vpack.c.b16 %v3034, %v3030
        %v3751 = vpack.c.b16 %v3035, %v3031
        %v3752 = vpack.c.b16 %v3036, %v3032
        %v3753 = vpack.c.b16 %v3041, %v3037
        %v3754 = vpack.c.b16 %v3042, %v3038
        %v3755 = vpack.c.b16 %v3043, %v3039
        %v3756 = vpack.c.b16 %v3044, %v3040
        %v3757 = vpack.c.b16 %v3049, %v3045
        %v3758 = vpack.c.b16 %v3050, %v3046
        %v3759 = vpack.c.b16 %v3051, %v3047
        %v3760 = vpack.c.b16 %v3052, %v3048
        %v3761 = vpack.c.b16 %v3057, %v3053
        %v3762 = vpack.c.b16 %v3058, %v3054
        %v3763 = vpack.c.b16 %v3059, %v3055
        %v3764 = vpack.c.b16 %v3060, %v3056
        %v3765 = vpack.c.b16 %v3065, %v3061
        %v3766 = vpack.c.b16 %v3066, %v3062
        %v3767 = vpack.c.b16 %v3067, %v3063
        %v3768 = vpack.c.b16 %v3068, %v3064
        %v3769 = vpack.c.b16 %v3073, %v3069
        %v3770 = vpack.c.b16 %v3074, %v3070
        %v3771 = vpack.c.b16 %v3075, %v3071
        %v3772 = vpack.c.b16 %v3076, %v3072
        %v3773 = vpack.c.b16 %v3081, %v3077
        %v3774 = vpack.c.b16 %v3082, %v3078
        %v3775 = vpack.c.b16 %v3083, %v3079
        %v3776 = vpack.c.b16 %v3084, %v3080
        %v3777 = vpack.c.b16 %v3089, %v3085
        %v3778 = vpack.c.b16 %v3090, %v3086
        %v3779 = vpack.c.b16 %v3091, %v3087
        %v3780 = vpack.c.b16 %v3092, %v3088
        %v3781 = vpack.c.b16 %v3097, %v3093
        %v3782 = vpack.c.b16 %v3098, %v3094
        %v3783 = vpack.c.b16 %v3099, %v3095
        %v3784 = vpack.c.b16 %v3100, %v3096
        %v3785 = vpack.c.b16 %v3105, %v3101
        %v3786 = vpack.c.b16 %v3106, %v3102
        %v3787 = vpack.c.b16 %v3107, %v3103
        %v3788 = vpack.c.b16 %v3108, %v3104
        %v3789 = vpack.c.b16 %v3113, %v3109
        %v3790 = vpack.c.b16 %v3114, %v3110
        %v3791 = vpack.c.b16 %v3115, %v3111
        %v3792 = vpack.c.b16 %v3116, %v3112
        %v3793 = vpack.c.b16 %v3121, %v3117
        %v3794 = vpack.c.b16 %v3122, %v3118
        %v3795 = vpack.c.b16 %v3123, %v3119
        %v3796 = vpack.c.b16 %v3124, %v3120
        %v3797 = vpack.c.b16 %v3129, %v3125
        %v3798 = vpack.c.b16 %v3130, %v3126
        %v3799 = vpack.c.b16 %v3131, %v3127
        %v3800 = vpack.c.b16 %v3132, %v3128
        %v3801 = vpack.c.b16 %v3137, %v3133
        %v3802 = vpack.c.b16 %v3138, %v3134
        %v3803 = vpack.c.b16 %v3139, %v3135
        %v3804 = vpack.c.b16 %v3140, %v3136
        %v3805 = vpack.c.b16 %v3145, %v3141
        %v3806 = vpack.c.b16 %v3146, %v3142
        %v3807 = vpack.c.b16 %v3147, %v3143
        %v3808 = vpack.c.b16 %v3148, %v3144
        %v3809 = vpack.c.b16 %v3153, %v3149
        %v3810 = vpack.c.b16 %v3154, %v3150
        %v3811 = vpack.c.b16 %v3155, %v3151
        %v3812 = vpack.c.b16 %v3156, %v3152
        %v3813 = vpack.c.b16 %v3161, %v3157
        %v3814 = vpack.c.b16 %v3162, %v3158
        %v3815 = vpack.c.b16 %v3163, %v3159
        %v3816 = vpack.c.b16 %v3164, %v3160
        %v3817 = vpack.c.b16 %v3169, %v3165
        %v3818 = vpack.c.b16 %v3170, %v3166
        %v3819 = vpack.c.b16 %v3171, %v3167
        %v3820 = vpack.c.b16 %v3172, %v3168
        %v3821 = vpack.c.b16 %v3177, %v3173
        %v3822 = vpack.c.b16 %v3178, %v3174
        %v3823 = vpack.c.b16 %v3179, %v3175
        %v3824 = vpack.c.b16 %v3180, %v3176
        %v3825 = vpack.c.b16 %v3185, %v3181
        %v3826 = vpack.c.b16 %v3186, %v3182
        %v3827 = vpack.c.b16 %v3187, %v3183
        %v3828 = vpack.c.b16 %v3188, %v3184
        %v3829 = vpack.c.b16 %v3193, %v3189
        %v3830 = vpack.c.b16 %v3194, %v3190
        %v3831 = vpack.c.b16 %v3195, %v3191
        %v3832 = vpack.c.b16 %v3196, %v3192
        %v3833 = vpack.c.b16 %v3201, %v3197
        %v3834 = vpack.c.b16 %v3202, %v3198
        %v3835 = vpack.c.b16 %v3203, %v3199
        %v3836 = vpack.c.b16 %v3204, %v3200
        %v3837 = vpack.c.b16 %v3209, %v3205
        %v3838 = vpack.c.b16 %v3210, %v3206
        %v3839 = vpack.c.b16 %v3211, %v3207
        %v3840 = vpack.c.b16 %v3212, %v3208
        %v3841 = vpack.c.b16 %v3217, %v3213
        %v3842 = vpack.c.b16 %v3218, %v3214
        %v3843 = vpack.c.b16 %v3219, %v3215
        %v3844 = vpack.c.b16 %v3220, %v3216
        %v3845 = vpack.c.b16 %v3225, %v3221
        %v3846 = vpack.c.b16 %v3226, %v3222
        %v3847 = vpack.c.b16 %v3227, %v3223
        %v3848 = vpack.c.b16 %v3228, %v3224
        %v3849 = vpack.c.b16 %v3233, %v3229
        %v3850 = vpack.c.b16 %v3234, %v3230
        %v3851 = vpack.c.b16 %v3235, %v3231
        %v3852 = vpack.c.b16 %v3236, %v3232
        %v3853 = vpack.c.b16 %v3241, %v3237
        %v3854 = vpack.c.b16 %v3242, %v3238
        %v3855 = vpack.c.b16 %v3243, %v3239
        %v3856 = vpack.c.b16 %v3244, %v3240
        %v3857 = vpack.c.b16 %v3249, %v3245
        %v3858 = vpack.c.b16 %v3250, %v3246
        %v3859 = vpack.c.b16 %v3251, %v3247
        %v3860 = vpack.c.b16 %v3252, %v3248
        %v3861 = vpack.c.b16 %v3257, %v3253
        %v3862 = vpack.c.b16 %v3258, %v3254
        %v3863 = vpack.c.b16 %v3259, %v3255
        %v3864 = vpack.c.b16 %v3260, %v3256
        %v3865 = vpack.c.b16 %v3265, %v3261
        %v3866 = vpack.c.b16 %v3266, %v3262
        %v3867 = vpack.c.b16 %v3267, %v3263
        %v3868 = vpack.c.b16 %v3268, %v3264
        %v3869 = vpack.c.b16 %v3273, %v3269
        %v3870 = vpack.c.b16 %v3274, %v3270
        %v3871 = vpack.c.b16 %v3275, %v3271
        %v3872 = vpack.c.b16 %v3276, %v3272
        %v3873 = vpack.c.b16 %v3281, %v3277
        %v3874 = vpack.c.b16 %v3282, %v3278
        %v3875 = vpack.c.b16 %v3283, %v3279
        %v3876 = vpack.c.b16 %v3284, %v3280
        %v3877 = vpack.c.b16 %v3289, %v3285
        %v3878 = vpack.c.b16 %v3290, %v3286
        %v3879 = vpack.c.b16 %v3291, %v3287
        %v3880 = vpack.c.b16 %v3292, %v3288
        %v3881 = vpack.c.b16 %v3297, %v3293
        %v3882 = vpack.c.b16 %v3298, %v3294
        %v3883 = vpack.c.b16 %v3299, %v3295
        %v3884 = vpack.c.b16 %v3300, %v3296
        %v3885 = vpack.c.b16 %v3305, %v3301
        %v3886 = vpack.c.b16 %v3306, %v3302
        %v3887 = vpack.c.b16 %v3307, %v3303
        %v3888 = vpack.c.b16 %v3308, %v3304
        %v3889 = vpack.c.b16 %v3313, %v3309
        %v3890 = vpack.c.b16 %v3314, %v3310
        %v3891 = vpack.c.b16 %v3315, %v3311
        %v3892 = vpack.c.b16 %v3316, %v3312
        %v3893 = vpack.c.b16 %v3321, %v3317
        %v3894 = vpack.c.b16 %v3322, %v3318
        %v3895 = vpack.c.b16 %v3323, %v3319
        %v3896 = vpack.c.b16 %v3324, %v3320
        %v3897 = vpack.c.b16 %v3329, %v3325
        %v3898 = vpack.c.b16 %v3330, %v3326
        %v3899 = vpack.c.b16 %v3331, %v3327
        %v3900 = vpack.c.b16 %v3332, %v3328
        %v3901 = vpack.c.b16 %v3337, %v3333
        %v3902 = vpack.c.b16 %v3338, %v3334
        %v3903 = vpack.c.b16 %v3339, %v3335
        %v3904 = vpack.c.b16 %v3340, %v3336
        %v3905 = vpack.c.b16 %v3345, %v3341
        %v3906 = vpack.c.b16 %v3346, %v3342
        %v3907 = vpack.c.b16 %v3347, %v3343
        %v3908 = vpack.c.b16 %v3348, %v3344
        %v3909 = vpack.c.b16 %v3353, %v3349
        %v3910 = vpack.c.b16 %v3354, %v3350
        %v3911 = vpack.c.b16 %v3355, %v3351
        %v3912 = vpack.c.b16 %v3356, %v3352
        %v3913 = vpack.c.b16 %v3361, %v3357
        %v3914 = vpack.c.b16 %v3362, %v3358
        %v3915 = vpack.c.b16 %v3363, %v3359
        %v3916 = vpack.c.b16 %v3364, %v3360
        %v3917 = vpack.c.b16 %v3369, %v3365
        %v3918 = vpack.c.b16 %v3370, %v3366
        %v3919 = vpack.c.b16 %v3371, %v3367
        %v3920 = vpack.c.b16 %v3372, %v3368
        %v3921 = vpack.c.b16 %v3377, %v3373
        %v3922 = vpack.c.b16 %v3378, %v3374
        %v3923 = vpack.c.b16 %v3379, %v3375
        %v3924 = vpack.c.b16 %v3380, %v3376
        %v3925 = vpack.c.b16 %v3385, %v3381
        %v3926 = vpack.c.b16 %v3386, %v3382
        %v3927 = vpack.c.b16 %v3387, %v3383
        %v3928 = vpack.c.b16 %v3388, %v3384
        %v3929 = vpack.c.b16 %v3393, %v3389
        %v3930 = vpack.c.b16 %v3394, %v3390
        %v3931 = vpack.c.b16 %v3395, %v3391
        %v3932 = vpack.c.b16 %v3396, %v3392
        %v3933 = vpack.c.b16 %v3401, %v3397
        %v3934 = vpack.c.b16 %v3402, %v3398
        %v3935 = vpack.c.b16 %v3403, %v3399
        %v3936 = vpack.c.b16 %v3404, %v3400
        %v3937 = vpack.c.b16 %v3409, %v3405
        %v3938 = vpack.c.b16 %v3410, %v3406
        %v3939 = vpack.c.b16 %v3411, %v3407
        %v3940 = vpack.c.b16 %v3412, %v3408
        %v3941 = vpack.c.b16 %v3417, %v3413
        %v3942 = vpack.c.b16 %v3418, %v3414
        %v3943 = vpack.c.b16 %v3419, %v3415
        %v3944 = vpack.c.b16 %v3420, %v3416
        %v3945 = vpack.c.b16 %v3425, %v3421
        %v3946 = vpack.c.b16 %v3426, %v3422
        %v3947 = vpack.c.b16 %v3427, %v3423
        %v3948 = vpack.c.b16 %v3428, %v3424
        %v3949 = vpack.c.b16 %v3433, %v3429
        %v3950 = vpack.c.b16 %v3434, %v3430
        %v3951 = vpack.c.b16 %v3435, %v3431
        %v3952 = vpack.c.b16 %v3436, %v3432
        %v3953 = vpack.c.b16 %v3441, %v3437
        %v3954 = vpack.c.b16 %v3442, %v3438
        %v3955 = vpack.c.b16 %v3443, %v3439
        %v3956 = vpack.c.b16 %v3444, %v3440
        %4469 = vmatprep.subr.bf16.mxu0 %v3446
        %4470 = vmatpush1.bf16.msra.mxu0 %v3445
        %4471 = vmatprep.subr.bf16.mxu0 %v3450
        %4472 = vmatpush1.bf16.msra.mxu0 %v3449
        %4473 = vmatprep.subr.bf16.mxu0 %v3454
        %4474 = vmatpush1.bf16.msra.mxu0 %v3453
        %4475 = vmatprep.subr.bf16.mxu0 %v3458
        %4476 = vmatpush1.bf16.msra.mxu0 %v3457
        %4477 = vmatprep.subr.bf16.mxu0 %v3462
        %4478 = vmatpush1.bf16.msra.mxu0 %v3461
        %4479 = vmatprep.subr.bf16.mxu0 %v3466
        %4480 = vmatpush1.bf16.msra.mxu0 %v3465
        %4481 = vmatprep.subr.bf16.mxu0 %v3470
        %4482 = vmatpush1.bf16.msra.mxu0 %v3469
        %4483 = vmatprep.subr.bf16.mxu0 %v3474
        %4484 = vmatpush1.bf16.msra.mxu0 %v3473
        %4485 = vmatprep.subr.bf16.mxu0 %v3478
        %4486 = vmatpush1.bf16.msra.mxu0 %v3477
        %4487 = vmatprep.subr.bf16.mxu0 %v3482
        %4488 = vmatpush1.bf16.msra.mxu0 %v3481
        %4489 = vmatprep.subr.bf16.mxu0 %v3486
        %4490 = vmatpush1.bf16.msra.mxu0 %v3485
        %4491 = vmatprep.subr.bf16.mxu0 %v3490
        %4492 = vmatpush1.bf16.msra.mxu0 %v3489
        %4493 = vmatprep.subr.bf16.mxu0 %v3494
        %4494 = vmatpush1.bf16.msra.mxu0 %v3493
        %4495 = vmatprep.subr.bf16.mxu0 %v3498
        %4496 = vmatpush1.bf16.msra.mxu0 %v3497
        %4497 = vmatprep.subr.bf16.mxu0 %v3502
        %4498 = vmatpush1.bf16.msra.mxu0 %v3501
        %4499 = vmatprep.subr.bf16.mxu0 %v3506
        %4500 = vmatpush1.bf16.msra.mxu0 %v3505
        %4501 = vmatprep.mubr.bf16.mxu0 %v1878
        %4502 = vmatmul.mubr.bf16.gmra.mrb[0].mxu0 %v1877
        %v4503 = vpop.f32.mrb[0].mxu0
        %v4504 = vadd.f32 0.0, %v4503
        %v4505 = vpop.f32.mrb[0].mxu0
        %v4506 = vadd.f32 0.0, %v4505
        %v4507 = vpop.f32.mrb[0].mxu0
        %v4508 = vpop.f32.mrb[0].mxu0
        %4509 = vdwg.mxu0
        %4510 = vmatprep.subr.bf16.mxu0 %v3510
        %4511 = vmatpush1.bf16.msra.mxu0 %v3509
        %4512 = vmatprep.subr.bf16.mxu0 %v3514
        %4513 = vmatpush1.bf16.msra.mxu0 %v3513
        %4514 = vmatprep.subr.bf16.mxu0 %v3518
        %4515 = vmatpush1.bf16.msra.mxu0 %v3517
        %4516 = vmatprep.subr.bf16.mxu0 %v3522
        %4517 = vmatpush1.bf16.msra.mxu0 %v3521
        %4518 = vmatprep.subr.bf16.mxu0 %v3526
        %4519 = vmatpush1.bf16.msra.mxu0 %v3525
        %4520 = vmatprep.subr.bf16.mxu0 %v3530
        %4521 = vmatpush1.bf16.msra.mxu0 %v3529
        %4522 = vmatprep.subr.bf16.mxu0 %v3534
        %4523 = vmatpush1.bf16.msra.mxu0 %v3533
        %4524 = vmatprep.subr.bf16.mxu0 %v3538
        %4525 = vmatpush1.bf16.msra.mxu0 %v3537
        %4526 = vmatprep.subr.bf16.mxu0 %v3542
        %4527 = vmatpush1.bf16.msra.mxu0 %v3541
        %4528 = vmatprep.subr.bf16.mxu0 %v3546
        %4529 = vmatpush1.bf16.msra.mxu0 %v3545
        %4530 = vmatprep.subr.bf16.mxu0 %v3550
        %4531 = vmatpush1.bf16.msra.mxu0 %v3549
        %4532 = vmatprep.subr.bf16.mxu0 %v3554
        %4533 = vmatpush1.bf16.msra.mxu0 %v3553
        %4534 = vmatprep.subr.bf16.mxu0 %v3558
        %4535 = vmatpush1.bf16.msra.mxu0 %v3557
        %4536 = vmatprep.subr.bf16.mxu0 %v3562
        %4537 = vmatpush1.bf16.msra.mxu0 %v3561
        %4538 = vmatprep.subr.bf16.mxu0 %v3566
        %4539 = vmatpush1.bf16.msra.mxu0 %v3565
        %4540 = vmatprep.subr.bf16.mxu0 %v3570
        %4541 = vmatpush1.bf16.msra.mxu0 %v3569
        %4542 = vmatprep.mubr.bf16.mxu0 %v1880
        %4543 = vmatmul.mubr.bf16.gmra.mrb[0].mxu0 %v1879
        %v4544 = vpop.f32.mrb[0].mxu0
        %v4545 = vadd.f32 %v4504, %v4544
        %v4546 = vpop.f32.mrb[0].mxu0
        %v4547 = vadd.f32 %v4506, %v4546
        %v4548 = vpop.f32.mrb[0].mxu0
        %v4549 = vpop.f32.mrb[0].mxu0
        %4550 = vdwg.mxu0
        %4551 = vmatprep.subr.bf16.mxu0 %v3574
        %4552 = vmatpush1.bf16.msra.mxu0 %v3573
        %4553 = vmatprep.subr.bf16.mxu0 %v3578
        %4554 = vmatpush1.bf16.msra.mxu0 %v3577
        %4555 = vmatprep.subr.bf16.mxu0 %v3582
        %4556 = vmatpush1.bf16.msra.mxu0 %v3581
        %4557 = vmatprep.subr.bf16.mxu0 %v3586
        %4558 = vmatpush1.bf16.msra.mxu0 %v3585
        %4559 = vmatprep.subr.bf16.mxu0 %v3590
        %4560 = vmatpush1.bf16.msra.mxu0 %v3589
        %4561 = vmatprep.subr.bf16.mxu0 %v3594
        %4562 = vmatpush1.bf16.msra.mxu0 %v3593
        %4563 = vmatprep.subr.bf16.mxu0 %v3598
        %4564 = vmatpush1.bf16.msra.mxu0 %v3597
        %4565 = vmatprep.subr.bf16.mxu0 %v3602
        %4566 = vmatpush1.bf16.msra.mxu0 %v3601
        %4567 = vmatprep.subr.bf16.mxu0 %v3606
        %4568 = vmatpush1.bf16.msra.mxu0 %v3605
        %4569 = vmatprep.subr.bf16.mxu0 %v3610
        %4570 = vmatpush1.bf16.msra.mxu0 %v3609
        %4571 = vmatprep.subr.bf16.mxu0 %v3614
        %4572 = vmatpush1.bf16.msra.mxu0 %v3613
        %4573 = vmatprep.subr.bf16.mxu0 %v3618
        %4574 = vmatpush1.bf16.msra.mxu0 %v3617
        %4575 = vmatprep.subr.bf16.mxu0 %v3622
        %4576 = vmatpush1.bf16.msra.mxu0 %v3621
        %4577 = vmatprep.subr.bf16.mxu0 %v3626
        %4578 = vmatpush1.bf16.msra.mxu0 %v3625
        %4579 = vmatprep.subr.bf16.mxu0 %v3630
        %4580 = vmatpush1.bf16.msra.mxu0 %v3629
        %4581 = vmatprep.subr.bf16.mxu0 %v3634
        %4582 = vmatpush1.bf16.msra.mxu0 %v3633
        %4583 = vmatprep.mubr.bf16.mxu0 %v1882
        %4584 = vmatmul.mubr.bf16.gmra.mrb[0].mxu0 %v1881
        %v4585 = vpop.f32.mrb[0].mxu0
        %v4586 = vadd.f32 %v4545, %v4585
        %v4587 = vpop.f32.mrb[0].mxu0
        %v4588 = vadd.f32 %v4547, %v4587
        %v4589 = vpop.f32.mrb[0].mxu0
        %v4590 = vpop.f32.mrb[0].mxu0
        %4591 = vdwg.mxu0
        %4592 = vmatprep.subr.bf16.mxu0 %v3638
        %4593 = vmatpush1.bf16.msra.mxu0 %v3637
        %4594 = vmatprep.subr.bf16.mxu0 %v3642
        %4595 = vmatpush1.bf16.msra.mxu0 %v3641
        %4596 = vmatprep.subr.bf16.mxu0 %v3646
        %4597 = vmatpush1.bf16.msra.mxu0 %v3645
        %4598 = vmatprep.subr.bf16.mxu0 %v3650
        %4599 = vmatpush1.bf16.msra.mxu0 %v3649
        %4600 = vmatprep.subr.bf16.mxu0 %v3654
        %4601 = vmatpush1.bf16.msra.mxu0 %v3653
        %4602 = vmatprep.subr.bf16.mxu0 %v3658
        %4603 = vmatpush1.bf16.msra.mxu0 %v3657
        %4604 = vmatprep.subr.bf16.mxu0 %v3662
        %4605 = vmatpush1.bf16.msra.mxu0 %v3661
        %4606 = vmatprep.subr.bf16.mxu0 %v3666
        %4607 = vmatpush1.bf16.msra.mxu0 %v3665
        %4608 = vmatprep.subr.bf16.mxu0 %v3670
        %4609 = vmatpush1.bf16.msra.mxu0 %v3669
        %4610 = vmatprep.subr.bf16.mxu0 %v3674
        %4611 = vmatpush1.bf16.msra.mxu0 %v3673
        %4612 = vmatprep.subr.bf16.mxu0 %v3678
        %4613 = vmatpush1.bf16.msra.mxu0 %v3677
        %4614 = vmatprep.subr.bf16.mxu0 %v3682
        %4615 = vmatpush1.bf16.msra.mxu0 %v3681
        %4616 = vmatprep.subr.bf16.mxu0 %v3686
        %4617 = vmatpush1.bf16.msra.mxu0 %v3685
        %4618 = vmatprep.subr.bf16.mxu0 %v3690
        %4619 = vmatpush1.bf16.msra.mxu0 %v3689
        %4620 = vmatprep.subr.bf16.mxu0 %v3694
        %4621 = vmatpush1.bf16.msra.mxu0 %v3693
        %4622 = vmatprep.subr.bf16.mxu0 %v3698
        %4623 = vmatpush1.bf16.msra.mxu0 %v3697
        %4624 = vmatprep.mubr.bf16.mxu0 %v1884
        %4625 = vmatmul.mubr.bf16.gmra.mrb[0].mxu0 %v1883
        %v4626 = vpop.f32.mrb[0].mxu0
        %v4627 = vadd.f32 %v4586, %v4626
        %v4628 = vpop.f32.mrb[0].mxu0
        %v4629 = vadd.f32 %v4588, %v4628
        %v4630 = vpop.f32.mrb[0].mxu0
        %v4631 = vpop.f32.mrb[0].mxu0
        %4632 = vdwg.mxu0
        %4633 = vmatprep.subr.bf16.mxu0 %v3702
        %4634 = vmatpush1.bf16.msra.mxu0 %v3701
        %4635 = vmatprep.subr.bf16.mxu0 %v3706
        %4636 = vmatpush1.bf16.msra.mxu0 %v3705
        %4637 = vmatprep.subr.bf16.mxu0 %v3710
        %4638 = vmatpush1.bf16.msra.mxu0 %v3709
        %4639 = vmatprep.subr.bf16.mxu0 %v3714
        %4640 = vmatpush1.bf16.msra.mxu0 %v3713
        %4641 = vmatprep.subr.bf16.mxu0 %v3718
        %4642 = vmatpush1.bf16.msra.mxu0 %v3717
        %4643 = vmatprep.subr.bf16.mxu0 %v3722
        %4644 = vmatpush1.bf16.msra.mxu0 %v3721
        %4645 = vmatprep.subr.bf16.mxu0 %v3726
        %4646 = vmatpush1.bf16.msra.mxu0 %v3725
        %4647 = vmatprep.subr.bf16.mxu0 %v3730
        %4648 = vmatpush1.bf16.msra.mxu0 %v3729
        %4649 = vmatprep.subr.bf16.mxu0 %v3734
        %4650 = vmatpush1.bf16.msra.mxu0 %v3733
        %4651 = vmatprep.subr.bf16.mxu0 %v3738
        %4652 = vmatpush1.bf16.msra.mxu0 %v3737
        %4653 = vmatprep.subr.bf16.mxu0 %v3742
        %4654 = vmatpush1.bf16.msra.mxu0 %v3741
        %4655 = vmatprep.subr.bf16.mxu0 %v3746
        %4656 = vmatpush1.bf16.msra.mxu0 %v3745
        %4657 = vmatprep.subr.bf16.mxu0 %v3750
        %4658 = vmatpush1.bf16.msra.mxu0 %v3749
        %4659 = vmatprep.subr.bf16.mxu0 %v3754
        %4660 = vmatpush1.bf16.msra.mxu0 %v3753
        %4661 = vmatprep.subr.bf16.mxu0 %v3758
        %4662 = vmatpush1.bf16.msra.mxu0 %v3757
        %4663 = vmatprep.subr.bf16.mxu0 %v3762
        %4664 = vmatpush1.bf16.msra.mxu0 %v3761
        %4665 = vmatprep.mubr.bf16.mxu0 %v1886
        %4666 = vmatmul.mubr.bf16.gmra.mrb[0].mxu0 %v1885
        %v4667 = vpop.f32.mrb[0].mxu0
        %v4668 = vadd.f32 %v4627, %v4667
        %v4669 = vpop.f32.mrb[0].mxu0
        %v4670 = vadd.f32 %v4629, %v4669
        %v4671 = vpop.f32.mrb[0].mxu0
        %v4672 = vpop.f32.mrb[0].mxu0
        %4673 = vdwg.mxu0
        %4674 = vmatprep.subr.bf16.mxu0 %v3766
        %4675 = vmatpush1.bf16.msra.mxu0 %v3765
        %4676 = vmatprep.subr.bf16.mxu0 %v3770
        %4677 = vmatpush1.bf16.msra.mxu0 %v3769
        %4678 = vmatprep.subr.bf16.mxu0 %v3774
        %4679 = vmatpush1.bf16.msra.mxu0 %v3773
        %4680 = vmatprep.subr.bf16.mxu0 %v3778
        %4681 = vmatpush1.bf16.msra.mxu0 %v3777
        %4682 = vmatprep.subr.bf16.mxu0 %v3782
        %4683 = vmatpush1.bf16.msra.mxu0 %v3781
        %4684 = vmatprep.subr.bf16.mxu0 %v3786
        %4685 = vmatpush1.bf16.msra.mxu0 %v3785
        %4686 = vmatprep.subr.bf16.mxu0 %v3790
        %4687 = vmatpush1.bf16.msra.mxu0 %v3789
        %4688 = vmatprep.subr.bf16.mxu0 %v3794
        %4689 = vmatpush1.bf16.msra.mxu0 %v3793
        %4690 = vmatprep.subr.bf16.mxu0 %v3798
        %4691 = vmatpush1.bf16.msra.mxu0 %v3797
        %4692 = vmatprep.subr.bf16.mxu0 %v3802
        %4693 = vmatpush1.bf16.msra.mxu0 %v3801
        %4694 = vmatprep.subr.bf16.mxu0 %v3806
        %4695 = vmatpush1.bf16.msra.mxu0 %v3805
        %4696 = vmatprep.subr.bf16.mxu0 %v3810
        %4697 = vmatpush1.bf16.msra.mxu0 %v3809
        %4698 = vmatprep.subr.bf16.mxu0 %v3814
        %4699 = vmatpush1.bf16.msra.mxu0 %v3813
        %4700 = vmatprep.subr.bf16.mxu0 %v3818
        %4701 = vmatpush1.bf16.msra.mxu0 %v3817
        %4702 = vmatprep.subr.bf16.mxu0 %v3822
        %4703 = vmatpush1.bf16.msra.mxu0 %v3821
        %4704 = vmatprep.subr.bf16.mxu0 %v3826
        %4705 = vmatpush1.bf16.msra.mxu0 %v3825
        %4706 = vmatprep.mubr.bf16.mxu0 %v1888
        %4707 = vmatmul.mubr.bf16.gmra.mrb[0].mxu0 %v1887
        %v4708 = vpop.f32.mrb[0].mxu0
        %v4709 = vadd.f32 %v4668, %v4708
        %v4710 = vpop.f32.mrb[0].mxu0
        %v4711 = vadd.f32 %v4670, %v4710
        %v4712 = vpop.f32.mrb[0].mxu0
        %v4713 = vpop.f32.mrb[0].mxu0
        %4714 = vdwg.mxu0
        %4715 = vmatprep.subr.bf16.mxu0 %v3830
        %4716 = vmatpush1.bf16.msra.mxu0 %v3829
        %4717 = vmatprep.subr.bf16.mxu0 %v3834
        %4718 = vmatpush1.bf16.msra.mxu0 %v3833
        %4719 = vmatprep.subr.bf16.mxu0 %v3838
        %4720 = vmatpush1.bf16.msra.mxu0 %v3837
        %4721 = vmatprep.subr.bf16.mxu0 %v3842
        %4722 = vmatpush1.bf16.msra.mxu0 %v3841
        %4723 = vmatprep.subr.bf16.mxu0 %v3846
        %4724 = vmatpush1.bf16.msra.mxu0 %v3845
        %4725 = vmatprep.subr.bf16.mxu0 %v3850
        %4726 = vmatpush1.bf16.msra.mxu0 %v3849
        %4727 = vmatprep.subr.bf16.mxu0 %v3854
        %4728 = vmatpush1.bf16.msra.mxu0 %v3853
        %4729 = vmatprep.subr.bf16.mxu0 %v3858
        %4730 = vmatpush1.bf16.msra.mxu0 %v3857
        %4731 = vmatprep.subr.bf16.mxu0 %v3862
        %4732 = vmatpush1.bf16.msra.mxu0 %v3861
        %4733 = vmatprep.subr.bf16.mxu0 %v3866
        %4734 = vmatpush1.bf16.msra.mxu0 %v3865
        %4735 = vmatprep.subr.bf16.mxu0 %v3870
        %4736 = vmatpush1.bf16.msra.mxu0 %v3869
        %4737 = vmatprep.subr.bf16.mxu0 %v3874
        %4738 = vmatpush1.bf16.msra.mxu0 %v3873
        %4739 = vmatprep.subr.bf16.mxu0 %v3878
        %4740 = vmatpush1.bf16.msra.mxu0 %v3877
        %4741 = vmatprep.subr.bf16.mxu0 %v3882
        %4742 = vmatpush1.bf16.msra.mxu0 %v3881
        %4743 = vmatprep.subr.bf16.mxu0 %v3886
        %4744 = vmatpush1.bf16.msra.mxu0 %v3885
        %4745 = vmatprep.subr.bf16.mxu0 %v3890
        %4746 = vmatpush1.bf16.msra.mxu0 %v3889
        %4747 = vmatprep.mubr.bf16.mxu0 %v1890
        %4748 = vmatmul.mubr.bf16.gmra.mrb[0].mxu0 %v1889
        %v4749 = vpop.f32.mrb[0].mxu0
        %v4750 = vadd.f32 %v4709, %v4749
        %v4751 = vpop.f32.mrb[0].mxu0
        %v4752 = vadd.f32 %v4711, %v4751
        %v4753 = vpop.f32.mrb[0].mxu0
        %v4754 = vpop.f32.mrb[0].mxu0
        %4755 = vdwg.mxu0
        %4756 = vmatprep.subr.bf16.mxu0 %v3894
        %4757 = vmatpush1.bf16.msra.mxu0 %v3893
        %4758 = vmatprep.subr.bf16.mxu0 %v3898
        %4759 = vmatpush1.bf16.msra.mxu0 %v3897
        %4760 = vmatprep.subr.bf16.mxu0 %v3902
        %4761 = vmatpush1.bf16.msra.mxu0 %v3901
        %4762 = vmatprep.subr.bf16.mxu0 %v3906
        %4763 = vmatpush1.bf16.msra.mxu0 %v3905
        %4764 = vmatprep.subr.bf16.mxu0 %v3910
        %4765 = vmatpush1.bf16.msra.mxu0 %v3909
        %4766 = vmatprep.subr.bf16.mxu0 %v3914
        %4767 = vmatpush1.bf16.msra.mxu0 %v3913
        %4768 = vmatprep.subr.bf16.mxu0 %v3918
        %4769 = vmatpush1.bf16.msra.mxu0 %v3917
        %4770 = vmatprep.subr.bf16.mxu0 %v3922
        %4771 = vmatpush1.bf16.msra.mxu0 %v3921
        %4772 = vmatprep.subr.bf16.mxu0 %v3926
        %4773 = vmatpush1.bf16.msra.mxu0 %v3925
        %4774 = vmatprep.subr.bf16.mxu0 %v3930
        %4775 = vmatpush1.bf16.msra.mxu0 %v3929
        %4776 = vmatprep.subr.bf16.mxu0 %v3934
        %4777 = vmatpush1.bf16.msra.mxu0 %v3933
        %4778 = vmatprep.subr.bf16.mxu0 %v3938
        %4779 = vmatpush1.bf16.msra.mxu0 %v3937
        %4780 = vmatprep.subr.bf16.mxu0 %v3942
        %4781 = vmatpush1.bf16.msra.mxu0 %v3941
        %4782 = vmatprep.subr.bf16.mxu0 %v3946
        %4783 = vmatpush1.bf16.msra.mxu0 %v3945
        %4784 = vmatprep.subr.bf16.mxu0 %v3950
        %4785 = vmatpush1.bf16.msra.mxu0 %v3949
        %4786 = vmatprep.subr.bf16.mxu0 %v3954
        %4787 = vmatpush1.bf16.msra.mxu0 %v3953
        %4788 = vmatprep.mubr.bf16.mxu0 %v1892
        %4789 = vmatmul.mubr.bf16.gmra.mrb[0].mxu0 %v1891
        %v4790 = vpop.f32.mrb[0].mxu0
        %v4791 = vadd.f32 %v4750, %v4790
        %v4792 = vpop.f32.mrb[0].mxu0
        %v4793 = vadd.f32 %v4752, %v4792
        %v4794 = vpop.f32.mrb[0].mxu0
        %v4795 = vpop.f32.mrb[0].mxu0
        %4796 = vdwg.mxu0
        %4797 = vmatprep.subr.bf16.mxu0 %v3448
        %4798 = vmatpush1.bf16.msra.mxu0 %v3447
        %4799 = vmatprep.subr.bf16.mxu0 %v3452
        %4800 = vmatpush1.bf16.msra.mxu0 %v3451
        %4801 = vmatprep.subr.bf16.mxu0 %v3456
        %4802 = vmatpush1.bf16.msra.mxu0 %v3455
        %4803 = vmatprep.subr.bf16.mxu0 %v3460
        %4804 = vmatpush1.bf16.msra.mxu0 %v3459
        %4805 = vmatprep.subr.bf16.mxu0 %v3464
        %4806 = vmatpush1.bf16.msra.mxu0 %v3463
        %4807 = vmatprep.subr.bf16.mxu0 %v3468
        %4808 = vmatpush1.bf16.msra.mxu0 %v3467
        %4809 = vmatprep.subr.bf16.mxu0 %v3472
        %4810 = vmatpush1.bf16.msra.mxu0 %v3471
        %4811 = vmatprep.subr.bf16.mxu0 %v3476
        %4812 = vmatpush1.bf16.msra.mxu0 %v3475
        %4813 = vmatprep.subr.bf16.mxu0 %v3480
        %4814 = vmatpush1.bf16.msra.mxu0 %v3479
        %4815 = vmatprep.subr.bf16.mxu0 %v3484
        %4816 = vmatpush1.bf16.msra.mxu0 %v3483
        %4817 = vmatprep.subr.bf16.mxu0 %v3488
        %4818 = vmatpush1.bf16.msra.mxu0 %v3487
        %4819 = vmatprep.subr.bf16.mxu0 %v3492
        %4820 = vmatpush1.bf16.msra.mxu0 %v3491
        %4821 = vmatprep.subr.bf16.mxu0 %v3496
        %4822 = vmatpush1.bf16.msra.mxu0 %v3495
        %4823 = vmatprep.subr.bf16.mxu0 %v3500
        %4824 = vmatpush1.bf16.msra.mxu0 %v3499
        %4825 = vmatprep.subr.bf16.mxu0 %v3504
        %4826 = vmatpush1.bf16.msra.mxu0 %v3503
        %4827 = vmatprep.subr.bf16.mxu0 %v3508
        %4828 = vmatpush1.bf16.msra.mxu0 %v3507
        %4829 = vmatprep.mubr.bf16.mxu0 %v1878
        %4830 = vmatmul.mubr.bf16.gmra.mrb[0].mxu0 %v1877
        %v4831 = vpop.f32.mrb[0].mxu0
        %v4832 = vadd.f32 0.0, %v4831
        %v4833 = vpop.f32.mrb[0].mxu0
        %v4834 = vadd.f32 0.0, %v4833
        %v4835 = vpop.f32.mrb[0].mxu0
        %v4836 = vpop.f32.mrb[0].mxu0
        %4837 = vdwg.mxu0
        %4838 = vmatprep.subr.bf16.mxu0 %v3512
        %4839 = vmatpush1.bf16.msra.mxu0 %v3511
        %4840 = vmatprep.subr.bf16.mxu0 %v3516
        %4841 = vmatpush1.bf16.msra.mxu0 %v3515
        %4842 = vmatprep.subr.bf16.mxu0 %v3520
        %4843 = vmatpush1.bf16.msra.mxu0 %v3519
        %4844 = vmatprep.subr.bf16.mxu0 %v3524
        %4845 = vmatpush1.bf16.msra.mxu0 %v3523
        %4846 = vmatprep.subr.bf16.mxu0 %v3528
        %4847 = vmatpush1.bf16.msra.mxu0 %v3527
        %4848 = vmatprep.subr.bf16.mxu0 %v3532
        %4849 = vmatpush1.bf16.msra.mxu0 %v3531
        %4850 = vmatprep.subr.bf16.mxu0 %v3536
        %4851 = vmatpush1.bf16.msra.mxu0 %v3535
        %4852 = vmatprep.subr.bf16.mxu0 %v3540
        %4853 = vmatpush1.bf16.msra.mxu0 %v3539
        %4854 = vmatprep.subr.bf16.mxu0 %v3544
        %4855 = vmatpush1.bf16.msra.mxu0 %v3543
        %4856 = vmatprep.subr.bf16.mxu0 %v3548
        %4857 = vmatpush1.bf16.msra.mxu0 %v3547
        %4858 = vmatprep.subr.bf16.mxu0 %v3552
        %4859 = vmatpush1.bf16.msra.mxu0 %v3551
        %4860 = vmatprep.subr.bf16.mxu0 %v3556
        %4861 = vmatpush1.bf16.msra.mxu0 %v3555
        %4862 = vmatprep.subr.bf16.mxu0 %v3560
        %4863 = vmatpush1.bf16.msra.mxu0 %v3559
        %4864 = vmatprep.subr.bf16.mxu0 %v3564
        %4865 = vmatpush1.bf16.msra.mxu0 %v3563
        %4866 = vmatprep.subr.bf16.mxu0 %v3568
        %4867 = vmatpush1.bf16.msra.mxu0 %v3567
        %4868 = vmatprep.subr.bf16.mxu0 %v3572
        %4869 = vmatpush1.bf16.msra.mxu0 %v3571
        %4870 = vmatprep.mubr.bf16.mxu0 %v1880
        %4871 = vmatmul.mubr.bf16.gmra.mrb[0].mxu0 %v1879
        %v4872 = vpop.f32.mrb[0].mxu0
        %v4873 = vadd.f32 %v4832, %v4872
        %v4874 = vpop.f32.mrb[0].mxu0
        %v4875 = vadd.f32 %v4834, %v4874
        %v4876 = vpop.f32.mrb[0].mxu0
        %v4877 = vpop.f32.mrb[0].mxu0
        %4878 = vdwg.mxu0
        %4879 = vmatprep.subr.bf16.mxu0 %v3576
        %4880 = vmatpush1.bf16.msra.mxu0 %v3575
        %4881 = vmatprep.subr.bf16.mxu0 %v3580
        %4882 = vmatpush1.bf16.msra.mxu0 %v3579
        %4883 = vmatprep.subr.bf16.mxu0 %v3584
        %4884 = vmatpush1.bf16.msra.mxu0 %v3583
        %4885 = vmatprep.subr.bf16.mxu0 %v3588
        %4886 = vmatpush1.bf16.msra.mxu0 %v3587
        %4887 = vmatprep.subr.bf16.mxu0 %v3592
        %4888 = vmatpush1.bf16.msra.mxu0 %v3591
        %4889 = vmatprep.subr.bf16.mxu0 %v3596
        %4890 = vmatpush1.bf16.msra.mxu0 %v3595
        %4891 = vmatprep.subr.bf16.mxu0 %v3600
        %4892 = vmatpush1.bf16.msra.mxu0 %v3599
        %4893 = vmatprep.subr.bf16.mxu0 %v3604
        %4894 = vmatpush1.bf16.msra.mxu0 %v3603
        %4895 = vmatprep.subr.bf16.mxu0 %v3608
        %4896 = vmatpush1.bf16.msra.mxu0 %v3607
        %4897 = vmatprep.subr.bf16.mxu0 %v3612
        %4898 = vmatpush1.bf16.msra.mxu0 %v3611
        %4899 = vmatprep.subr.bf16.mxu0 %v3616
        %4900 = vmatpush1.bf16.msra.mxu0 %v3615
        %4901 = vmatprep.subr.bf16.mxu0 %v3620
        %4902 = vmatpush1.bf16.msra.mxu0 %v3619
        %4903 = vmatprep.subr.bf16.mxu0 %v3624
        %4904 = vmatpush1.bf16.msra.mxu0 %v3623
        %4905 = vmatprep.subr.bf16.mxu0 %v3628
        %4906 = vmatpush1.bf16.msra.mxu0 %v3627
        %4907 = vmatprep.subr.bf16.mxu0 %v3632
        %4908 = vmatpush1.bf16.msra.mxu0 %v3631
        %4909 = vmatprep.subr.bf16.mxu0 %v3636
        %4910 = vmatpush1.bf16.msra.mxu0 %v3635
        %4911 = vmatprep.mubr.bf16.mxu0 %v1882
        %4912 = vmatmul.mubr.bf16.gmra.mrb[0].mxu0 %v1881
        %v4913 = vpop.f32.mrb[0].mxu0
        %v4914 = vadd.f32 %v4873, %v4913
        %v4915 = vpop.f32.mrb[0].mxu0
        %v4916 = vadd.f32 %v4875, %v4915
        %v4917 = vpop.f32.mrb[0].mxu0
        %v4918 = vpop.f32.mrb[0].mxu0
        %4919 = vdwg.mxu0
        %4920 = vmatprep.subr.bf16.mxu0 %v3640
        %4921 = vmatpush1.bf16.msra.mxu0 %v3639
        %4922 = vmatprep.subr.bf16.mxu0 %v3644
        %4923 = vmatpush1.bf16.msra.mxu0 %v3643
        %4924 = vmatprep.subr.bf16.mxu0 %v3648
        %4925 = vmatpush1.bf16.msra.mxu0 %v3647
        %4926 = vmatprep.subr.bf16.mxu0 %v3652
        %4927 = vmatpush1.bf16.msra.mxu0 %v3651
        %4928 = vmatprep.subr.bf16.mxu0 %v3656
        %4929 = vmatpush1.bf16.msra.mxu0 %v3655
        %4930 = vmatprep.subr.bf16.mxu0 %v3660
        %4931 = vmatpush1.bf16.msra.mxu0 %v3659
        %4932 = vmatprep.subr.bf16.mxu0 %v3664
        %4933 = vmatpush1.bf16.msra.mxu0 %v3663
        %4934 = vmatprep.subr.bf16.mxu0 %v3668
        %4935 = vmatpush1.bf16.msra.mxu0 %v3667
        %4936 = vmatprep.subr.bf16.mxu0 %v3672
        %4937 = vmatpush1.bf16.msra.mxu0 %v3671
        %4938 = vmatprep.subr.bf16.mxu0 %v3676
        %4939 = vmatpush1.bf16.msra.mxu0 %v3675
        %4940 = vmatprep.subr.bf16.mxu0 %v3680
        %4941 = vmatpush1.bf16.msra.mxu0 %v3679
        %4942 = vmatprep.subr.bf16.mxu0 %v3684
        %4943 = vmatpush1.bf16.msra.mxu0 %v3683
        %4944 = vmatprep.subr.bf16.mxu0 %v3688
        %4945 = vmatpush1.bf16.msra.mxu0 %v3687
        %4946 = vmatprep.subr.bf16.mxu0 %v3692
        %4947 = vmatpush1.bf16.msra.mxu0 %v3691
        %4948 = vmatprep.subr.bf16.mxu0 %v3696
        %4949 = vmatpush1.bf16.msra.mxu0 %v3695
        %4950 = vmatprep.subr.bf16.mxu0 %v3700
        %4951 = vmatpush1.bf16.msra.mxu0 %v3699
        %4952 = vmatprep.mubr.bf16.mxu0 %v1884
        %4953 = vmatmul.mubr.bf16.gmra.mrb[0].mxu0 %v1883
        %v4954 = vpop.f32.mrb[0].mxu0
        %v4955 = vadd.f32 %v4914, %v4954
        %v4956 = vpop.f32.mrb[0].mxu0
        %v4957 = vadd.f32 %v4916, %v4956
        %v4958 = vpop.f32.mrb[0].mxu0
        %v4959 = vpop.f32.mrb[0].mxu0
        %4960 = vdwg.mxu0
        %4961 = vmatprep.subr.bf16.mxu0 %v3704
        %4962 = vmatpush1.bf16.msra.mxu0 %v3703
        %4963 = vmatprep.subr.bf16.mxu0 %v3708
        %4964 = vmatpush1.bf16.msra.mxu0 %v3707
        %4965 = vmatprep.subr.bf16.mxu0 %v3712
        %4966 = vmatpush1.bf16.msra.mxu0 %v3711
        %4967 = vmatprep.subr.bf16.mxu0 %v3716
        %4968 = vmatpush1.bf16.msra.mxu0 %v3715
        %4969 = vmatprep.subr.bf16.mxu0 %v3720
        %4970 = vmatpush1.bf16.msra.mxu0 %v3719
        %4971 = vmatprep.subr.bf16.mxu0 %v3724
        %4972 = vmatpush1.bf16.msra.mxu0 %v3723
        %4973 = vmatprep.subr.bf16.mxu0 %v3728
        %4974 = vmatpush1.bf16.msra.mxu0 %v3727
        %4975 = vmatprep.subr.bf16.mxu0 %v3732
        %4976 = vmatpush1.bf16.msra.mxu0 %v3731
        %4977 = vmatprep.subr.bf16.mxu0 %v3736
        %4978 = vmatpush1.bf16.msra.mxu0 %v3735
        %4979 = vmatprep.subr.bf16.mxu0 %v3740
        %4980 = vmatpush1.bf16.msra.mxu0 %v3739
        %4981 = vmatprep.subr.bf16.mxu0 %v3744
        %4982 = vmatpush1.bf16.msra.mxu0 %v3743
        %4983 = vmatprep.subr.bf16.mxu0 %v3748
        %4984 = vmatpush1.bf16.msra.mxu0 %v3747
        %4985 = vmatprep.subr.bf16.mxu0 %v3752
        %4986 = vmatpush1.bf16.msra.mxu0 %v3751
        %4987 = vmatprep.subr.bf16.mxu0 %v3756
        %4988 = vmatpush1.bf16.msra.mxu0 %v3755
        %4989 = vmatprep.subr.bf16.mxu0 %v3760
        %4990 = vmatpush1.bf16.msra.mxu0 %v3759
        %4991 = vmatprep.subr.bf16.mxu0 %v3764
        %4992 = vmatpush1.bf16.msra.mxu0 %v3763
        %4993 = vmatprep.mubr.bf16.mxu0 %v1886
        %4994 = vmatmul.mubr.bf16.gmra.mrb[0].mxu0 %v1885
        %v4995 = vpop.f32.mrb[0].mxu0
        %v4996 = vadd.f32 %v4955, %v4995
        %v4997 = vpop.f32.mrb[0].mxu0
        %v4998 = vadd.f32 %v4957, %v4997
        %v4999 = vpop.f32.mrb[0].mxu0
        %v5000 = vpop.f32.mrb[0].mxu0
        %5001 = vdwg.mxu0
        %5002 = vmatprep.subr.bf16.mxu0 %v3768
        %5003 = vmatpush1.bf16.msra.mxu0 %v3767
        %5004 = vmatprep.subr.bf16.mxu0 %v3772
        %5005 = vmatpush1.bf16.msra.mxu0 %v3771
        %5006 = vmatprep.subr.bf16.mxu0 %v3776
        %5007 = vmatpush1.bf16.msra.mxu0 %v3775
        %5008 = vmatprep.subr.bf16.mxu0 %v3780
        %5009 = vmatpush1.bf16.msra.mxu0 %v3779
        %5010 = vmatprep.subr.bf16.mxu0 %v3784
        %5011 = vmatpush1.bf16.msra.mxu0 %v3783
        %5012 = vmatprep.subr.bf16.mxu0 %v3788
        %5013 = vmatpush1.bf16.msra.mxu0 %v3787
        %5014 = vmatprep.subr.bf16.mxu0 %v3792
        %5015 = vmatpush1.bf16.msra.mxu0 %v3791
        %5016 = vmatprep.subr.bf16.mxu0 %v3796
        %5017 = vmatpush1.bf16.msra.mxu0 %v3795
        %5018 = vmatprep.subr.bf16.mxu0 %v3800
        %5019 = vmatpush1.bf16.msra.mxu0 %v3799
        %5020 = vmatprep.subr.bf16.mxu0 %v3804
        %5021 = vmatpush1.bf16.msra.mxu0 %v3803
        %5022 = vmatprep.subr.bf16.mxu0 %v3808
        %5023 = vmatpush1.bf16.msra.mxu0 %v3807
        %5024 = vmatprep.subr.bf16.mxu0 %v3812
        %5025 = vmatpush1.bf16.msra.mxu0 %v3811
        %5026 = vmatprep.subr.bf16.mxu0 %v3816
        %5027 = vmatpush1.bf16.msra.mxu0 %v3815
        %5028 = vmatprep.subr.bf16.mxu0 %v3820
        %5029 = vmatpush1.bf16.msra.mxu0 %v3819
        %5030 = vmatprep.subr.bf16.mxu0 %v3824
        %5031 = vmatpush1.bf16.msra.mxu0 %v3823
        %5032 = vmatprep.subr.bf16.mxu0 %v3828
        %5033 = vmatpush1.bf16.msra.mxu0 %v3827
        %5034 = vmatprep.mubr.bf16.mxu0 %v1888
        %5035 = vmatmul.mubr.bf16.gmra.mrb[0].mxu0 %v1887
        %v5036 = vpop.f32.mrb[0].mxu0
        %v5037 = vadd.f32 %v4996, %v5036
        %v5038 = vpop.f32.mrb[0].mxu0
        %v5039 = vadd.f32 %v4998, %v5038
        %v5040 = vpop.f32.mrb[0].mxu0
        %v5041 = vpop.f32.mrb[0].mxu0
        %5042 = vdwg.mxu0
        %5043 = vmatprep.subr.bf16.mxu0 %v3832
        %5044 = vmatpush1.bf16.msra.mxu0 %v3831
        %5045 = vmatprep.subr.bf16.mxu0 %v3836
        %5046 = vmatpush1.bf16.msra.mxu0 %v3835
        %5047 = vmatprep.subr.bf16.mxu0 %v3840
        %5048 = vmatpush1.bf16.msra.mxu0 %v3839
        %5049 = vmatprep.subr.bf16.mxu0 %v3844
        %5050 = vmatpush1.bf16.msra.mxu0 %v3843
        %5051 = vmatprep.subr.bf16.mxu0 %v3848
        %5052 = vmatpush1.bf16.msra.mxu0 %v3847
        %5053 = vmatprep.subr.bf16.mxu0 %v3852
        %5054 = vmatpush1.bf16.msra.mxu0 %v3851
        %5055 = vmatprep.subr.bf16.mxu0 %v3856
        %5056 = vmatpush1.bf16.msra.mxu0 %v3855
        %5057 = vmatprep.subr.bf16.mxu0 %v3860
        %5058 = vmatpush1.bf16.msra.mxu0 %v3859
        %5059 = vmatprep.subr.bf16.mxu0 %v3864
        %5060 = vmatpush1.bf16.msra.mxu0 %v3863
        %5061 = vmatprep.subr.bf16.mxu0 %v3868
        %5062 = vmatpush1.bf16.msra.mxu0 %v3867
        %5063 = vmatprep.subr.bf16.mxu0 %v3872
        %5064 = vmatpush1.bf16.msra.mxu0 %v3871
        %5065 = vmatprep.subr.bf16.mxu0 %v3876
        %5066 = vmatpush1.bf16.msra.mxu0 %v3875
        %5067 = vmatprep.subr.bf16.mxu0 %v3880
        %5068 = vmatpush1.bf16.msra.mxu0 %v3879
        %5069 = vmatprep.subr.bf16.mxu0 %v3884
        %5070 = vmatpush1.bf16.msra.mxu0 %v3883
        %5071 = vmatprep.subr.bf16.mxu0 %v3888
        %5072 = vmatpush1.bf16.msra.mxu0 %v3887
        %5073 = vmatprep.subr.bf16.mxu0 %v3892
        %5074 = vmatpush1.bf16.msra.mxu0 %v3891
        %5075 = vmatprep.mubr.bf16.mxu0 %v1890
        %5076 = vmatmul.mubr.bf16.gmra.mrb[0].mxu0 %v1889
        %v5077 = vpop.f32.mrb[0].mxu0
        %v5078 = vadd.f32 %v5037, %v5077
        %v5079 = vpop.f32.mrb[0].mxu0
        %v5080 = vadd.f32 %v5039, %v5079
        %v5081 = vpop.f32.mrb[0].mxu0
        %v5082 = vpop.f32.mrb[0].mxu0
        %5083 = vdwg.mxu0
        %5084 = vmatprep.subr.bf16.mxu0 %v3896
        %5085 = vmatpush1.bf16.msra.mxu0 %v3895
        %5086 = vmatprep.subr.bf16.mxu0 %v3900
        %5087 = vmatpush1.bf16.msra.mxu0 %v3899
        %5088 = vmatprep.subr.bf16.mxu0 %v3904
        %5089 = vmatpush1.bf16.msra.mxu0 %v3903
        %5090 = vmatprep.subr.bf16.mxu0 %v3908
        %5091 = vmatpush1.bf16.msra.mxu0 %v3907
        %5092 = vmatprep.subr.bf16.mxu0 %v3912
        %5093 = vmatpush1.bf16.msra.mxu0 %v3911
        %5094 = vmatprep.subr.bf16.mxu0 %v3916
        %5095 = vmatpush1.bf16.msra.mxu0 %v3915
        %5096 = vmatprep.subr.bf16.mxu0 %v3920
        %5097 = vmatpush1.bf16.msra.mxu0 %v3919
        %5098 = vmatprep.subr.bf16.mxu0 %v3924
        %5099 = vmatpush1.bf16.msra.mxu0 %v3923
        %5100 = vmatprep.subr.bf16.mxu0 %v3928
        %5101 = vmatpush1.bf16.msra.mxu0 %v3927
        %5102 = vmatprep.subr.bf16.mxu0 %v3932
        %5103 = vmatpush1.bf16.msra.mxu0 %v3931
        %5104 = vmatprep.subr.bf16.mxu0 %v3936
        %5105 = vmatpush1.bf16.msra.mxu0 %v3935
        %5106 = vmatprep.subr.bf16.mxu0 %v3940
        %5107 = vmatpush1.bf16.msra.mxu0 %v3939
        %5108 = vmatprep.subr.bf16.mxu0 %v3944
        %5109 = vmatpush1.bf16.msra.mxu0 %v3943
        %5110 = vmatprep.subr.bf16.mxu0 %v3948
        %5111 = vmatpush1.bf16.msra.mxu0 %v3947
        %5112 = vmatprep.subr.bf16.mxu0 %v3952
        %5113 = vmatpush1.bf16.msra.mxu0 %v3951
        %5114 = vmatprep.subr.bf16.mxu0 %v3956
        %5115 = vmatpush1.bf16.msra.mxu0 %v3955
        %5116 = vmatprep.mubr.bf16.mxu0 %v1892
        %5117 = vmatmul.mubr.bf16.gmra.mrb[0].mxu0 %v1891
        %v5118 = vpop.f32.mrb[0].mxu0
        %v5119 = vadd.f32 %v5078, %v5118
        %v5120 = vpop.f32.mrb[0].mxu0
        %v5121 = vadd.f32 %v5080, %v5120
        %v5122 = vpop.f32.mrb[0].mxu0
        %v5123 = vpop.f32.mrb[0].mxu0
        %5124 = vdwg.mxu0
        %v5125 = vadd.f32 %v1329, %v4791
        %v5126 = vadd.f32 %v1330, %v4793
        %v5127 = vadd.f32 %v1331, %v5119
        %v5128 = vadd.f32 %v1332, %v5121
        %5129 = vst [vmem:[#allocation2] sm:$0xff] %v5125
        %5130 = vst [vmem:[#allocation2 + $0x8] sm:$0xff] %v5126
        %5131 = vst [vmem:[#allocation2 + $0x10] sm:$0xff] %v5127
        %5132 = vst [vmem:[#allocation2 + $0x18] sm:$0xff] %v5128
        // Predicated region
        $region64: #{view_selector_forward.1} parent=54 // pred_check
          %p5133 = pneg %p1321
        $region65: #{view_selector_forward.1} parent=54 // pred_check_branch
          %5135 = sbr.rel (%p5133) target = $region67
        $region66: #{view_selector_forward.1} parent=54 // pred_region
          %v5136 = vld [vmem:[#allocation2] sm:$0xff]
          %v5137 = vld [vmem:[#allocation2 + $0x8] sm:$0xff]
          %v5138 = vld [vmem:[#allocation2 + $0x10] sm:$0xff]
          %v5139 = vld [vmem:[#allocation2 + $0x18] sm:$0xff]
          %v5140 = vld [vmem:[%s1308] sm:$0xf]
          %v5142 = vlaneseq
          %v5143 = vshrl.u32 %v5142, 7
          %v5144 = vsub.s32 0, %v5143
          %v5145 = vrot.slane %v5140, %v5144
          %v5146 = vlaneseq
          %v5147 = vshrl.u32 %v5146, 7
          %v5148 = vsub.s32 1, %v5147
          %v5149 = vrot.slane %v5140, %v5148
          %v5150 = vlaneseq
          %v5151 = vshrl.u32 %v5150, 7
          %v5152 = vsub.s32 2, %v5151
          %v5153 = vrot.slane %v5140, %v5152
          %v5154 = vlaneseq
          %v5155 = vshrl.u32 %v5154, 7
          %v5156 = vsub.s32 3, %v5155
          %v5157 = vrot.slane %v5140, %v5156
          %v5162 = vadd.f32 %v5136, %v5145
          %v5163 = vadd.f32 %v5137, %v5149
          %v5164 = vadd.f32 %v5138, %v5153
          %v5165 = vadd.f32 %v5139, %v5157
          %vm5166 = vcmp.gt.f32.partialorder %v5162, 0.0
          %vm5167 = vcmp.gt.f32.partialorder %v5163, 0.0
          %vm5168 = vcmp.gt.f32.partialorder %v5164, 0.0
          %vm5169 = vcmp.gt.f32.partialorder %v5165, 0.0
          %v5170 = vmul.f32 %v5162, 0.2
          %v5171 = vmul.f32 %v5163, 0.2
          %v5172 = vmul.f32 %v5164, 0.2
          %v5173 = vmul.f32 %v5165, 0.2
          %v5174 = vsel %vm5166, %v5162, %v5170
          %v5175 = vsel %vm5167, %v5163, %v5171
          %v5176 = vsel %vm5168, %v5164, %v5172
          %v5177 = vsel %vm5169, %v5165, %v5173
          %v5178 = vpack.c.bf16 %v5174, %v5174
          %v5179 = vpack.c.bf16 %v5175, %v5175
          %v5180 = vpack.c.bf16 %v5176, %v5176
          %v5181 = vpack.c.bf16 %v5177, %v5177
          %v5182 = vld [vmem:[%s1314] sm:$0xf]
          %v5183 = vld [vmem:[%s1314 + $0x4] sm:$0xf]
          %v5184 = vld [vmem:[%s1314 + $0x8] sm:$0xf]
          %v5185 = vld [vmem:[%s1314 + $0xc] sm:$0xf]
          %v5186 = vld [vmem:[%s1314 + $0x10] sm:$0xf]
          %v5187 = vld [vmem:[%s1314 + $0x14] sm:$0xf]
          %v5188 = vld [vmem:[%s1314 + $0x18] sm:$0xf]
          %v5189 = vld [vmem:[%s1314 + $0x1c] sm:$0xf]
          %v5190 = vld [vmem:[%s1314 + $0x20] sm:$0xf]
          %v5191 = vld [vmem:[%s1314 + $0x24] sm:$0xf]
          %v5192 = vld [vmem:[%s1314 + $0x28] sm:$0xf]
          %v5193 = vld [vmem:[%s1314 + $0x2c] sm:$0xf]
          %v5194 = vld [vmem:[%s1314 + $0x30] sm:$0xf]
          %v5195 = vld [vmem:[%s1314 + $0x34] sm:$0xf]
          %v5196 = vld [vmem:[%s1314 + $0x38] sm:$0xf]
          %v5197 = vld [vmem:[%s1314 + $0x3c] sm:$0xf]
          %v5198 = vld [vmem:[%s1314 + $0x40] sm:$0xf]
          %v5199 = vld [vmem:[%s1314 + $0x44] sm:$0xf]
          %v5200 = vld [vmem:[%s1314 + $0x48] sm:$0xf]
          %v5201 = vld [vmem:[%s1314 + $0x4c] sm:$0xf]
          %v5202 = vld [vmem:[%s1314 + $0x50] sm:$0xf]
          %v5203 = vld [vmem:[%s1314 + $0x54] sm:$0xf]
          %v5204 = vld [vmem:[%s1314 + $0x58] sm:$0xf]
          %v5205 = vld [vmem:[%s1314 + $0x5c] sm:$0xf]
          %v5206 = vld [vmem:[%s1314 + $0x60] sm:$0xf]
          %v5207 = vld [vmem:[%s1314 + $0x64] sm:$0xf]
          %v5208 = vld [vmem:[%s1314 + $0x68] sm:$0xf]
          %v5209 = vld [vmem:[%s1314 + $0x6c] sm:$0xf]
          %v5210 = vld [vmem:[%s1314 + $0x70] sm:$0xf]
          %v5211 = vld [vmem:[%s1314 + $0x74] sm:$0xf]
          %v5212 = vld [vmem:[%s1314 + $0x78] sm:$0xf]
          %v5213 = vld [vmem:[%s1314 + $0x7c] sm:$0xf]
          %v5214 = vld [vmem:[%s1314 + $0x80] sm:$0xf]
          %v5215 = vld [vmem:[%s1314 + $0x84] sm:$0xf]
          %v5216 = vld [vmem:[%s1314 + $0x88] sm:$0xf]
          %v5217 = vld [vmem:[%s1314 + $0x8c] sm:$0xf]
          %v5218 = vld [vmem:[%s1314 + $0x90] sm:$0xf]
          %v5219 = vld [vmem:[%s1314 + $0x94] sm:$0xf]
          %v5220 = vld [vmem:[%s1314 + $0x98] sm:$0xf]
          %v5221 = vld [vmem:[%s1314 + $0x9c] sm:$0xf]
          %v5222 = vld [vmem:[%s1314 + $0xa0] sm:$0xf]
          %v5223 = vld [vmem:[%s1314 + $0xa4] sm:$0xf]
          %v5224 = vld [vmem:[%s1314 + $0xa8] sm:$0xf]
          %v5225 = vld [vmem:[%s1314 + $0xac] sm:$0xf]
          %v5226 = vld [vmem:[%s1314 + $0xb0] sm:$0xf]
          %v5227 = vld [vmem:[%s1314 + $0xb4] sm:$0xf]
          %v5228 = vld [vmem:[%s1314 + $0xb8] sm:$0xf]
          %v5229 = vld [vmem:[%s1314 + $0xbc] sm:$0xf]
          %v5230 = vld [vmem:[%s1314 + $0xc0] sm:$0xf]
          %v5231 = vld [vmem:[%s1314 + $0xc4] sm:$0xf]
          %v5232 = vld [vmem:[%s1314 + $0xc8] sm:$0xf]
          %v5233 = vld [vmem:[%s1314 + $0xcc] sm:$0xf]
          %v5234 = vld [vmem:[%s1314 + $0xd0] sm:$0xf]
          %v5235 = vld [vmem:[%s1314 + $0xd4] sm:$0xf]
          %v5236 = vld [vmem:[%s1314 + $0xd8] sm:$0xf]
          %v5237 = vld [vmem:[%s1314 + $0xdc] sm:$0xf]
          %v5238 = vld [vmem:[%s1314 + $0xe0] sm:$0xf]
          %v5239 = vld [vmem:[%s1314 + $0xe4] sm:$0xf]
          %v5240 = vld [vmem:[%s1314 + $0xe8] sm:$0xf]
          %v5241 = vld [vmem:[%s1314 + $0xec] sm:$0xf]
          %v5242 = vld [vmem:[%s1314 + $0xf0] sm:$0xf]
          %v5243 = vld [vmem:[%s1314 + $0xf4] sm:$0xf]
          %v5244 = vld [vmem:[%s1314 + $0xf8] sm:$0xf]
          %v5245 = vld [vmem:[%s1314 + $0xfc] sm:$0xf]
          %v5310 = vunpack.c.l.b16 %v5182
          %v5311 = vunpack.c.l.b16 %v5183
          %v5312 = vunpack.c.l.b16 %v5184
          %v5313 = vunpack.c.l.b16 %v5185
          %v5314 = vunpack.c.l.b16 %v5186
          %v5315 = vunpack.c.l.b16 %v5187
          %v5316 = vunpack.c.l.b16 %v5188
          %v5317 = vunpack.c.l.b16 %v5189
          %v5318 = vunpack.c.l.b16 %v5190
          %v5319 = vunpack.c.l.b16 %v5191
          %v5320 = vunpack.c.l.b16 %v5192
          %v5321 = vunpack.c.l.b16 %v5193
          %v5322 = vunpack.c.l.b16 %v5194
          %v5323 = vunpack.c.l.b16 %v5195
          %v5324 = vunpack.c.l.b16 %v5196
          %v5325 = vunpack.c.l.b16 %v5197
          %v5326 = vunpack.c.l.b16 %v5198
          %v5327 = vunpack.c.l.b16 %v5199
          %v5328 = vunpack.c.l.b16 %v5200
          %v5329 = vunpack.c.l.b16 %v5201
          %v5330 = vunpack.c.l.b16 %v5202
          %v5331 = vunpack.c.l.b16 %v5203
          %v5332 = vunpack.c.l.b16 %v5204
          %v5333 = vunpack.c.l.b16 %v5205
          %v5334 = vunpack.c.l.b16 %v5206
          %v5335 = vunpack.c.l.b16 %v5207
          %v5336 = vunpack.c.l.b16 %v5208
          %v5337 = vunpack.c.l.b16 %v5209
          %v5338 = vunpack.c.l.b16 %v5210
          %v5339 = vunpack.c.l.b16 %v5211
          %v5340 = vunpack.c.l.b16 %v5212
          %v5341 = vunpack.c.l.b16 %v5213
          %v5342 = vunpack.c.l.b16 %v5214
          %v5343 = vunpack.c.l.b16 %v5215
          %v5344 = vunpack.c.l.b16 %v5216
          %v5345 = vunpack.c.l.b16 %v5217
          %v5346 = vunpack.c.l.b16 %v5218
          %v5347 = vunpack.c.l.b16 %v5219
          %v5348 = vunpack.c.l.b16 %v5220
          %v5349 = vunpack.c.l.b16 %v5221
          %v5350 = vunpack.c.l.b16 %v5222
          %v5351 = vunpack.c.l.b16 %v5223
          %v5352 = vunpack.c.l.b16 %v5224
          %v5353 = vunpack.c.l.b16 %v5225
          %v5354 = vunpack.c.l.b16 %v5226
          %v5355 = vunpack.c.l.b16 %v5227
          %v5356 = vunpack.c.l.b16 %v5228
          %v5357 = vunpack.c.l.b16 %v5229
          %v5358 = vunpack.c.l.b16 %v5230
          %v5359 = vunpack.c.l.b16 %v5231
          %v5360 = vunpack.c.l.b16 %v5232
          %v5361 = vunpack.c.l.b16 %v5233
          %v5362 = vunpack.c.l.b16 %v5234
          %v5363 = vunpack.c.l.b16 %v5235
          %v5364 = vunpack.c.l.b16 %v5236
          %v5365 = vunpack.c.l.b16 %v5237
          %v5366 = vunpack.c.l.b16 %v5238
          %v5367 = vunpack.c.l.b16 %v5239
          %v5368 = vunpack.c.l.b16 %v5240
          %v5369 = vunpack.c.l.b16 %v5241
          %v5370 = vunpack.c.l.b16 %v5242
          %v5371 = vunpack.c.l.b16 %v5243
          %v5372 = vunpack.c.l.b16 %v5244
          %v5373 = vunpack.c.l.b16 %v5245
          %v5374 = vpack.c.b16 %v5311, %v5310
          %v5375 = vpack.c.b16 %v5313, %v5312
          %v5376 = vpack.c.b16 %v5315, %v5314
          %v5377 = vpack.c.b16 %v5317, %v5316
          %v5378 = vpack.c.b16 %v5319, %v5318
          %v5379 = vpack.c.b16 %v5321, %v5320
          %v5380 = vpack.c.b16 %v5323, %v5322
          %v5381 = vpack.c.b16 %v5325, %v5324
          %v5382 = vpack.c.b16 %v5327, %v5326
          %v5383 = vpack.c.b16 %v5329, %v5328
          %v5384 = vpack.c.b16 %v5331, %v5330
          %v5385 = vpack.c.b16 %v5333, %v5332
          %v5386 = vpack.c.b16 %v5335, %v5334
          %v5387 = vpack.c.b16 %v5337, %v5336
          %v5388 = vpack.c.b16 %v5339, %v5338
          %v5389 = vpack.c.b16 %v5341, %v5340
          %v5390 = vpack.c.b16 %v5343, %v5342
          %v5391 = vpack.c.b16 %v5345, %v5344
          %v5392 = vpack.c.b16 %v5347, %v5346
          %v5393 = vpack.c.b16 %v5349, %v5348
          %v5394 = vpack.c.b16 %v5351, %v5350
          %v5395 = vpack.c.b16 %v5353, %v5352
          %v5396 = vpack.c.b16 %v5355, %v5354
          %v5397 = vpack.c.b16 %v5357, %v5356
          %v5398 = vpack.c.b16 %v5359, %v5358
          %v5399 = vpack.c.b16 %v5361, %v5360
          %v5400 = vpack.c.b16 %v5363, %v5362
          %v5401 = vpack.c.b16 %v5365, %v5364
          %v5402 = vpack.c.b16 %v5367, %v5366
          %v5403 = vpack.c.b16 %v5369, %v5368
          %v5404 = vpack.c.b16 %v5371, %v5370
          %v5405 = vpack.c.b16 %v5373, %v5372
          %5438 = vmatprep.subr.bf16.mxu0 0
          %5439 = vmatpush1.bf16.msra.mxu0 %v5374
          %5440 = vmatprep.subr.bf16.mxu0 0
          %5441 = vmatpush1.bf16.msra.mxu0 %v5375
          %5442 = vmatprep.subr.bf16.mxu0 0
          %5443 = vmatpush1.bf16.msra.mxu0 %v5376
          %5444 = vmatprep.subr.bf16.mxu0 0
          %5445 = vmatpush1.bf16.msra.mxu0 %v5377
          %5446 = vmatprep.subr.bf16.mxu0 0
          %5447 = vmatpush1.bf16.msra.mxu0 %v5378
          %5448 = vmatprep.subr.bf16.mxu0 0
          %5449 = vmatpush1.bf16.msra.mxu0 %v5379
          %5450 = vmatprep.subr.bf16.mxu0 0
          %5451 = vmatpush1.bf16.msra.mxu0 %v5380
          %5452 = vmatprep.subr.bf16.mxu0 0
          %5453 = vmatpush1.bf16.msra.mxu0 %v5381
          %5454 = vmatprep.subr.bf16.mxu0 0
          %5455 = vmatpush1.bf16.msra.mxu0 %v5382
          %5456 = vmatprep.subr.bf16.mxu0 0
          %5457 = vmatpush1.bf16.msra.mxu0 %v5383
          %5458 = vmatprep.subr.bf16.mxu0 0
          %5459 = vmatpush1.bf16.msra.mxu0 %v5384
          %5460 = vmatprep.subr.bf16.mxu0 0
          %5461 = vmatpush1.bf16.msra.mxu0 %v5385
          %5462 = vmatprep.subr.bf16.mxu0 0
          %5463 = vmatpush1.bf16.msra.mxu0 %v5386
          %5464 = vmatprep.subr.bf16.mxu0 0
          %5465 = vmatpush1.bf16.msra.mxu0 %v5387
          %5466 = vmatprep.subr.bf16.mxu0 0
          %5467 = vmatpush1.bf16.msra.mxu0 %v5388
          %5468 = vmatprep.subr.bf16.mxu0 0
          %5469 = vmatpush1.bf16.msra.mxu0 %v5389
          %5470 = vmatprep.mubr.bf16.mxu0 %v5179
          %5471 = vmatmul.mubr.bf16.gmra.mrb[0].mxu0 %v5178
          %v5472 = vpop.f32.mrb[0].mxu0
          %v5473 = vadd.f32 0.0, %v5472
          %v5474 = vpop.f32.mrb[0].mxu0
          %v5475 = vpop.f32.mrb[0].mxu0
          %v5476 = vpop.f32.mrb[0].mxu0
          %5477 = vdwg.mxu0
          %5478 = vmatprep.subr.bf16.mxu0 0
          %5479 = vmatpush1.bf16.msra.mxu0 %v5390
          %5480 = vmatprep.subr.bf16.mxu0 0
          %5481 = vmatpush1.bf16.msra.mxu0 %v5391
          %5482 = vmatprep.subr.bf16.mxu0 0
          %5483 = vmatpush1.bf16.msra.mxu0 %v5392
          %5484 = vmatprep.subr.bf16.mxu0 0
          %5485 = vmatpush1.bf16.msra.mxu0 %v5393
          %5486 = vmatprep.subr.bf16.mxu0 0
          %5487 = vmatpush1.bf16.msra.mxu0 %v5394
          %5488 = vmatprep.subr.bf16.mxu0 0
          %5489 = vmatpush1.bf16.msra.mxu0 %v5395
          %5490 = vmatprep.subr.bf16.mxu0 0
          %5491 = vmatpush1.bf16.msra.mxu0 %v5396
          %5492 = vmatprep.subr.bf16.mxu0 0
          %5493 = vmatpush1.bf16.msra.mxu0 %v5397
          %5494 = vmatprep.subr.bf16.mxu0 0
          %5495 = vmatpush1.bf16.msra.mxu0 %v5398
          %5496 = vmatprep.subr.bf16.mxu0 0
          %5497 = vmatpush1.bf16.msra.mxu0 %v5399
          %5498 = vmatprep.subr.bf16.mxu0 0
          %5499 = vmatpush1.bf16.msra.mxu0 %v5400
          %5500 = vmatprep.subr.bf16.mxu0 0
          %5501 = vmatpush1.bf16.msra.mxu0 %v5401
          %5502 = vmatprep.subr.bf16.mxu0 0
          %5503 = vmatpush1.bf16.msra.mxu0 %v5402
          %5504 = vmatprep.subr.bf16.mxu0 0
          %5505 = vmatpush1.bf16.msra.mxu0 %v5403
          %5506 = vmatprep.subr.bf16.mxu0 0
          %5507 = vmatpush1.bf16.msra.mxu0 %v5404
          %5508 = vmatprep.subr.bf16.mxu0 0
          %5509 = vmatpush1.bf16.msra.mxu0 %v5405
          %5510 = vmatprep.mubr.bf16.mxu0 %v5181
          %5511 = vmatmul.mubr.bf16.gmra.mrb[0].mxu0 %v5180
          %v5512 = vpop.f32.mrb[0].mxu0
          %v5513 = vadd.f32 %v5473, %v5512
          %v5514 = vpop.f32.mrb[0].mxu0
          %v5515 = vpop.f32.mrb[0].mxu0
          %v5516 = vpop.f32.mrb[0].mxu0
          %5517 = vdwg.mxu0
          %5518 = vst [vmem:[%s1319] sm:$0xff] %v5513
        $region67: #{view_selector_forward.1} parent=54 // pred_fallthru
          _
        %p5519 = scmp.lt.s32.totalorder %s19, 1
        %s5520 = scalar_select %p5519, %s19, 1
        %s5521 = smul.addr %s5520, 8
        %s5522 = scalar_lea.vmem %s4, %s5521
        // Predicated region
        $region68: #{view_selector_forward.1} parent=54 // pred_check
          %p5523 = pneg %p151
        $region69: #{view_selector_forward.1} parent=54 // pred_check_branch
          %5525 = sbr.rel (%p5523) target = $region71
        $region70: #{view_selector_forward.1} parent=54 // pred_region
          _
        $region71: #{view_selector_forward.1} parent=54 // pred_fallthru
          _
      $region55: #{view_selector_forward.1} parent=5 // pred_fallthru
        _
      %p5526 = scmp.le.s32.totalorder 2, %s10
      // Predicated region
      $region72: #{view_selector_forward.1} parent=5 // pred_check
        %p5527 = pneg %p5526
      $region73: #{view_selector_forward.1} parent=5 // pred_check_branch
        %5529 = sbr.rel (%p5527) target = $region75
      $region74: #{view_selector_forward.1} parent=5 // pred_region
        %s5530 = ssub.s32 %s10, 2
        // Predicated region
        $region76: #{view_selector_forward.1} parent=74 // pred_check
          %p5531 = pneg %p157
        $region77: #{view_selector_forward.1} parent=74 // pred_check_branch
          %5533 = sbr.rel (%p5531) target = $region79
        $region78: #{view_selector_forward.1} parent=74 // pred_region
          %p5534 = scmp.lt.s32.totalorder %s21, 1
          %s5535 = scalar_select %p5534, %s21, 1
          %s5536 = smul.addr %s5535, 8
          %s5537 = scalar_lea.vmem %s4, %s5536
        $region79: #{view_selector_forward.1} parent=74 // pred_fallthru
          _
      $region75: #{view_selector_forward.1} parent=5 // pred_fallthru
        _
    $region6: #{view_selector_forward.1} parent=1 // loop_footer
      %s14 = sadd.s32 1, %s10
    $region7: #{view_selector_forward.1} parent=1 // loop_footer_branch
      %9 = sbr.rel target = $region3
    $region8: #{view_selector_forward.1} parent=1 // loop_exit
      _

</llo_original>
